<compile_context>
chip_gen: v7x
topology: tpu7x:2x2x1
jax: 0.10.0
libtpu: 0.0.40
codegen_flags: <defaults>
</compile_context>

<pallas_src>
import functools

import jax
import jax.numpy as jnp
from jax import lax
from jax.experimental import pallas as pl
from jax.experimental.pallas import tpu as pltpu

_LN_EPS = 1e-5  # torch.nn.LayerNorm default eps


def _ffn_kernel(x_hbm, w1_ref, b1_ref, w2_ref, b2_ref, gamma_ref, beta_ref,
                o_ref, xw_ref, col_ref, dma_sem, *, T_tile, pad, halo, n_t):
    b = pl.program_id(0)
    t = pl.program_id(1)
    d_in = o_ref.shape[2]
    K = 2 * pad + 1
    cdt = xw_ref.dtype            # MXU operand dtype == input dtype (no upcast)
    row0 = t * T_tile             # first output row of this tile

    def copy(src_row, n_rows, dst_row):
        cp = pltpu.make_async_copy(
            x_hbm.at[b, pl.ds(src_row, n_rows), :],
            xw_ref.at[pl.ds(dst_row, n_rows), :],
            dma_sem)
        cp.start()
        cp.wait()  # TODO(synk): double-buffer this window DMA across grid steps
                   # to overlap it with the (much larger) MXU work.

    zeros = jnp.zeros((halo, d_in), cdt)

    # ---- fetch the (T_tile + 2*halo, d_in) input window with a zero halo ----
    # Window slot j holds global row (row0 - halo + j); only slots
    # [halo - pad, halo + T_tile + pad) are read below.  All DMA source/dest
    # row offsets are multiples of 8 (sublane aligned).
    if n_t == 1:
        copy(0, T_tile, halo)
        xw_ref[0:halo, :] = zeros
        xw_ref[T_tile + halo:T_tile + 2 * halo, :] = zeros
    else:
        @pl.when(t == 0)
        def _():
            copy(0, T_tile + halo, halo)
            xw_ref[0:halo, :] = zeros

        @pl.when(t == n_t - 1)
        def _():
            copy(row0 - halo, T_tile + halo, 0)
            xw_ref[T_tile + halo:T_tile + 2 * halo, :] = zeros

        if n_t > 2:
            @pl.when(jnp.logical_and(t > 0, t < n_t - 1))
            def _():
                copy(row0 - halo, T_tile + 2 * halo, 0)

    # ---- im2col: the 9-tap "same" conv becomes ONE deep MXU matmul ----------
    for k in range(K):                                  # static unroll
        col_ref[:, k * d_in:(k + 1) * d_in] = \
            xw_ref[halo - pad + k:halo - pad + k + T_tile, :]

    # w_1: Conv1d(d_in -> d_hid, kernel=9, padding=4); f32 accumulation.
    h = jnp.dot(col_ref[...], w1_ref[...], preferred_element_type=jnp.float32)
    h = jnp.maximum(h + b1_ref[...], 0.0)               # bias + ReLU (f32 VPU)

    # w_2: Conv1d(d_hid -> d_in, kernel=1) == channel matmul; f32 accumulation.
    y = jnp.dot(h.astype(cdt), w2_ref[...], preferred_element_type=jnp.float32)

    # Residual from the lane-aligned centre-tap block of the im2col scratch
    # (identical to the original x rows of this tile).
    residual = col_ref[:, pad * d_in:(pad + 1) * d_in].astype(jnp.float32)

    # TODO(synk): nn.Dropout is identity here (eval mode); training-mode dropout
    # would use pltpu.prng_seed + pltpu.stateful_bernoulli on `y`.
    s = y + b2_ref[...] + residual

    # ---- LayerNorm over d_in: one-pass statistics ----------------------------
    inv_d = 1.0 / d_in
    mean = jnp.sum(s, axis=-1, keepdims=True) * inv_d
    var = jnp.sum(s * s, axis=-1, keepdims=True) * inv_d - mean * mean
    rstd = lax.rsqrt(var + _LN_EPS)
    o_ref[0] = ((s - mean) * rstd * gamma_ref[...] + beta_ref[...]).astype(o_ref.dtype)


@functools.partial(jax.jit, static_argnames=("t_tile",))
def positionwise_feed_forward(x, w1, b1, w2, b2, gamma, beta, *, t_tile=256):
    """x: [B,T,d_in]; w1: [K,d_in,d_hid] (torch w_1.weight (d_hid,d_in,K) permuted
       to (k,ci,co)); b1: [d_hid]; w2: [d_hid,d_in] (torch w_2.weight[:,:,0].T);
       b2, gamma, beta: [d_in]."""
    B, T, d_in = x.shape
    K, _, d_hid = w1.shape
    pad = (K - 1) // 2
    halo = ((pad + 7) // 8) * 8              # sublane-aligned halo slack

    if T % t_tile == 0 and t_tile % 8 == 0 and t_tile >= halo:
        T_tile = t_tile
    else:
        T_tile = T                           # fall back to one tile per sequence
    n_t = T // T_tile

    cdt = x.dtype
    w1_mat = w1.reshape(K * d_in, d_hid).astype(cdt)     # (K*d_in, d_hid)
    w2_mat = w2.astype(cdt)
    b1_2d = b1.reshape(1, d_hid).astype(jnp.float32)
    b2_2d = b2.reshape(1, d_in).astype(jnp.float32)
    gamma_2d = gamma.reshape(1, d_in).astype(jnp.float32)
    beta_2d = beta.reshape(1, d_in).astype(jnp.float32)

    kernel = functools.partial(_ffn_kernel, T_tile=T_tile, pad=pad,
                               halo=halo, n_t=n_t)

    return pl.pallas_call(
        kernel,
        out_shape=jax.ShapeDtypeStruct((B, T, d_in), cdt),
        grid_spec=pltpu.PrefetchScalarGridSpec(
            num_scalar_prefetch=0,
            grid=(B, n_t),
            in_specs=[
                pl.BlockSpec(memory_space=pl.ANY),                      # x (HBM)
                pl.BlockSpec((K * d_in, d_hid), lambda b, t: (0, 0)),   # w1 (resident)
                pl.BlockSpec((1, d_hid), lambda b, t: (0, 0)),          # b1
                pl.BlockSpec((d_hid, d_in), lambda b, t: (0, 0)),       # w2 (resident)
                pl.BlockSpec((1, d_in), lambda b, t: (0, 0)),           # b2
                pl.BlockSpec((1, d_in), lambda b, t: (0, 0)),           # gamma
                pl.BlockSpec((1, d_in), lambda b, t: (0, 0)),           # beta
            ],
            out_specs=pl.BlockSpec((1, T_tile, d_in), lambda b, t: (b, t, 0)),
            scratch_shapes=[
                pltpu.VMEM((T_tile + 2 * halo, d_in), cdt),    # input window + halo
                pltpu.VMEM((T_tile, K * d_in), cdt),           # im2col
                pltpu.SemaphoreType.DMA(()),
            ],
        ),
        compiler_params=pltpu.CompilerParams(
            dimension_semantics=("parallel", "parallel"),
            vmem_limit_bytes=48 * 1024 * 1024),
    )(x, w1_mat, b1_2d, w2_mat, b2_2d, gamma_2d, beta_2d)


if __name__ == "__main__":
    key = jax.random.PRNGKey(0)
    ks = jax.random.split(key, 7)

    # Lane-aligned dims (d_in, d_hid multiples of 128) per the perf review;
    # T = 3 tiles of 128 so the first / middle / last halo paths all execute.
    B, T, d_in, d_hid, K = 2, 384, 128, 256, 9
    dtype = jnp.float32   # bf16 inputs also work (MXU then runs at bf16 rate)

    x = jax.random.normal(ks[0], (B, T, d_in), dtype=dtype)
    w1 = (0.03 * jax.random.normal(ks[1], (K, d_in, d_hid))).astype(dtype)
    b1 = (0.1 * jax.random.normal(ks[2], (d_hid,))).astype(jnp.float32)
    w2 = (0.05 * jax.random.normal(ks[3], (d_hid, d_in))).astype(dtype)
    b2 = (0.1 * jax.random.normal(ks[4], (d_in,))).astype(jnp.float32)
    gamma = (1.0 + 0.1 * jax.random.normal(ks[5], (d_in,))).astype(jnp.float32)
    beta = (0.1 * jax.random.normal(ks[6], (d_in,))).astype(jnp.float32)

    out = positionwise_feed_forward(x, w1, b1, w2, b2, gamma, beta, t_tile=128)
    jax.block_until_ready(out)

    # ---- plain-JAX reference (same math as the PyTorch module, eval mode) ----
    x32 = x.astype(jnp.float32)
    w1_32 = w1.astype(jnp.float32)
    w2_32 = w2.astype(jnp.float32)
    pad = (K - 1) // 2
    hp = lax.conv_general_dilated(
        jnp.transpose(x32, (0, 2, 1)),               # (B, d_in, T)
        jnp.transpose(w1_32, (2, 1, 0)),             # (d_hid, d_in, K) == torch layout
        window_strides=(1,), padding=((pad, pad),),
        dimension_numbers=("NCH", "OIH", "NCH"),
        precision=lax.Precision.HIGHEST)
    hp = jnp.maximum(hp + b1[None, :, None], 0.0)
    yp = jnp.einsum("bct,cd->bdt", hp, w2_32,
                    precision=lax.Precision.HIGHEST) + b2[None, :, None]
    s = jnp.transpose(yp, (0, 2, 1)) + x32
    mean = jnp.mean(s, axis=-1, keepdims=True)
    var = jnp.mean((s - mean) ** 2, axis=-1, keepdims=True)
    ref = (s - mean) / jnp.sqrt(var + _LN_EPS) * gamma + beta

    assert out.shape == (B, T, d_in)
    diff = jnp.abs(out.astype(jnp.float32) - ref)
    max_err = float(jnp.max(diff))
    mean_err = float(jnp.mean(diff))
    # Tolerance covers reduced-precision MXU passes (bf16 operands / default
    # matmul precision); a layout/halo/indexing bug would produce O(1) errors.
    assert max_err <= 1e-1 and mean_err <= 2e-2, (max_err, mean_err)

    print("KERNEL_OK")
</pallas_src>

<mosaic_0001>
module attributes {stable_mosaic.version = 11 : i64} {
  func.func @_ffn_kernel(%arg0: i32, %arg1: i32, %arg2: memref<2x384x128xf32, #tpu.memory_space<any>>, %arg3: memref<1152x256xf32, #tpu.memory_space<vmem>>, %arg4: memref<1x256xf32, #tpu.memory_space<vmem>>, %arg5: memref<256x128xf32, #tpu.memory_space<vmem>>, %arg6: memref<1x128xf32, #tpu.memory_space<vmem>>, %arg7: memref<1x128xf32, #tpu.memory_space<vmem>>, %arg8: memref<1x128xf32, #tpu.memory_space<vmem>>, %arg9: memref<1x128x128xf32, #tpu.memory_space<vmem>>, %arg10: memref<144x128xf32, #tpu.memory_space<vmem>>, %arg11: memref<128x1152xf32, #tpu.memory_space<vmem>>, %arg12: memref<!tpu.dma_semaphore, #tpu.memory_space<semaphore_mem>>) attributes {dimension_semantics = [#tpu.dimension_semantics<parallel>, #tpu.dimension_semantics<parallel>], iteration_bounds = array<i64: 2, 3>, scalar_prefetch = 0 : i64, scratch_operands = 3 : i64, tpu.core_type = #tpu.core_type<tc>, window_params = [{}, {pipeline_mode = #tpu.pipeline_mode<synchronous>, transform_indices = @transform_1, window_bounds = array<i64: 1152, 256>}, {pipeline_mode = #tpu.pipeline_mode<synchronous>, transform_indices = @transform_2, window_bounds = array<i64: 1, 256>}, {pipeline_mode = #tpu.pipeline_mode<synchronous>, transform_indices = @transform_3, window_bounds = array<i64: 256, 128>}, {pipeline_mode = #tpu.pipeline_mode<synchronous>, transform_indices = @transform_4, window_bounds = array<i64: 1, 128>}, {pipeline_mode = #tpu.pipeline_mode<synchronous>, transform_indices = @transform_5, window_bounds = array<i64: 1, 128>}, {pipeline_mode = #tpu.pipeline_mode<synchronous>, transform_indices = @transform_6, window_bounds = array<i64: 1, 128>}, {transform_indices = @transform_7, window_bounds = array<i64: 1, 128, 128>}]} {
    %c128_i32 = arith.constant 128 : i32
    %0 = arith.muli %arg1, %c128_i32 : i32
    %cst = arith.constant 0.000000e+00 : f32
    %1 = vector.broadcast %cst : f32 to vector<8x128xf32>
    %c0_i32 = arith.constant 0 : i32
    %2 = arith.cmpi eq, %arg1, %c0_i32 : i32
    %3 = arith.extui %2 : i1 to i32
    %c0_i32_0 = arith.constant 0 : i32
    %4 = arith.cmpi ne, %3, %c0_i32_0 : i32
    scf.if %4 {
      %c0_i32_50 = arith.constant 0 : i32
      %c0_i32_51 = arith.constant 0 : i32
      %73 = tpu.memref_slice %arg2[%arg0, %c0_i32_50, %c0_i32_51] : memref<2x384x128xf32, #tpu.memory_space<any>> -> memref<1x136x128xf32, #tpu.memory_space<any>>
      %74 = tpu.memref_squeeze %73 : memref<1x136x128xf32, #tpu.memory_space<any>> -> memref<136x128xf32, #tpu.memory_space<any>>
      %c8_i32 = arith.constant 8 : i32
      %c0_i32_52 = arith.constant 0 : i32
      %75 = tpu.memref_slice %arg10[%c8_i32, %c0_i32_52] : memref<144x128xf32, #tpu.memory_space<vmem>> -> memref<136x128xf32, #tpu.memory_space<vmem>>
      tpu.enqueue_dma source(%74 : memref<136x128xf32, #tpu.memory_space<any>>) target(%75 : memref<136x128xf32, #tpu.memory_space<vmem>>) target_semaphore(%arg12 : memref<!tpu.dma_semaphore, #tpu.memory_space<semaphore_mem>>)
      %c0_i32_53 = arith.constant 0 : i32
      %c0_i32_54 = arith.constant 0 : i32
      %76 = tpu.memref_slice %arg2[%arg0, %c0_i32_53, %c0_i32_54] : memref<2x384x128xf32, #tpu.memory_space<any>> -> memref<1x136x128xf32, #tpu.memory_space<any>>
      %77 = tpu.memref_squeeze %76 : memref<1x136x128xf32, #tpu.memory_space<any>> -> memref<136x128xf32, #tpu.memory_space<any>>
      %c8_i32_55 = arith.constant 8 : i32
      %c0_i32_56 = arith.constant 0 : i32
      %78 = tpu.memref_slice %arg10[%c8_i32_55, %c0_i32_56] : memref<144x128xf32, #tpu.memory_space<vmem>> -> memref<136x128xf32, #tpu.memory_space<vmem>>
      tpu.wait_dma2 semaphore(%arg12 : memref<!tpu.dma_semaphore, #tpu.memory_space<semaphore_mem>>) src(%77 : memref<136x128xf32, #tpu.memory_space<any>>) dst(%78 : memref<136x128xf32, #tpu.memory_space<vmem>>)
      %c0_57 = arith.constant 0 : index
      %c0_58 = arith.constant 0 : index
      %79 = vector.load %arg10[%c0_57, %c0_58] : memref<144x128xf32, #tpu.memory_space<vmem>>, vector<8x128xf32>
      tpu.vector_store %arg10[%c0_57, %c0_58], %1 {strides = array<i32>} : memref<144x128xf32, #tpu.memory_space<vmem>>, vector<8x128xf32>,
    } else {
    }
    %c2_i32 = arith.constant 2 : i32
    %5 = arith.cmpi eq, %arg1, %c2_i32 : i32
    %6 = arith.extui %5 : i1 to i32
    %c0_i32_1 = arith.constant 0 : i32
    %7 = arith.cmpi ne, %6, %c0_i32_1 : i32
    scf.if %7 {
      %c8_i32 = arith.constant 8 : i32
      %73 = arith.subi %0, %c8_i32 : i32
      %c0_i32_50 = arith.constant 0 : i32
      %74 = tpu.memref_slice %arg2[%arg0, %73, %c0_i32_50] : memref<2x384x128xf32, #tpu.memory_space<any>> -> memref<1x136x128xf32, #tpu.memory_space<any>>
      %75 = tpu.memref_squeeze %74 : memref<1x136x128xf32, #tpu.memory_space<any>> -> memref<136x128xf32, #tpu.memory_space<any>>
      %c0_i32_51 = arith.constant 0 : i32
      %c0_i32_52 = arith.constant 0 : i32
      %76 = tpu.memref_slice %arg10[%c0_i32_51, %c0_i32_52] : memref<144x128xf32, #tpu.memory_space<vmem>> -> memref<136x128xf32, #tpu.memory_space<vmem>>
      tpu.enqueue_dma source(%75 : memref<136x128xf32, #tpu.memory_space<any>>) target(%76 : memref<136x128xf32, #tpu.memory_space<vmem>>) target_semaphore(%arg12 : memref<!tpu.dma_semaphore, #tpu.memory_space<semaphore_mem>>)
      %c0_i32_53 = arith.constant 0 : i32
      %77 = tpu.memref_slice %arg2[%arg0, %73, %c0_i32_53] : memref<2x384x128xf32, #tpu.memory_space<any>> -> memref<1x136x128xf32, #tpu.memory_space<any>>
      %78 = tpu.memref_squeeze %77 : memref<1x136x128xf32, #tpu.memory_space<any>> -> memref<136x128xf32, #tpu.memory_space<any>>
      %c0_i32_54 = arith.constant 0 : i32
      %c0_i32_55 = arith.constant 0 : i32
      %79 = tpu.memref_slice %arg10[%c0_i32_54, %c0_i32_55] : memref<144x128xf32, #tpu.memory_space<vmem>> -> memref<136x128xf32, #tpu.memory_space<vmem>>
      tpu.wait_dma2 semaphore(%arg12 : memref<!tpu.dma_semaphore, #tpu.memory_space<semaphore_mem>>) src(%78 : memref<136x128xf32, #tpu.memory_space<any>>) dst(%79 : memref<136x128xf32, #tpu.memory_space<vmem>>)
      %c136 = arith.constant 136 : index
      %c0_56 = arith.constant 0 : index
      %80 = vector.load %arg10[%c136, %c0_56] : memref<144x128xf32, #tpu.memory_space<vmem>>, vector<8x128xf32>
      tpu.vector_store %arg10[%c136, %c0_56], %1 {strides = array<i32>} : memref<144x128xf32, #tpu.memory_space<vmem>>, vector<8x128xf32>,
    } else {
    }
    %c0_i32_2 = arith.constant 0 : i32
    %8 = arith.cmpi sgt, %arg1, %c0_i32_2 : i32
    %c2_i32_3 = arith.constant 2 : i32
    %9 = arith.cmpi slt, %arg1, %c2_i32_3 : i32
    %10 = arith.andi %8, %9 : i1
    %11 = arith.extui %10 : i1 to i32
    %c0_i32_4 = arith.constant 0 : i32
    %12 = arith.cmpi ne, %11, %c0_i32_4 : i32
    scf.if %12 {
      %c8_i32 = arith.constant 8 : i32
      %73 = arith.subi %0, %c8_i32 : i32
      %c0_i32_50 = arith.constant 0 : i32
      %74 = tpu.memref_slice %arg2[%arg0, %73, %c0_i32_50] : memref<2x384x128xf32, #tpu.memory_space<any>> -> memref<1x144x128xf32, #tpu.memory_space<any>>
      %75 = tpu.memref_squeeze %74 : memref<1x144x128xf32, #tpu.memory_space<any>> -> memref<144x128xf32, #tpu.memory_space<any>>
      %c0_i32_51 = arith.constant 0 : i32
      %c0_i32_52 = arith.constant 0 : i32
      %76 = tpu.memref_slice %arg10[%c0_i32_51, %c0_i32_52] : memref<144x128xf32, #tpu.memory_space<vmem>> -> memref<144x128xf32, #tpu.memory_space<vmem>>
      tpu.enqueue_dma source(%75 : memref<144x128xf32, #tpu.memory_space<any>>) target(%76 : memref<144x128xf32, #tpu.memory_space<vmem>>) target_semaphore(%arg12 : memref<!tpu.dma_semaphore, #tpu.memory_space<semaphore_mem>>)
      %c0_i32_53 = arith.constant 0 : i32
      %77 = tpu.memref_slice %arg2[%arg0, %73, %c0_i32_53] : memref<2x384x128xf32, #tpu.memory_space<any>> -> memref<1x144x128xf32, #tpu.memory_space<any>>
      %78 = tpu.memref_squeeze %77 : memref<1x144x128xf32, #tpu.memory_space<any>> -> memref<144x128xf32, #tpu.memory_space<any>>
      %c0_i32_54 = arith.constant 0 : i32
      %c0_i32_55 = arith.constant 0 : i32
      %79 = tpu.memref_slice %arg10[%c0_i32_54, %c0_i32_55] : memref<144x128xf32, #tpu.memory_space<vmem>> -> memref<144x128xf32, #tpu.memory_space<vmem>>
      tpu.wait_dma2 semaphore(%arg12 : memref<!tpu.dma_semaphore, #tpu.memory_space<semaphore_mem>>) src(%78 : memref<144x128xf32, #tpu.memory_space<any>>) dst(%79 : memref<144x128xf32, #tpu.memory_space<vmem>>)
    } else {
    }
    %c4 = arith.constant 4 : index
    %c0 = arith.constant 0 : index
    %13 = vector.load %arg10[%c4, %c0] : memref<144x128xf32, #tpu.memory_space<vmem>>, vector<128x128xf32>
    %c0_5 = arith.constant 0 : index
    %c0_6 = arith.constant 0 : index
    %14 = vector.load %arg11[%c0_5, %c0_6] : memref<128x1152xf32, #tpu.memory_space<vmem>>, vector<128x128xf32>
    tpu.vector_store %arg11[%c0_5, %c0_6], %13 {strides = array<i32>} : memref<128x1152xf32, #tpu.memory_space<vmem>>, vector<128x128xf32>,
    %c5 = arith.constant 5 : index
    %c0_7 = arith.constant 0 : index
    %15 = vector.load %arg10[%c5, %c0_7] : memref<144x128xf32, #tpu.memory_space<vmem>>, vector<128x128xf32>
    %c0_8 = arith.constant 0 : index
    %c128 = arith.constant 128 : index
    %16 = vector.load %arg11[%c0_8, %c128] : memref<128x1152xf32, #tpu.memory_space<vmem>>, vector<128x128xf32>
    tpu.vector_store %arg11[%c0_8, %c128], %15 {strides = array<i32>} : memref<128x1152xf32, #tpu.memory_space<vmem>>, vector<128x128xf32>,
    %c6 = arith.constant 6 : index
    %c0_9 = arith.constant 0 : index
    %17 = vector.load %arg10[%c6, %c0_9] : memref<144x128xf32, #tpu.memory_space<vmem>>, vector<128x128xf32>
    %c0_10 = arith.constant 0 : index
    %c256 = arith.constant 256 : index
    %18 = vector.load %arg11[%c0_10, %c256] : memref<128x1152xf32, #tpu.memory_space<vmem>>, vector<128x128xf32>
    tpu.vector_store %arg11[%c0_10, %c256], %17 {strides = array<i32>} : memref<128x1152xf32, #tpu.memory_space<vmem>>, vector<128x128xf32>,
    %c7 = arith.constant 7 : index
    %c0_11 = arith.constant 0 : index
    %19 = vector.load %arg10[%c7, %c0_11] : memref<144x128xf32, #tpu.memory_space<vmem>>, vector<128x128xf32>
    %c0_12 = arith.constant 0 : index
    %c384 = arith.constant 384 : index
    %20 = vector.load %arg11[%c0_12, %c384] : memref<128x1152xf32, #tpu.memory_space<vmem>>, vector<128x128xf32>
    tpu.vector_store %arg11[%c0_12, %c384], %19 {strides = array<i32>} : memref<128x1152xf32, #tpu.memory_space<vmem>>, vector<128x128xf32>,
    %c8 = arith.constant 8 : index
    %c0_13 = arith.constant 0 : index
    %21 = vector.load %arg10[%c8, %c0_13] : memref<144x128xf32, #tpu.memory_space<vmem>>, vector<128x128xf32>
    %c0_14 = arith.constant 0 : index
    %c512 = arith.constant 512 : index
    %22 = vector.load %arg11[%c0_14, %c512] : memref<128x1152xf32, #tpu.memory_space<vmem>>, vector<128x128xf32>
    tpu.vector_store %arg11[%c0_14, %c512], %21 {strides = array<i32>} : memref<128x1152xf32, #tpu.memory_space<vmem>>, vector<128x128xf32>,
    %c9 = arith.constant 9 : index
    %c0_15 = arith.constant 0 : index
    %23 = vector.load %arg10[%c9, %c0_15] : memref<144x128xf32, #tpu.memory_space<vmem>>, vector<128x128xf32>
    %c0_16 = arith.constant 0 : index
    %c640 = arith.constant 640 : index
    %24 = vector.load %arg11[%c0_16, %c640] : memref<128x1152xf32, #tpu.memory_space<vmem>>, vector<128x128xf32>
    tpu.vector_store %arg11[%c0_16, %c640], %23 {strides = array<i32>} : memref<128x1152xf32, #tpu.memory_space<vmem>>, vector<128x128xf32>,
    %c10 = arith.constant 10 : index
    %c0_17 = arith.constant 0 : index
    %25 = vector.load %arg10[%c10, %c0_17] : memref<144x128xf32, #tpu.memory_space<vmem>>, vector<128x128xf32>
    %c0_18 = arith.constant 0 : index
    %c768 = arith.constant 768 : index
    %26 = vector.load %arg11[%c0_18, %c768] : memref<128x1152xf32, #tpu.memory_space<vmem>>, vector<128x128xf32>
    tpu.vector_store %arg11[%c0_18, %c768], %25 {strides = array<i32>} : memref<128x1152xf32, #tpu.memory_space<vmem>>, vector<128x128xf32>,
    %c11 = arith.constant 11 : index
    %c0_19 = arith.constant 0 : index
    %27 = vector.load %arg10[%c11, %c0_19] : memref<144x128xf32, #tpu.memory_space<vmem>>, vector<128x128xf32>
    %c0_20 = arith.constant 0 : index
    %c896 = arith.constant 896 : index
    %28 = vector.load %arg11[%c0_20, %c896] : memref<128x1152xf32, #tpu.memory_space<vmem>>, vector<128x128xf32>
    tpu.vector_store %arg11[%c0_20, %c896], %27 {strides = array<i32>} : memref<128x1152xf32, #tpu.memory_space<vmem>>, vector<128x128xf32>,
    %c12 = arith.constant 12 : index
    %c0_21 = arith.constant 0 : index
    %29 = vector.load %arg10[%c12, %c0_21] : memref<144x128xf32, #tpu.memory_space<vmem>>, vector<128x128xf32>
    %c0_22 = arith.constant 0 : index
    %c1024 = arith.constant 1024 : index
    %30 = vector.load %arg11[%c0_22, %c1024] : memref<128x1152xf32, #tpu.memory_space<vmem>>, vector<128x128xf32>
    tpu.vector_store %arg11[%c0_22, %c1024], %29 {strides = array<i32>} : memref<128x1152xf32, #tpu.memory_space<vmem>>, vector<128x128xf32>,
    %c0_23 = arith.constant 0 : index
    %c0_24 = arith.constant 0 : index
    %31 = vector.load %arg11[%c0_23, %c0_24] : memref<128x1152xf32, #tpu.memory_space<vmem>>, vector<128x1152xf32>
    %c0_25 = arith.constant 0 : index
    %c0_26 = arith.constant 0 : index
    %32 = vector.load %arg3[%c0_25, %c0_26] : memref<1152x256xf32, #tpu.memory_space<vmem>>, vector<1152x256xf32>
    %cst_27 = arith.constant dense<0.000000e+00> : vector<128x256xf32>
    %33 = tpu.matmul %31, %32, %cst_27 {dimension_numbers = #tpu.dot_dimension_numbers<[1], [0], [0], [1], [0, 0, 1, 1], [], []>} : vector<128x1152xf32>, vector<1152x256xf32>, vector<128x256xf32> -> vector<128x256xf32>
    %c0_28 = arith.constant 0 : index
    %c0_29 = arith.constant 0 : index
    %34 = vector.load %arg4[%c0_28, %c0_29] : memref<1x256xf32, #tpu.memory_space<vmem>>, vector<1x256xf32>
    %35 = vector.broadcast %34 : vector<1x256xf32> to vector<128x256xf32>
    %36 = arith.addf %33, %35 : vector<128x256xf32>
    %cst_30 = arith.constant 0.000000e+00 : f32
    %37 = vector.broadcast %cst_30 : f32 to vector<128x256xf32>
    %38 = arith.maximumf %36, %37 : vector<128x256xf32>
    %c0_31 = arith.constant 0 : index
    %c0_32 = arith.constant 0 : index
    %39 = vector.load %arg5[%c0_31, %c0_32] : memref<256x128xf32, #tpu.memory_space<vmem>>, vector<256x128xf32>
    %cst_33 = arith.constant dense<0.000000e+00> : vector<128x128xf32>
    %40 = tpu.matmul %38, %39, %cst_33 {dimension_numbers = #tpu.dot_dimension_numbers<[1], [0], [0], [1], [0, 0, 1, 1], [], []>} : vector<128x256xf32>, vector<256x128xf32>, vector<128x128xf32> -> vector<128x128xf32>
    %c0_34 = arith.constant 0 : index
    %c512_35 = arith.constant 512 : index
    %41 = vector.load %arg11[%c0_34, %c512_35] : memref<128x1152xf32, #tpu.memory_space<vmem>>, vector<128x128xf32>
    %c0_36 = arith.constant 0 : index
    %c0_37 = arith.constant 0 : index
    %42 = vector.load %arg6[%c0_36, %c0_37] : memref<1x128xf32, #tpu.memory_space<vmem>>, vector<1x128xf32>
    %43 = vector.broadcast %42 : vector<1x128xf32> to vector<128x128xf32>
    %44 = arith.addf %40, %43 : vector<128x128xf32>
    %45 = arith.addf %44, %41 : vector<128x128xf32>
    %cst_38 = arith.constant dense<0.000000e+00> : vector<128xf32>
    %46 = vector.multi_reduction <add>, %45, %cst_38 [1] : vector<128x128xf32> to vector<128xf32>
    %47 = vector.shape_cast %46 : vector<128xf32> to vector<128x1xf32>
    %cst_39 = arith.constant 7.812500e-03 : f32
    %48 = vector.broadcast %cst_39 : f32 to vector<128x1xf32>
    %49 = arith.mulf %47, %48 : vector<128x1xf32>
    %50 = arith.mulf %45, %45 : vector<128x128xf32>
    %cst_40 = arith.constant dense<0.000000e+00> : vector<128xf32>
    %51 = vector.multi_reduction <add>, %50, %cst_40 [1] : vector<128x128xf32> to vector<128xf32>
    %52 = vector.shape_cast %51 : vector<128xf32> to vector<128x1xf32>
    %cst_41 = arith.constant 7.812500e-03 : f32
    %53 = vector.broadcast %cst_41 : f32 to vector<128x1xf32>
    %54 = arith.mulf %52, %53 : vector<128x1xf32>
    %55 = arith.mulf %49, %49 : vector<128x1xf32>
    %56 = arith.subf %54, %55 : vector<128x1xf32>
    %cst_42 = arith.constant 9.99999974E-6 : f32
    %57 = vector.broadcast %cst_42 : f32 to vector<128x1xf32>
    %58 = arith.addf %56, %57 : vector<128x1xf32>
    %59 = math.rsqrt %58 : vector<128x1xf32>
    %60 = vector.broadcast %49 : vector<128x1xf32> to vector<128x128xf32>
    %61 = arith.subf %45, %60 : vector<128x128xf32>
    %62 = vector.broadcast %59 : vector<128x1xf32> to vector<128x128xf32>
    %63 = arith.mulf %61, %62 : vector<128x128xf32>
    %c0_43 = arith.constant 0 : index
    %c0_44 = arith.constant 0 : index
    %64 = vector.load %arg7[%c0_43, %c0_44] : memref<1x128xf32, #tpu.memory_space<vmem>>, vector<1x128xf32>
    %65 = vector.broadcast %64 : vector<1x128xf32> to vector<128x128xf32>
    %66 = arith.mulf %63, %65 : vector<128x128xf32>
    %c0_45 = arith.constant 0 : index
    %c0_46 = arith.constant 0 : index
    %67 = vector.load %arg8[%c0_45, %c0_46] : memref<1x128xf32, #tpu.memory_space<vmem>>, vector<1x128xf32>
    %68 = vector.broadcast %67 : vector<1x128xf32> to vector<128x128xf32>
    %69 = arith.addf %66, %68 : vector<128x128xf32>
    %c0_47 = arith.constant 0 : index
    %c0_48 = arith.constant 0 : index
    %c0_49 = arith.constant 0 : index
    %70 = vector.load %arg9[%c0_47, %c0_48, %c0_49] : memref<1x128x128xf32, #tpu.memory_space<vmem>>, vector<1x128x128xf32>
    %71 = vector.shape_cast %70 : vector<1x128x128xf32> to vector<128x128xf32>
    %72 = vector.shape_cast %69 : vector<128x128xf32> to vector<1x128x128xf32>
    tpu.vector_store %arg9[%c0_47, %c0_48, %c0_49], %72 {strides = array<i32>} : memref<1x128x128xf32, #tpu.memory_space<vmem>>, vector<1x128x128xf32>,
    return
  }
  func.func @transform_1(%arg0: i32, %arg1: i32) -> (i32, i32) {
    %c0_i32 = arith.constant 0 : i32
    %c0_i32_0 = arith.constant 0 : i32
    %c0_i32_1 = arith.constant 0 : i32
    return %c0_i32, %c0_i32_0 : i32, i32
  }
  func.func @transform_2(%arg0: i32, %arg1: i32) -> (i32, i32) {
    %c0_i32 = arith.constant 0 : i32
    %c0_i32_0 = arith.constant 0 : i32
    %c0_i32_1 = arith.constant 0 : i32
    return %c0_i32, %c0_i32_0 : i32, i32
  }
  func.func @transform_3(%arg0: i32, %arg1: i32) -> (i32, i32) {
    %c0_i32 = arith.constant 0 : i32
    %c0_i32_0 = arith.constant 0 : i32
    %c0_i32_1 = arith.constant 0 : i32
    return %c0_i32, %c0_i32_0 : i32, i32
  }
  func.func @transform_4(%arg0: i32, %arg1: i32) -> (i32, i32) {
    %c0_i32 = arith.constant 0 : i32
    %c0_i32_0 = arith.constant 0 : i32
    %c0_i32_1 = arith.constant 0 : i32
    return %c0_i32, %c0_i32_0 : i32, i32
  }
  func.func @transform_5(%arg0: i32, %arg1: i32) -> (i32, i32) {
    %c0_i32 = arith.constant 0 : i32
    %c0_i32_0 = arith.constant 0 : i32
    %c0_i32_1 = arith.constant 0 : i32
    return %c0_i32, %c0_i32_0 : i32, i32
  }
  func.func @transform_6(%arg0: i32, %arg1: i32) -> (i32, i32) {
    %c0_i32 = arith.constant 0 : i32
    %c0_i32_0 = arith.constant 0 : i32
    %c0_i32_1 = arith.constant 0 : i32
    return %c0_i32, %c0_i32_0 : i32, i32
  }
  func.func @transform_7(%arg0: i32, %arg1: i32) -> (i32, i32, i32) {
    %c0_i32 = arith.constant 0 : i32
    %c0_i32_0 = arith.constant 0 : i32
    return %arg0, %arg1, %c0_i32 : i32, i32, i32
  }
}

</mosaic_0001>

<llo_original>
// kernel: positionwise_feed_forward.1
$region0: #{positionwise_feed_forward.1}
  #allocation0 [shape = 'u32[]', space=smem, size = 0x4, offset = 0x4, fixed_abs, tag = 'smem constant byte address 0x4 - core index']
  #allocation1 [shape = 'u32[144,128]{1,0:T(1,128)}', space=vmem, size = 0x12000, scoped, tag = 'internal scratch']
  #allocation2 [shape = 'f32[144,128]{1,0:T(8,128)}', space=vmem, size = 0x12000, scoped, tag = 'scratch operand']
  #allocation3 [shape = 'f32[128,1152]{1,0:T(8,128)}', space=vmem, size = 0x90000, scoped, tag = 'scratch operand']
  #allocation4 [shape = 's32[1]{0}', space=sflag, size = 0x4, scoped, tag = 'scratch operand']
  #allocation17 [shape = 's32[]', space=sflag, size = 0x4, offset = 0, fixed_abs, tag = 'sflag constant byte address 0x0 - dummy sync flag']
  #allocation18 [shape = 's32[]', space=sflag, size = 0x4, offset = 0, fixed_abs, tag = 'sflag constant byte address 0x0 - dummy sync flag']
  #allocation19 [shape = 'u32[]', space=smem, size = 0x4, offset = 0x44, fixed_abs, tag = 'smem constant byte address 0x44 - assertion arg 0']
  #allocation20 [shape = 'u32[]', space=smem, size = 0x4, offset = 0x48, fixed_abs, tag = 'smem constant byte address 0x48 - assertion arg 1']
  #allocation21 [shape = 's32[]', space=sflag, size = 0x4, offset = 0, fixed_abs, tag = 'sflag constant byte address 0x0 - dummy sync flag']
  #allocation22 [shape = 's32[]', space=sflag, size = 0x4, offset = 0, fixed_abs, tag = 'sflag constant byte address 0x0 - dummy sync flag']
  #allocation23 [shape = 's32[]', space=sflag, size = 0x4, offset = 0, fixed_abs, tag = 'sflag constant byte address 0x0 - dummy sync flag']
  #allocation24 [shape = 's32[]', space=sflag, size = 0x4, offset = 0, fixed_abs, tag = 'sflag constant byte address 0x0 - dummy sync flag']
  %s0 = inlined_call_operand.hbm [shape: f32[2,384,128], index: 0, kind: input, shape index: {}]
  %s1 = inlined_call_operand.hbm [shape: f32[1152,256], index: 1, kind: input, shape index: {}]
  %s2 = inlined_call_operand.hbm [shape: f32[1,256], index: 2, kind: input, shape index: {}]
  %s3 = inlined_call_operand.hbm [shape: f32[256,128], index: 3, kind: input, shape index: {}]
  %s4 = inlined_call_operand.hbm [shape: f32[1,128], index: 4, kind: input, shape index: {}]
  %s5 = inlined_call_operand.hbm [shape: f32[1,128], index: 5, kind: input, shape index: {}]
  %s6 = inlined_call_operand.hbm [shape: f32[1,128], index: 6, kind: input, shape index: {}]
  %s7 = inlined_call_operand.hbm [shape: f32[2,384,128], index: 7, kind: output, shape index: {}]
  %s8 = sld [smem:[#allocation0]]
  $region105: #{positionwise_feed_forward.1} parent=0
    _
  %s10 = ssub.s32 1, %s8
  %s11 = scalar_select 0, %s10, %s8
  $region1: #{positionwise_feed_forward.1} parent=0
    #allocation5 [shape = 'u8[1179648]{0}', space=vmem, size = 0x120000, scoped, tag = 'input window, operand 1, single buffered']
    #allocation6 [shape = 's32[2]{0}', space=sflag, size = 0x8, scoped, tag = 'scoped memory for positionwise_feed_forward.1']
    #allocation7 [shape = 's32[2]{0}', space=sflag, size = 0x8, scoped, tag = 'scoped memory for positionwise_feed_forward.1']
    #allocation8 [shape = 'u8[1024]{0}', space=vmem, size = 0x400, scoped, tag = 'input window, operand 2, single buffered']
    #allocation9 [shape = 's32[1]{0}', space=sflag, size = 0x4, scoped, tag = 'scoped memory for positionwise_feed_forward.1']
    #allocation10 [shape = 'u8[131072]{0}', space=vmem, size = 0x20000, scoped, tag = 'input window, operand 3, single buffered']
    #allocation11 [shape = 'u8[512]{0}', space=vmem, size = 0x400, scoped, tag = 'input window, operand 4, single buffered']
    #allocation12 [shape = 's32[1]{0}', space=sflag, size = 0x4, scoped, tag = 'scoped memory for positionwise_feed_forward.1']
    #allocation13 [shape = 'u8[512]{0}', space=vmem, size = 0x400, scoped, tag = 'input window, operand 5, single buffered']
    #allocation14 [shape = 'u8[512]{0}', space=vmem, size = 0x400, scoped, tag = 'input window, operand 6, single buffered']
    #allocation15 [shape = 's32[1]{0}', space=sflag, size = 0x4, scoped, tag = 'scoped memory for positionwise_feed_forward.1']
    #allocation16 [shape = 'u8[131072]{0}', space=vmem, size = 0x20000, scoped, tag = 'output window, operand 0']
    %12 = vsyncpa [#allocation6], 0
    %13 = vsyncpa [#allocation9], 0
    %14 = vsyncpa [#allocation12], 0
    %15 = vsyncpa [#allocation15], 0
    %16 = vsyncpa [#allocation7], 0
    %s17 = scalar_lea.sflag [#allocation7], 1
    %18 = vsyncpa %s17, 0
    loop: start=0, step=1, limit=8
    $region2: #{positionwise_feed_forward.1} parent=1 // loop_pre_header
      _
    $region3: #{positionwise_feed_forward.1} parent=1 // loop_header
      %s20 = sphi 0, %s24
      %p21 = scmp.ge.s32.totalorder %s20, 8
      %s27 = sphi 0, %s39
      %s28 = sphi 0, %s35
      %s29 = sphi 0, %s27
      %s30 = sphi 0, %s28
      %s31 = sphi 0, %s29
      %s32 = sphi 0, %s30
      %s40 = sphi 0, %s40
      %s42 = sphi 0, %s40
      %s43 = sphi 0, %s42
      %s57 = sphi 0, %s43
      %s61 = sphi 0, %s61
      %s63 = sphi 0, %s61
      %s64 = sphi 0, %s63
      %s78 = sphi 0, %s64
      %s82 = sphi 0, %s82
      %s84 = sphi 0, %s82
      %s85 = sphi 0, %s84
      %s99 = sphi 0, %s85
      %s103 = sphi 0, %s103
      %s105 = sphi 0, %s103
      %s106 = sphi 0, %s105
      %s120 = sphi 0, %s106
      %s124 = sphi 0, %s124
      %s126 = sphi 0, %s124
      %s127 = sphi 0, %s126
      %s141 = sphi 0, %s127
      %s145 = sphi 0, %s145
      %s147 = sphi 0, %s145
      %s148 = sphi 0, %s147
      %s162 = sphi 0, %s148
      %s170 = sphi 0, %s172
      %s173 = sphi 0, %s170
      %s174 = sphi 0, %s173
      %s190 = sphi 0, %s174
    $region4: #{positionwise_feed_forward.1} parent=1 // loop_header_branch
      %23 = sbr.rel (%p21) target = $region8
    $region5: #{positionwise_feed_forward.1} parent=1 // loop_body
      %s25 = ssub.s32 %s20, 1
      %s26 = ssub.s32 %s20, 2
      %s33 = sadd.s32 1, %s28
      %p34 = scmp.ge.s32.totalorder %s33, 3
      %s35 = scalar_select %p34, 0, %s33
      %s36 = sadd.s32 1, %s27
      %s37 = scalar_select %p34, %s36, %s27
      %p38 = scmp.ge.s32.totalorder %s37, 2
      %s39 = scalar_select %p38, 0, %s37
      %s41 = sadd.s32 %s40, 1
      %p44 = scmp.eq.s32.totalorder %s20, 5
      %p45 = scmp.ne.s32.totalorder %s40, %s42
      %p46 = scmp.eq.s32.totalorder %s20, 0
      %p47 = por %p45, %p46
      %p48 = scmp.ne.s32.totalorder %s40, %s42
      %p49 = scmp.eq.s32.totalorder %s25, 5
      %p50 = por %p48, %p49
      %p51 = scmp.ne.s32.totalorder %s42, %s43
      %p52 = scmp.eq.s32.totalorder %s25, 0
      %p53 = por %p51, %p52
      %p54 = scmp.ne.s32.totalorder %s42, %s43
      %p55 = scmp.eq.s32.totalorder %s26, 5
      %p56 = por %p54, %p55
      %p58 = scmp.ne.s32.totalorder %s43, %s57
      %p59 = scmp.eq.s32.totalorder %s26, 0
      %p60 = por %p58, %p59
      %s62 = sadd.s32 %s61, 1
      %p65 = scmp.eq.s32.totalorder %s20, 5
      %p66 = scmp.ne.s32.totalorder %s61, %s63
      %p67 = scmp.eq.s32.totalorder %s20, 0
      %p68 = por %p66, %p67
      %p69 = scmp.ne.s32.totalorder %s61, %s63
      %p70 = scmp.eq.s32.totalorder %s25, 5
      %p71 = por %p69, %p70
      %p72 = scmp.ne.s32.totalorder %s63, %s64
      %p73 = scmp.eq.s32.totalorder %s25, 0
      %p74 = por %p72, %p73
      %p75 = scmp.ne.s32.totalorder %s63, %s64
      %p76 = scmp.eq.s32.totalorder %s26, 5
      %p77 = por %p75, %p76
      %p79 = scmp.ne.s32.totalorder %s64, %s78
      %p80 = scmp.eq.s32.totalorder %s26, 0
      %p81 = por %p79, %p80
      %s83 = sadd.s32 %s82, 1
      %p86 = scmp.eq.s32.totalorder %s20, 5
      %p87 = scmp.ne.s32.totalorder %s82, %s84
      %p88 = scmp.eq.s32.totalorder %s20, 0
      %p89 = por %p87, %p88
      %p90 = scmp.ne.s32.totalorder %s82, %s84
      %p91 = scmp.eq.s32.totalorder %s25, 5
      %p92 = por %p90, %p91
      %p93 = scmp.ne.s32.totalorder %s84, %s85
      %p94 = scmp.eq.s32.totalorder %s25, 0
      %p95 = por %p93, %p94
      %p96 = scmp.ne.s32.totalorder %s84, %s85
      %p97 = scmp.eq.s32.totalorder %s26, 5
      %p98 = por %p96, %p97
      %p100 = scmp.ne.s32.totalorder %s85, %s99
      %p101 = scmp.eq.s32.totalorder %s26, 0
      %p102 = por %p100, %p101
      %s104 = sadd.s32 %s103, 1
      %p107 = scmp.eq.s32.totalorder %s20, 5
      %p108 = scmp.ne.s32.totalorder %s103, %s105
      %p109 = scmp.eq.s32.totalorder %s20, 0
      %p110 = por %p108, %p109
      %p111 = scmp.ne.s32.totalorder %s103, %s105
      %p112 = scmp.eq.s32.totalorder %s25, 5
      %p113 = por %p111, %p112
      %p114 = scmp.ne.s32.totalorder %s105, %s106
      %p115 = scmp.eq.s32.totalorder %s25, 0
      %p116 = por %p114, %p115
      %p117 = scmp.ne.s32.totalorder %s105, %s106
      %p118 = scmp.eq.s32.totalorder %s26, 5
      %p119 = por %p117, %p118
      %p121 = scmp.ne.s32.totalorder %s106, %s120
      %p122 = scmp.eq.s32.totalorder %s26, 0
      %p123 = por %p121, %p122
      %s125 = sadd.s32 %s124, 1
      %p128 = scmp.eq.s32.totalorder %s20, 5
      %p129 = scmp.ne.s32.totalorder %s124, %s126
      %p130 = scmp.eq.s32.totalorder %s20, 0
      %p131 = por %p129, %p130
      %p132 = scmp.ne.s32.totalorder %s124, %s126
      %p133 = scmp.eq.s32.totalorder %s25, 5
      %p134 = por %p132, %p133
      %p135 = scmp.ne.s32.totalorder %s126, %s127
      %p136 = scmp.eq.s32.totalorder %s25, 0
      %p137 = por %p135, %p136
      %p138 = scmp.ne.s32.totalorder %s126, %s127
      %p139 = scmp.eq.s32.totalorder %s26, 5
      %p140 = por %p138, %p139
      %p142 = scmp.ne.s32.totalorder %s127, %s141
      %p143 = scmp.eq.s32.totalorder %s26, 0
      %p144 = por %p142, %p143
      %s146 = sadd.s32 %s145, 1
      %p149 = scmp.eq.s32.totalorder %s20, 5
      %p150 = scmp.ne.s32.totalorder %s145, %s147
      %p151 = scmp.eq.s32.totalorder %s20, 0
      %p152 = por %p150, %p151
      %p153 = scmp.ne.s32.totalorder %s145, %s147
      %p154 = scmp.eq.s32.totalorder %s25, 5
      %p155 = por %p153, %p154
      %p156 = scmp.ne.s32.totalorder %s147, %s148
      %p157 = scmp.eq.s32.totalorder %s25, 0
      %p158 = por %p156, %p157
      %p159 = scmp.ne.s32.totalorder %s147, %s148
      %p160 = scmp.eq.s32.totalorder %s26, 5
      %p161 = por %p159, %p160
      %p163 = scmp.ne.s32.totalorder %s148, %s162
      %p164 = scmp.eq.s32.totalorder %s26, 0
      %p165 = por %p163, %p164
      %s166 = ssub.s32 %s27, %s39
      %s167 = ssub.s32 %s28, %s35
      %s168 = sor.u32 %s166, %s167
      %p169 = scmp.eq.s32.totalorder %s168, 0
      %s171 = sadd.s32 %s170, 1
      %s172 = scalar_select %p169, %s170, %s171
      %p175 = pneg %p169
      %p176 = scmp.eq.s32.totalorder %s20, 5
      %p177 = por %p175, %p176
      %p178 = scmp.ne.s32.totalorder %s170, %s173
      %p179 = scmp.eq.s32.totalorder %s20, 0
      %p180 = por %p178, %p179
      %p181 = scmp.ne.s32.totalorder %s170, %s173
      %p182 = scmp.eq.s32.totalorder %s25, 5
      %p183 = por %p181, %p182
      %p184 = scmp.ne.s32.totalorder %s173, %s174
      %p185 = scmp.eq.s32.totalorder %s25, 0
      %p186 = por %p184, %p185
      %p187 = scmp.ne.s32.totalorder %s173, %s174
      %p188 = scmp.eq.s32.totalorder %s26, 5
      %p189 = por %p187, %p188
      %p191 = scmp.ne.s32.totalorder %s174, %s190
      %p192 = scmp.eq.s32.totalorder %s26, 0
      %p193 = por %p191, %p192
      %p194 = scmp.le.s32.totalorder 1, %s20
      %p195 = scmp.lt.s32.totalorder %s20, 7
      %p196 = pnand %p194, %p195
      %p197 = pneg %p196
      // Predicated region
      $region9: #{positionwise_feed_forward.1} parent=5 // pred_check
        _
      $region10: #{positionwise_feed_forward.1} parent=5 // pred_check_branch
        %199 = sbr.rel (%p196) target = $region12
      $region11: #{positionwise_feed_forward.1} parent=5 // pred_region
        %s200 = ssub.s32 %s20, 1
        // Predicated region
        $region13: #{positionwise_feed_forward.1} parent=11 // pred_check
          %p201 = pneg %p53
        $region14: #{positionwise_feed_forward.1} parent=11 // pred_check_branch
          %203 = sbr.rel (%p201) target = $region16
        $region15: #{positionwise_feed_forward.1} parent=11 // pred_region
          %s205 = ssub.s32 36864, 36864
          %206 = vsyncadd [#allocation6], %s205
          %s207 = sshll.u32 [#allocation5], 4
          %s208 = int_to_ptr.vmem [resolvable:$true] %s207
          %213 = dma.hbm_to_vmem [thread:$0]  %s1, 36864, %s208, [#allocation6], 256, 256, 16
        $region16: #{positionwise_feed_forward.1} parent=11 // pred_fallthru
          _
        // Predicated region
        $region17: #{positionwise_feed_forward.1} parent=11 // pred_check
          %p214 = pneg %p74
        $region18: #{positionwise_feed_forward.1} parent=11 // pred_check_branch
          %216 = sbr.rel (%p214) target = $region20
        $region19: #{positionwise_feed_forward.1} parent=11 // pred_region
          %s218 = ssub.s32 32, 32
          %219 = vsyncadd [#allocation9], %s218
          %s221 = sshll.u32 [#allocation8], 4
          %s222 = int_to_ptr.vmem [resolvable:$true] %s221
          %224 = dma.hbm_to_vmem [thread:$0]  %s2, 32, %s222, [#allocation9]
        $region20: #{positionwise_feed_forward.1} parent=11 // pred_fallthru
          _
        // Predicated region
        $region21: #{positionwise_feed_forward.1} parent=11 // pred_check
          %p225 = pneg %p95
        $region22: #{positionwise_feed_forward.1} parent=11 // pred_check_branch
          %227 = sbr.rel (%p225) target = $region24
        $region23: #{positionwise_feed_forward.1} parent=11 // pred_region
          %s229 = ssub.s32 4096, 4096
          %230 = vsyncadd [#allocation9], %s229
          %s231 = sshll.u32 [#allocation10], 4
          %s232 = int_to_ptr.vmem [resolvable:$true] %s231
          %237 = dma.hbm_to_vmem [thread:$0]  %s3, 4096, %s232, [#allocation9], 128, 128, 8
        $region24: #{positionwise_feed_forward.1} parent=11 // pred_fallthru
          _
        // Predicated region
        $region25: #{positionwise_feed_forward.1} parent=11 // pred_check
          %p238 = pneg %p116
        $region26: #{positionwise_feed_forward.1} parent=11 // pred_check_branch
          %240 = sbr.rel (%p238) target = $region28
        $region27: #{positionwise_feed_forward.1} parent=11 // pred_region
          %s242 = ssub.s32 16, 16
          %243 = vsyncadd [#allocation12], %s242
          %s245 = sshll.u32 [#allocation11], 4
          %s246 = int_to_ptr.vmem [resolvable:$true] %s245
          %248 = dma.hbm_to_vmem [thread:$0]  %s4, 16, %s246, [#allocation12]
        $region28: #{positionwise_feed_forward.1} parent=11 // pred_fallthru
          _
        // Predicated region
        $region29: #{positionwise_feed_forward.1} parent=11 // pred_check
          %p249 = pneg %p137
        $region30: #{positionwise_feed_forward.1} parent=11 // pred_check_branch
          %251 = sbr.rel (%p249) target = $region32
        $region31: #{positionwise_feed_forward.1} parent=11 // pred_region
          %s253 = ssub.s32 16, 16
          %254 = vsyncadd [#allocation12], %s253
          %s256 = sshll.u32 [#allocation13], 4
          %s257 = int_to_ptr.vmem [resolvable:$true] %s256
          %259 = dma.hbm_to_vmem [thread:$0]  %s5, 16, %s257, [#allocation12]
        $region32: #{positionwise_feed_forward.1} parent=11 // pred_fallthru
          _
        // Predicated region
        $region33: #{positionwise_feed_forward.1} parent=11 // pred_check
          %p260 = pneg %p158
        $region34: #{positionwise_feed_forward.1} parent=11 // pred_check_branch
          %262 = sbr.rel (%p260) target = $region36
        $region35: #{positionwise_feed_forward.1} parent=11 // pred_region
          %s264 = ssub.s32 16, 16
          %265 = vsyncadd [#allocation15], %s264
          %s267 = sshll.u32 [#allocation14], 4
          %s268 = int_to_ptr.vmem [resolvable:$true] %s267
          %270 = dma.hbm_to_vmem [thread:$0]  %s6, 16, %s268, [#allocation15]
        $region36: #{positionwise_feed_forward.1} parent=11 // pred_fallthru
          _
      $region12: #{positionwise_feed_forward.1} parent=5 // pred_fallthru
        _
      %p271 = scmp.lt.s32.totalorder %s20, 6
      // Predicated region
      $region37: #{positionwise_feed_forward.1} parent=5 // pred_check
        %p272 = pneg %p271
      $region38: #{positionwise_feed_forward.1} parent=5 // pred_check_branch
        %274 = sbr.rel (%p272) target = $region40
      $region39: #{positionwise_feed_forward.1} parent=5 // pred_region
        _
      $region40: #{positionwise_feed_forward.1} parent=5 // pred_fallthru
        _
      %p275 = scmp.le.s32.totalorder 1, %s20
      %p276 = scmp.lt.s32.totalorder %s20, 7
      %p277 = pnand %p275, %p276
      %p278 = pneg %p277
      // Predicated region
      $region41: #{positionwise_feed_forward.1} parent=5 // pred_check
        _
      $region42: #{positionwise_feed_forward.1} parent=5 // pred_check_branch
        %280 = sbr.rel (%p277) target = $region44
      $region43: #{positionwise_feed_forward.1} parent=5 // pred_region
        %s281 = ssub.s32 %s20, 1
        // Predicated region
        $region45: #{positionwise_feed_forward.1} parent=43 // pred_check
          %p282 = pneg %p53
        $region46: #{positionwise_feed_forward.1} parent=43 // pred_check_branch
          %284 = sbr.rel (%p282) target = $region48
        $region47: #{positionwise_feed_forward.1} parent=43 // pred_region
          %285 = dma.done [#allocation6], 36864
        $region48: #{positionwise_feed_forward.1} parent=43 // pred_fallthru
          _
        // Predicated region
        $region49: #{positionwise_feed_forward.1} parent=43 // pred_check
          %p286 = pneg %p74
        $region50: #{positionwise_feed_forward.1} parent=43 // pred_check_branch
          %288 = sbr.rel (%p286) target = $region52
        $region51: #{positionwise_feed_forward.1} parent=43 // pred_region
          %289 = dma.done [#allocation9], 32
        $region52: #{positionwise_feed_forward.1} parent=43 // pred_fallthru
          _
        // Predicated region
        $region53: #{positionwise_feed_forward.1} parent=43 // pred_check
          %p290 = pneg %p95
        $region54: #{positionwise_feed_forward.1} parent=43 // pred_check_branch
          %292 = sbr.rel (%p290) target = $region56
        $region55: #{positionwise_feed_forward.1} parent=43 // pred_region
          %293 = dma.done [#allocation9], 4096
        $region56: #{positionwise_feed_forward.1} parent=43 // pred_fallthru
          _
        // Predicated region
        $region57: #{positionwise_feed_forward.1} parent=43 // pred_check
          %p294 = pneg %p116
        $region58: #{positionwise_feed_forward.1} parent=43 // pred_check_branch
          %296 = sbr.rel (%p294) target = $region60
        $region59: #{positionwise_feed_forward.1} parent=43 // pred_region
          %297 = dma.done [#allocation12], 16
        $region60: #{positionwise_feed_forward.1} parent=43 // pred_fallthru
          _
        // Predicated region
        $region61: #{positionwise_feed_forward.1} parent=43 // pred_check
          %p298 = pneg %p137
        $region62: #{positionwise_feed_forward.1} parent=43 // pred_check_branch
          %300 = sbr.rel (%p298) target = $region64
        $region63: #{positionwise_feed_forward.1} parent=43 // pred_region
          %301 = dma.done [#allocation12], 16
        $region64: #{positionwise_feed_forward.1} parent=43 // pred_fallthru
          _
        // Predicated region
        $region65: #{positionwise_feed_forward.1} parent=43 // pred_check
          %p302 = pneg %p158
        $region66: #{positionwise_feed_forward.1} parent=43 // pred_check_branch
          %304 = sbr.rel (%p302) target = $region68
        $region67: #{positionwise_feed_forward.1} parent=43 // pred_region
          %305 = dma.done [#allocation15], 16
        $region68: #{positionwise_feed_forward.1} parent=43 // pred_fallthru
          _
        %p306 = pneg %p53
        %p307 = pneg %p50
        %p308 = pneg %p74
        %p309 = pneg %p71
        %p310 = pneg %p95
        %p311 = pneg %p92
        %p312 = pneg %p116
        %p313 = pneg %p113
        %p314 = pneg %p137
        %p315 = pneg %p134
        %p316 = pneg %p158
        %p317 = pneg %p155
        %p318 = pneg %p186
        %p319 = pneg %p183
        %s320 = sand.u32 %s173, 1
        %s321 = scalar_lea.sflag [#allocation7], %s320
        %s322 = sand.u32 %s173, 1
        %s323 = smul.addr %s322, 128
        %s324 = scalar_lea.vmem [#allocation16], %s323
        %s325 = smul.u32 16, %s30
        %s326 = smul.u32 %s30, 128
        %p327 = scmp.eq.s32.totalorder %s30, 0
        // Predicated region
        $region69: #{positionwise_feed_forward.1} parent=43 // pred_check
          %p328 = pneg %p327
        $region70: #{positionwise_feed_forward.1} parent=43 // pred_check_branch
          %330 = sbr.rel (%p328) target = $region72
        $region71: #{positionwise_feed_forward.1} parent=43 // pred_region
          %s331 = smul.u32 %s29, 384
          %s332 = smul.addr %s331, 16
          %s333 = scalar_lea.hbm %s0, %s332
          %s334 = scalar_lea.vmem [#allocation2], 8
          // Predicated region
          $region73: #{positionwise_feed_forward.1} parent=71 // pred_check
            _
          $region74: #{positionwise_feed_forward.1} parent=71 // pred_check_branch
            %336 = sbr.rel target = $region76
          $region75: #{positionwise_feed_forward.1} parent=71 // pred_region
            %337 = sst [smem:[#allocation19]] [#allocation18]
            %338 = sst [smem:[#allocation20]] [#allocation17]
          $region76: #{positionwise_feed_forward.1} parent=71 // pred_fallthru
            _
          %340 = shalt.err (0)
          %s342 = sshll.u32 %s334, 4
          %s343 = int_to_ptr.vmem [resolvable:$true] %s342
          %345 = dma.hbm_to_vmem [thread:$0]  %s333, 2176, %s343, [#allocation4]
          %s346 = smul.u32 136, 1
          %s347 = sshll.u32 %s346, 4
          %348 = dma.done [#allocation4], %s347
          %349 = vst [vmem:[#allocation2] sm:$0xff] 0.0
        $region72: #{positionwise_feed_forward.1} parent=43 // pred_fallthru
          _
        %p350 = scmp.eq.s32.totalorder %s30, 2
        // Predicated region
        $region77: #{positionwise_feed_forward.1} parent=43 // pred_check
          %p351 = pneg %p350
        $region78: #{positionwise_feed_forward.1} parent=43 // pred_check_branch
          %353 = sbr.rel (%p351) target = $region80
        $region79: #{positionwise_feed_forward.1} parent=43 // pred_region
          %s354 = ssub.s32 %s326, 8
          %s355 = smul.u32 %s29, 384
          %s356 = sadd.s32 %s354, %s355
          %s357 = smul.addr %s356, 16
          %s358 = scalar_lea.hbm %s0, %s357
          // Predicated region
          $region81: #{positionwise_feed_forward.1} parent=79 // pred_check
            _
          $region82: #{positionwise_feed_forward.1} parent=79 // pred_check_branch
            %360 = sbr.rel target = $region84
          $region83: #{positionwise_feed_forward.1} parent=79 // pred_region
            %361 = sst [smem:[#allocation19]] [#allocation22]
            %362 = sst [smem:[#allocation20]] [#allocation21]
          $region84: #{positionwise_feed_forward.1} parent=79 // pred_fallthru
            _
          %364 = shalt.err (0)
          %s366 = sshll.u32 [#allocation2], 4
          %s367 = int_to_ptr.vmem [resolvable:$true] %s366
          %369 = dma.hbm_to_vmem [thread:$0]  %s358, 2176, %s367, [#allocation4]
          %s370 = smul.u32 136, 1
          %s371 = sshll.u32 %s370, 4
          %372 = dma.done [#allocation4], %s371
          %373 = vst [vmem:[#allocation2 + $0x88] sm:$0xff] 0.0
        $region80: #{positionwise_feed_forward.1} parent=43 // pred_fallthru
          _
        %p374 = scmp.gt.s32.totalorder %s30, 0
        %p375 = scmp.lt.s32.totalorder %s30, 2
        %p376 = pnand %p374, %p375
        %p377 = pneg %p376
        // Predicated region
        $region85: #{positionwise_feed_forward.1} parent=43 // pred_check
          _
        $region86: #{positionwise_feed_forward.1} parent=43 // pred_check_branch
          %379 = sbr.rel (%p376) target = $region88
        $region87: #{positionwise_feed_forward.1} parent=43 // pred_region
          %s380 = ssub.s32 %s326, 8
          %s381 = smul.u32 %s29, 384
          %s382 = sadd.s32 %s380, %s381
          %s383 = smul.addr %s382, 16
          %s384 = scalar_lea.hbm %s0, %s383
          // Predicated region
          $region89: #{positionwise_feed_forward.1} parent=87 // pred_check
            _
          $region90: #{positionwise_feed_forward.1} parent=87 // pred_check_branch
            %386 = sbr.rel target = $region92
          $region91: #{positionwise_feed_forward.1} parent=87 // pred_region
            %387 = sst [smem:[#allocation19]] [#allocation24]
            %388 = sst [smem:[#allocation20]] [#allocation23]
          $region92: #{positionwise_feed_forward.1} parent=87 // pred_fallthru
            _
          %390 = shalt.err (0)
          %s392 = sshll.u32 [#allocation2], 4
          %s393 = int_to_ptr.vmem [resolvable:$true] %s392
          %395 = dma.hbm_to_vmem [thread:$0]  %s384, 2304, %s393, [#allocation4]
          %s396 = smul.u32 144, 1
          %s397 = sshll.u32 %s396, 4
          %398 = dma.done [#allocation4], %s397
        $region88: #{positionwise_feed_forward.1} parent=43 // pred_fallthru
          _
        %v399 = vld [vmem:[#allocation2 + $0x4] sm:$0xff]
        %v400 = vld [vmem:[#allocation2 + $0xc] sm:$0xff]
        %v401 = vld [vmem:[#allocation2 + $0x14] sm:$0xff]
        %v402 = vld [vmem:[#allocation2 + $0x1c] sm:$0xff]
        %v403 = vld [vmem:[#allocation2 + $0x24] sm:$0xff]
        %v404 = vld [vmem:[#allocation2 + $0x2c] sm:$0xff]
        %v405 = vld [vmem:[#allocation2 + $0x34] sm:$0xff]
        %v406 = vld [vmem:[#allocation2 + $0x3c] sm:$0xff]
        %v407 = vld [vmem:[#allocation2 + $0x44] sm:$0xff]
        %v408 = vld [vmem:[#allocation2 + $0x4c] sm:$0xff]
        %v409 = vld [vmem:[#allocation2 + $0x54] sm:$0xff]
        %v410 = vld [vmem:[#allocation2 + $0x5c] sm:$0xff]
        %v411 = vld [vmem:[#allocation2 + $0x64] sm:$0xff]
        %v412 = vld [vmem:[#allocation2 + $0x6c] sm:$0xff]
        %v413 = vld [vmem:[#allocation2 + $0x74] sm:$0xff]
        %v414 = vld [vmem:[#allocation2 + $0x7c] sm:$0xff]
        %415 = vst [vmem:[#allocation3] sm:$0xff] %v399
        %416 = vst [vmem:[#allocation3 + $0x48] sm:$0xff] %v400
        %417 = vst [vmem:[#allocation3 + $0x90] sm:$0xff] %v401
        %418 = vst [vmem:[#allocation3 + $0xd8] sm:$0xff] %v402
        %419 = vst [vmem:[#allocation3 + $0x120] sm:$0xff] %v403
        %420 = vst [vmem:[#allocation3 + $0x168] sm:$0xff] %v404
        %421 = vst [vmem:[#allocation3 + $0x1b0] sm:$0xff] %v405
        %422 = vst [vmem:[#allocation3 + $0x1f8] sm:$0xff] %v406
        %423 = vst [vmem:[#allocation3 + $0x240] sm:$0xff] %v407
        %424 = vst [vmem:[#allocation3 + $0x288] sm:$0xff] %v408
        %425 = vst [vmem:[#allocation3 + $0x2d0] sm:$0xff] %v409
        %426 = vst [vmem:[#allocation3 + $0x318] sm:$0xff] %v410
        %427 = vst [vmem:[#allocation3 + $0x360] sm:$0xff] %v411
        %428 = vst [vmem:[#allocation3 + $0x3a8] sm:$0xff] %v412
        %429 = vst [vmem:[#allocation3 + $0x3f0] sm:$0xff] %v413
        %430 = vst [vmem:[#allocation3 + $0x438] sm:$0xff] %v414
        %v431 = vld [vmem:[#allocation2 + $0x5] sm:$0xff]
        %v432 = vld [vmem:[#allocation2 + $0xd] sm:$0xff]
        %v433 = vld [vmem:[#allocation2 + $0x15] sm:$0xff]
        %v434 = vld [vmem:[#allocation2 + $0x1d] sm:$0xff]
        %v435 = vld [vmem:[#allocation2 + $0x25] sm:$0xff]
        %v436 = vld [vmem:[#allocation2 + $0x2d] sm:$0xff]
        %v437 = vld [vmem:[#allocation2 + $0x35] sm:$0xff]
        %v438 = vld [vmem:[#allocation2 + $0x3d] sm:$0xff]
        %v439 = vld [vmem:[#allocation2 + $0x45] sm:$0xff]
        %v440 = vld [vmem:[#allocation2 + $0x4d] sm:$0xff]
        %v441 = vld [vmem:[#allocation2 + $0x55] sm:$0xff]
        %v442 = vld [vmem:[#allocation2 + $0x5d] sm:$0xff]
        %v443 = vld [vmem:[#allocation2 + $0x65] sm:$0xff]
        %v444 = vld [vmem:[#allocation2 + $0x6d] sm:$0xff]
        %v445 = vld [vmem:[#allocation2 + $0x75] sm:$0xff]
        %v446 = vld [vmem:[#allocation2 + $0x7d] sm:$0xff]
        %447 = vst [vmem:[#allocation3 + $0x8] sm:$0xff] %v431
        %448 = vst [vmem:[#allocation3 + $0x50] sm:$0xff] %v432
        %449 = vst [vmem:[#allocation3 + $0x98] sm:$0xff] %v433
        %450 = vst [vmem:[#allocation3 + $0xe0] sm:$0xff] %v434
        %451 = vst [vmem:[#allocation3 + $0x128] sm:$0xff] %v435
        %452 = vst [vmem:[#allocation3 + $0x170] sm:$0xff] %v436
        %453 = vst [vmem:[#allocation3 + $0x1b8] sm:$0xff] %v437
        %454 = vst [vmem:[#allocation3 + $0x200] sm:$0xff] %v438
        %455 = vst [vmem:[#allocation3 + $0x248] sm:$0xff] %v439
        %456 = vst [vmem:[#allocation3 + $0x290] sm:$0xff] %v440
        %457 = vst [vmem:[#allocation3 + $0x2d8] sm:$0xff] %v441
        %458 = vst [vmem:[#allocation3 + $0x320] sm:$0xff] %v442
        %459 = vst [vmem:[#allocation3 + $0x368] sm:$0xff] %v443
        %460 = vst [vmem:[#allocation3 + $0x3b0] sm:$0xff] %v444
        %461 = vst [vmem:[#allocation3 + $0x3f8] sm:$0xff] %v445
        %462 = vst [vmem:[#allocation3 + $0x440] sm:$0xff] %v446
        %v463 = vld [vmem:[#allocation2 + $0x6] sm:$0xff]
        %v464 = vld [vmem:[#allocation2 + $0xe] sm:$0xff]
        %v465 = vld [vmem:[#allocation2 + $0x16] sm:$0xff]
        %v466 = vld [vmem:[#allocation2 + $0x1e] sm:$0xff]
        %v467 = vld [vmem:[#allocation2 + $0x26] sm:$0xff]
        %v468 = vld [vmem:[#allocation2 + $0x2e] sm:$0xff]
        %v469 = vld [vmem:[#allocation2 + $0x36] sm:$0xff]
        %v470 = vld [vmem:[#allocation2 + $0x3e] sm:$0xff]
        %v471 = vld [vmem:[#allocation2 + $0x46] sm:$0xff]
        %v472 = vld [vmem:[#allocation2 + $0x4e] sm:$0xff]
        %v473 = vld [vmem:[#allocation2 + $0x56] sm:$0xff]
        %v474 = vld [vmem:[#allocation2 + $0x5e] sm:$0xff]
        %v475 = vld [vmem:[#allocation2 + $0x66] sm:$0xff]
        %v476 = vld [vmem:[#allocation2 + $0x6e] sm:$0xff]
        %v477 = vld [vmem:[#allocation2 + $0x76] sm:$0xff]
        %v478 = vld [vmem:[#allocation2 + $0x7e] sm:$0xff]
        %479 = vst [vmem:[#allocation3 + $0x10] sm:$0xff] %v463
        %480 = vst [vmem:[#allocation3 + $0x58] sm:$0xff] %v464
        %481 = vst [vmem:[#allocation3 + $0xa0] sm:$0xff] %v465
        %482 = vst [vmem:[#allocation3 + $0xe8] sm:$0xff] %v466
        %483 = vst [vmem:[#allocation3 + $0x130] sm:$0xff] %v467
        %484 = vst [vmem:[#allocation3 + $0x178] sm:$0xff] %v468
        %485 = vst [vmem:[#allocation3 + $0x1c0] sm:$0xff] %v469
        %486 = vst [vmem:[#allocation3 + $0x208] sm:$0xff] %v470
        %487 = vst [vmem:[#allocation3 + $0x250] sm:$0xff] %v471
        %488 = vst [vmem:[#allocation3 + $0x298] sm:$0xff] %v472
        %489 = vst [vmem:[#allocation3 + $0x2e0] sm:$0xff] %v473
        %490 = vst [vmem:[#allocation3 + $0x328] sm:$0xff] %v474
        %491 = vst [vmem:[#allocation3 + $0x370] sm:$0xff] %v475
        %492 = vst [vmem:[#allocation3 + $0x3b8] sm:$0xff] %v476
        %493 = vst [vmem:[#allocation3 + $0x400] sm:$0xff] %v477
        %494 = vst [vmem:[#allocation3 + $0x448] sm:$0xff] %v478
        %v495 = vld [vmem:[#allocation2 + $0x7] sm:$0xff]
        %v496 = vld [vmem:[#allocation2 + $0xf] sm:$0xff]
        %v497 = vld [vmem:[#allocation2 + $0x17] sm:$0xff]
        %v498 = vld [vmem:[#allocation2 + $0x1f] sm:$0xff]
        %v499 = vld [vmem:[#allocation2 + $0x27] sm:$0xff]
        %v500 = vld [vmem:[#allocation2 + $0x2f] sm:$0xff]
        %v501 = vld [vmem:[#allocation2 + $0x37] sm:$0xff]
        %v502 = vld [vmem:[#allocation2 + $0x3f] sm:$0xff]
        %v503 = vld [vmem:[#allocation2 + $0x47] sm:$0xff]
        %v504 = vld [vmem:[#allocation2 + $0x4f] sm:$0xff]
        %v505 = vld [vmem:[#allocation2 + $0x57] sm:$0xff]
        %v506 = vld [vmem:[#allocation2 + $0x5f] sm:$0xff]
        %v507 = vld [vmem:[#allocation2 + $0x67] sm:$0xff]
        %v508 = vld [vmem:[#allocation2 + $0x6f] sm:$0xff]
        %v509 = vld [vmem:[#allocation2 + $0x77] sm:$0xff]
        %v510 = vld [vmem:[#allocation2 + $0x7f] sm:$0xff]
        %511 = vst [vmem:[#allocation3 + $0x18] sm:$0xff] %v495
        %512 = vst [vmem:[#allocation3 + $0x60] sm:$0xff] %v496
        %513 = vst [vmem:[#allocation3 + $0xa8] sm:$0xff] %v497
        %514 = vst [vmem:[#allocation3 + $0xf0] sm:$0xff] %v498
        %515 = vst [vmem:[#allocation3 + $0x138] sm:$0xff] %v499
        %516 = vst [vmem:[#allocation3 + $0x180] sm:$0xff] %v500
        %517 = vst [vmem:[#allocation3 + $0x1c8] sm:$0xff] %v501
        %518 = vst [vmem:[#allocation3 + $0x210] sm:$0xff] %v502
        %519 = vst [vmem:[#allocation3 + $0x258] sm:$0xff] %v503
        %520 = vst [vmem:[#allocation3 + $0x2a0] sm:$0xff] %v504
        %521 = vst [vmem:[#allocation3 + $0x2e8] sm:$0xff] %v505
        %522 = vst [vmem:[#allocation3 + $0x330] sm:$0xff] %v506
        %523 = vst [vmem:[#allocation3 + $0x378] sm:$0xff] %v507
        %524 = vst [vmem:[#allocation3 + $0x3c0] sm:$0xff] %v508
        %525 = vst [vmem:[#allocation3 + $0x408] sm:$0xff] %v509
        %526 = vst [vmem:[#allocation3 + $0x450] sm:$0xff] %v510
        %v527 = vld [vmem:[#allocation2 + $0x8] sm:$0xff]
        %v528 = vld [vmem:[#allocation2 + $0x10] sm:$0xff]
        %v529 = vld [vmem:[#allocation2 + $0x18] sm:$0xff]
        %v530 = vld [vmem:[#allocation2 + $0x20] sm:$0xff]
        %v531 = vld [vmem:[#allocation2 + $0x28] sm:$0xff]
        %v532 = vld [vmem:[#allocation2 + $0x30] sm:$0xff]
        %v533 = vld [vmem:[#allocation2 + $0x38] sm:$0xff]
        %v534 = vld [vmem:[#allocation2 + $0x40] sm:$0xff]
        %v535 = vld [vmem:[#allocation2 + $0x48] sm:$0xff]
        %v536 = vld [vmem:[#allocation2 + $0x50] sm:$0xff]
        %v537 = vld [vmem:[#allocation2 + $0x58] sm:$0xff]
        %v538 = vld [vmem:[#allocation2 + $0x60] sm:$0xff]
        %v539 = vld [vmem:[#allocation2 + $0x68] sm:$0xff]
        %v540 = vld [vmem:[#allocation2 + $0x70] sm:$0xff]
        %v541 = vld [vmem:[#allocation2 + $0x78] sm:$0xff]
        %v542 = vld [vmem:[#allocation2 + $0x80] sm:$0xff]
        %543 = vst [vmem:[#allocation3 + $0x20] sm:$0xff] %v527
        %544 = vst [vmem:[#allocation3 + $0x68] sm:$0xff] %v528
        %545 = vst [vmem:[#allocation3 + $0xb0] sm:$0xff] %v529
        %546 = vst [vmem:[#allocation3 + $0xf8] sm:$0xff] %v530
        %547 = vst [vmem:[#allocation3 + $0x140] sm:$0xff] %v531
        %548 = vst [vmem:[#allocation3 + $0x188] sm:$0xff] %v532
        %549 = vst [vmem:[#allocation3 + $0x1d0] sm:$0xff] %v533
        %550 = vst [vmem:[#allocation3 + $0x218] sm:$0xff] %v534
        %551 = vst [vmem:[#allocation3 + $0x260] sm:$0xff] %v535
        %552 = vst [vmem:[#allocation3 + $0x2a8] sm:$0xff] %v536
        %553 = vst [vmem:[#allocation3 + $0x2f0] sm:$0xff] %v537
        %554 = vst [vmem:[#allocation3 + $0x338] sm:$0xff] %v538
        %555 = vst [vmem:[#allocation3 + $0x380] sm:$0xff] %v539
        %556 = vst [vmem:[#allocation3 + $0x3c8] sm:$0xff] %v540
        %557 = vst [vmem:[#allocation3 + $0x410] sm:$0xff] %v541
        %558 = vst [vmem:[#allocation3 + $0x458] sm:$0xff] %v542
        %v559 = vld [vmem:[#allocation2 + $0x9] sm:$0xff]
        %v560 = vld [vmem:[#allocation2 + $0x11] sm:$0xff]
        %v561 = vld [vmem:[#allocation2 + $0x19] sm:$0xff]
        %v562 = vld [vmem:[#allocation2 + $0x21] sm:$0xff]
        %v563 = vld [vmem:[#allocation2 + $0x29] sm:$0xff]
        %v564 = vld [vmem:[#allocation2 + $0x31] sm:$0xff]
        %v565 = vld [vmem:[#allocation2 + $0x39] sm:$0xff]
        %v566 = vld [vmem:[#allocation2 + $0x41] sm:$0xff]
        %v567 = vld [vmem:[#allocation2 + $0x49] sm:$0xff]
        %v568 = vld [vmem:[#allocation2 + $0x51] sm:$0xff]
        %v569 = vld [vmem:[#allocation2 + $0x59] sm:$0xff]
        %v570 = vld [vmem:[#allocation2 + $0x61] sm:$0xff]
        %v571 = vld [vmem:[#allocation2 + $0x69] sm:$0xff]
        %v572 = vld [vmem:[#allocation2 + $0x71] sm:$0xff]
        %v573 = vld [vmem:[#allocation2 + $0x79] sm:$0xff]
        %v574 = vld [vmem:[#allocation2 + $0x81] sm:$0xff]
        %575 = vst [vmem:[#allocation3 + $0x28] sm:$0xff] %v559
        %576 = vst [vmem:[#allocation3 + $0x70] sm:$0xff] %v560
        %577 = vst [vmem:[#allocation3 + $0xb8] sm:$0xff] %v561
        %578 = vst [vmem:[#allocation3 + $0x100] sm:$0xff] %v562
        %579 = vst [vmem:[#allocation3 + $0x148] sm:$0xff] %v563
        %580 = vst [vmem:[#allocation3 + $0x190] sm:$0xff] %v564
        %581 = vst [vmem:[#allocation3 + $0x1d8] sm:$0xff] %v565
        %582 = vst [vmem:[#allocation3 + $0x220] sm:$0xff] %v566
        %583 = vst [vmem:[#allocation3 + $0x268] sm:$0xff] %v567
        %584 = vst [vmem:[#allocation3 + $0x2b0] sm:$0xff] %v568
        %585 = vst [vmem:[#allocation3 + $0x2f8] sm:$0xff] %v569
        %586 = vst [vmem:[#allocation3 + $0x340] sm:$0xff] %v570
        %587 = vst [vmem:[#allocation3 + $0x388] sm:$0xff] %v571
        %588 = vst [vmem:[#allocation3 + $0x3d0] sm:$0xff] %v572
        %589 = vst [vmem:[#allocation3 + $0x418] sm:$0xff] %v573
        %590 = vst [vmem:[#allocation3 + $0x460] sm:$0xff] %v574
        %v591 = vld [vmem:[#allocation2 + $0xa] sm:$0xff]
        %v592 = vld [vmem:[#allocation2 + $0x12] sm:$0xff]
        %v593 = vld [vmem:[#allocation2 + $0x1a] sm:$0xff]
        %v594 = vld [vmem:[#allocation2 + $0x22] sm:$0xff]
        %v595 = vld [vmem:[#allocation2 + $0x2a] sm:$0xff]
        %v596 = vld [vmem:[#allocation2 + $0x32] sm:$0xff]
        %v597 = vld [vmem:[#allocation2 + $0x3a] sm:$0xff]
        %v598 = vld [vmem:[#allocation2 + $0x42] sm:$0xff]
        %v599 = vld [vmem:[#allocation2 + $0x4a] sm:$0xff]
        %v600 = vld [vmem:[#allocation2 + $0x52] sm:$0xff]
        %v601 = vld [vmem:[#allocation2 + $0x5a] sm:$0xff]
        %v602 = vld [vmem:[#allocation2 + $0x62] sm:$0xff]
        %v603 = vld [vmem:[#allocation2 + $0x6a] sm:$0xff]
        %v604 = vld [vmem:[#allocation2 + $0x72] sm:$0xff]
        %v605 = vld [vmem:[#allocation2 + $0x7a] sm:$0xff]
        %v606 = vld [vmem:[#allocation2 + $0x82] sm:$0xff]
        %607 = vst [vmem:[#allocation3 + $0x30] sm:$0xff] %v591
        %608 = vst [vmem:[#allocation3 + $0x78] sm:$0xff] %v592
        %609 = vst [vmem:[#allocation3 + $0xc0] sm:$0xff] %v593
        %610 = vst [vmem:[#allocation3 + $0x108] sm:$0xff] %v594
        %611 = vst [vmem:[#allocation3 + $0x150] sm:$0xff] %v595
        %612 = vst [vmem:[#allocation3 + $0x198] sm:$0xff] %v596
        %613 = vst [vmem:[#allocation3 + $0x1e0] sm:$0xff] %v597
        %614 = vst [vmem:[#allocation3 + $0x228] sm:$0xff] %v598
        %615 = vst [vmem:[#allocation3 + $0x270] sm:$0xff] %v599
        %616 = vst [vmem:[#allocation3 + $0x2b8] sm:$0xff] %v600
        %617 = vst [vmem:[#allocation3 + $0x300] sm:$0xff] %v601
        %618 = vst [vmem:[#allocation3 + $0x348] sm:$0xff] %v602
        %619 = vst [vmem:[#allocation3 + $0x390] sm:$0xff] %v603
        %620 = vst [vmem:[#allocation3 + $0x3d8] sm:$0xff] %v604
        %621 = vst [vmem:[#allocation3 + $0x420] sm:$0xff] %v605
        %622 = vst [vmem:[#allocation3 + $0x468] sm:$0xff] %v606
        %v623 = vld [vmem:[#allocation2 + $0xb] sm:$0xff]
        %v624 = vld [vmem:[#allocation2 + $0x13] sm:$0xff]
        %v625 = vld [vmem:[#allocation2 + $0x1b] sm:$0xff]
        %v626 = vld [vmem:[#allocation2 + $0x23] sm:$0xff]
        %v627 = vld [vmem:[#allocation2 + $0x2b] sm:$0xff]
        %v628 = vld [vmem:[#allocation2 + $0x33] sm:$0xff]
        %v629 = vld [vmem:[#allocation2 + $0x3b] sm:$0xff]
        %v630 = vld [vmem:[#allocation2 + $0x43] sm:$0xff]
        %v631 = vld [vmem:[#allocation2 + $0x4b] sm:$0xff]
        %v632 = vld [vmem:[#allocation2 + $0x53] sm:$0xff]
        %v633 = vld [vmem:[#allocation2 + $0x5b] sm:$0xff]
        %v634 = vld [vmem:[#allocation2 + $0x63] sm:$0xff]
        %v635 = vld [vmem:[#allocation2 + $0x6b] sm:$0xff]
        %v636 = vld [vmem:[#allocation2 + $0x73] sm:$0xff]
        %v637 = vld [vmem:[#allocation2 + $0x7b] sm:$0xff]
        %v638 = vld [vmem:[#allocation2 + $0x83] sm:$0xff]
        %639 = vst [vmem:[#allocation3 + $0x38] sm:$0xff] %v623
        %640 = vst [vmem:[#allocation3 + $0x80] sm:$0xff] %v624
        %641 = vst [vmem:[#allocation3 + $0xc8] sm:$0xff] %v625
        %642 = vst [vmem:[#allocation3 + $0x110] sm:$0xff] %v626
        %643 = vst [vmem:[#allocation3 + $0x158] sm:$0xff] %v627
        %644 = vst [vmem:[#allocation3 + $0x1a0] sm:$0xff] %v628
        %645 = vst [vmem:[#allocation3 + $0x1e8] sm:$0xff] %v629
        %646 = vst [vmem:[#allocation3 + $0x230] sm:$0xff] %v630
        %647 = vst [vmem:[#allocation3 + $0x278] sm:$0xff] %v631
        %648 = vst [vmem:[#allocation3 + $0x2c0] sm:$0xff] %v632
        %649 = vst [vmem:[#allocation3 + $0x308] sm:$0xff] %v633
        %650 = vst [vmem:[#allocation3 + $0x350] sm:$0xff] %v634
        %651 = vst [vmem:[#allocation3 + $0x398] sm:$0xff] %v635
        %652 = vst [vmem:[#allocation3 + $0x3e0] sm:$0xff] %v636
        %653 = vst [vmem:[#allocation3 + $0x428] sm:$0xff] %v637
        %654 = vst [vmem:[#allocation3 + $0x470] sm:$0xff] %v638
        %v655 = vld [vmem:[#allocation2 + $0xc] sm:$0xff]
        %v656 = vld [vmem:[#allocation2 + $0x14] sm:$0xff]
        %v657 = vld [vmem:[#allocation2 + $0x1c] sm:$0xff]
        %v658 = vld [vmem:[#allocation2 + $0x24] sm:$0xff]
        %v659 = vld [vmem:[#allocation2 + $0x2c] sm:$0xff]
        %v660 = vld [vmem:[#allocation2 + $0x34] sm:$0xff]
        %v661 = vld [vmem:[#allocation2 + $0x3c] sm:$0xff]
        %v662 = vld [vmem:[#allocation2 + $0x44] sm:$0xff]
        %v663 = vld [vmem:[#allocation2 + $0x4c] sm:$0xff]
        %v664 = vld [vmem:[#allocation2 + $0x54] sm:$0xff]
        %v665 = vld [vmem:[#allocation2 + $0x5c] sm:$0xff]
        %v666 = vld [vmem:[#allocation2 + $0x64] sm:$0xff]
        %v667 = vld [vmem:[#allocation2 + $0x6c] sm:$0xff]
        %v668 = vld [vmem:[#allocation2 + $0x74] sm:$0xff]
        %v669 = vld [vmem:[#allocation2 + $0x7c] sm:$0xff]
        %v670 = vld [vmem:[#allocation2 + $0x84] sm:$0xff]
        %671 = vst [vmem:[#allocation3 + $0x40] sm:$0xff] %v655
        %672 = vst [vmem:[#allocation3 + $0x88] sm:$0xff] %v656
        %673 = vst [vmem:[#allocation3 + $0xd0] sm:$0xff] %v657
        %674 = vst [vmem:[#allocation3 + $0x118] sm:$0xff] %v658
        %675 = vst [vmem:[#allocation3 + $0x160] sm:$0xff] %v659
        %676 = vst [vmem:[#allocation3 + $0x1a8] sm:$0xff] %v660
        %677 = vst [vmem:[#allocation3 + $0x1f0] sm:$0xff] %v661
        %678 = vst [vmem:[#allocation3 + $0x238] sm:$0xff] %v662
        %679 = vst [vmem:[#allocation3 + $0x280] sm:$0xff] %v663
        %680 = vst [vmem:[#allocation3 + $0x2c8] sm:$0xff] %v664
        %681 = vst [vmem:[#allocation3 + $0x310] sm:$0xff] %v665
        %682 = vst [vmem:[#allocation3 + $0x358] sm:$0xff] %v666
        %683 = vst [vmem:[#allocation3 + $0x3a0] sm:$0xff] %v667
        %684 = vst [vmem:[#allocation3 + $0x3e8] sm:$0xff] %v668
        %685 = vst [vmem:[#allocation3 + $0x430] sm:$0xff] %v669
        %686 = vst [vmem:[#allocation3 + $0x478] sm:$0xff] %v670
        %v687 = vld [vmem:[#allocation3] sm:$0xff]
        %v688 = vld [vmem:[#allocation3 + $0x8] sm:$0xff]
        %v689 = vld [vmem:[#allocation3 + $0x10] sm:$0xff]
        %v690 = vld [vmem:[#allocation3 + $0x18] sm:$0xff]
        %v691 = vld [vmem:[#allocation3 + $0x20] sm:$0xff]
        %v692 = vld [vmem:[#allocation3 + $0x28] sm:$0xff]
        %v693 = vld [vmem:[#allocation3 + $0x30] sm:$0xff]
        %v694 = vld [vmem:[#allocation3 + $0x38] sm:$0xff]
        %v695 = vld [vmem:[#allocation3 + $0x40] sm:$0xff]
        %v696 = vld [vmem:[#allocation3 + $0x48] sm:$0xff]
        %v697 = vld [vmem:[#allocation3 + $0x50] sm:$0xff]
        %v698 = vld [vmem:[#allocation3 + $0x58] sm:$0xff]
        %v699 = vld [vmem:[#allocation3 + $0x60] sm:$0xff]
        %v700 = vld [vmem:[#allocation3 + $0x68] sm:$0xff]
        %v701 = vld [vmem:[#allocation3 + $0x70] sm:$0xff]
        %v702 = vld [vmem:[#allocation3 + $0x78] sm:$0xff]
        %v703 = vld [vmem:[#allocation3 + $0x80] sm:$0xff]
        %v704 = vld [vmem:[#allocation3 + $0x88] sm:$0xff]
        %v705 = vld [vmem:[#allocation3 + $0x90] sm:$0xff]
        %v706 = vld [vmem:[#allocation3 + $0x98] sm:$0xff]
        %v707 = vld [vmem:[#allocation3 + $0xa0] sm:$0xff]
        %v708 = vld [vmem:[#allocation3 + $0xa8] sm:$0xff]
        %v709 = vld [vmem:[#allocation3 + $0xb0] sm:$0xff]
        %v710 = vld [vmem:[#allocation3 + $0xb8] sm:$0xff]
        %v711 = vld [vmem:[#allocation3 + $0xc0] sm:$0xff]
        %v712 = vld [vmem:[#allocation3 + $0xc8] sm:$0xff]
        %v713 = vld [vmem:[#allocation3 + $0xd0] sm:$0xff]
        %v714 = vld [vmem:[#allocation3 + $0xd8] sm:$0xff]
        %v715 = vld [vmem:[#allocation3 + $0xe0] sm:$0xff]
        %v716 = vld [vmem:[#allocation3 + $0xe8] sm:$0xff]
        %v717 = vld [vmem:[#allocation3 + $0xf0] sm:$0xff]
        %v718 = vld [vmem:[#allocation3 + $0xf8] sm:$0xff]
        %v719 = vld [vmem:[#allocation3 + $0x100] sm:$0xff]
        %v720 = vld [vmem:[#allocation3 + $0x108] sm:$0xff]
        %v721 = vld [vmem:[#allocation3 + $0x110] sm:$0xff]
        %v722 = vld [vmem:[#allocation3 + $0x118] sm:$0xff]
        %v723 = vld [vmem:[#allocation3 + $0x120] sm:$0xff]
        %v724 = vld [vmem:[#allocation3 + $0x128] sm:$0xff]
        %v725 = vld [vmem:[#allocation3 + $0x130] sm:$0xff]
        %v726 = vld [vmem:[#allocation3 + $0x138] sm:$0xff]
        %v727 = vld [vmem:[#allocation3 + $0x140] sm:$0xff]
        %v728 = vld [vmem:[#allocation3 + $0x148] sm:$0xff]
        %v729 = vld [vmem:[#allocation3 + $0x150] sm:$0xff]
        %v730 = vld [vmem:[#allocation3 + $0x158] sm:$0xff]
        %v731 = vld [vmem:[#allocation3 + $0x160] sm:$0xff]
        %v732 = vld [vmem:[#allocation3 + $0x168] sm:$0xff]
        %v733 = vld [vmem:[#allocation3 + $0x170] sm:$0xff]
        %v734 = vld [vmem:[#allocation3 + $0x178] sm:$0xff]
        %v735 = vld [vmem:[#allocation3 + $0x180] sm:$0xff]
        %v736 = vld [vmem:[#allocation3 + $0x188] sm:$0xff]
        %v737 = vld [vmem:[#allocation3 + $0x190] sm:$0xff]
        %v738 = vld [vmem:[#allocation3 + $0x198] sm:$0xff]
        %v739 = vld [vmem:[#allocation3 + $0x1a0] sm:$0xff]
        %v740 = vld [vmem:[#allocation3 + $0x1a8] sm:$0xff]
        %v741 = vld [vmem:[#allocation3 + $0x1b0] sm:$0xff]
        %v742 = vld [vmem:[#allocation3 + $0x1b8] sm:$0xff]
        %v743 = vld [vmem:[#allocation3 + $0x1c0] sm:$0xff]
        %v744 = vld [vmem:[#allocation3 + $0x1c8] sm:$0xff]
        %v745 = vld [vmem:[#allocation3 + $0x1d0] sm:$0xff]
        %v746 = vld [vmem:[#allocation3 + $0x1d8] sm:$0xff]
        %v747 = vld [vmem:[#allocation3 + $0x1e0] sm:$0xff]
        %v748 = vld [vmem:[#allocation3 + $0x1e8] sm:$0xff]
        %v749 = vld [vmem:[#allocation3 + $0x1f0] sm:$0xff]
        %v750 = vld [vmem:[#allocation3 + $0x1f8] sm:$0xff]
        %v751 = vld [vmem:[#allocation3 + $0x200] sm:$0xff]
        %v752 = vld [vmem:[#allocation3 + $0x208] sm:$0xff]
        %v753 = vld [vmem:[#allocation3 + $0x210] sm:$0xff]
        %v754 = vld [vmem:[#allocation3 + $0x218] sm:$0xff]
        %v755 = vld [vmem:[#allocation3 + $0x220] sm:$0xff]
        %v756 = vld [vmem:[#allocation3 + $0x228] sm:$0xff]
        %v757 = vld [vmem:[#allocation3 + $0x230] sm:$0xff]
        %v758 = vld [vmem:[#allocation3 + $0x238] sm:$0xff]
        %v759 = vld [vmem:[#allocation3 + $0x240] sm:$0xff]
        %v760 = vld [vmem:[#allocation3 + $0x248] sm:$0xff]
        %v761 = vld [vmem:[#allocation3 + $0x250] sm:$0xff]
        %v762 = vld [vmem:[#allocation3 + $0x258] sm:$0xff]
        %v763 = vld [vmem:[#allocation3 + $0x260] sm:$0xff]
        %v764 = vld [vmem:[#allocation3 + $0x268] sm:$0xff]
        %v765 = vld [vmem:[#allocation3 + $0x270] sm:$0xff]
        %v766 = vld [vmem:[#allocation3 + $0x278] sm:$0xff]
        %v767 = vld [vmem:[#allocation3 + $0x280] sm:$0xff]
        %v768 = vld [vmem:[#allocation3 + $0x288] sm:$0xff]
        %v769 = vld [vmem:[#allocation3 + $0x290] sm:$0xff]
        %v770 = vld [vmem:[#allocation3 + $0x298] sm:$0xff]
        %v771 = vld [vmem:[#allocation3 + $0x2a0] sm:$0xff]
        %v772 = vld [vmem:[#allocation3 + $0x2a8] sm:$0xff]
        %v773 = vld [vmem:[#allocation3 + $0x2b0] sm:$0xff]
        %v774 = vld [vmem:[#allocation3 + $0x2b8] sm:$0xff]
        %v775 = vld [vmem:[#allocation3 + $0x2c0] sm:$0xff]
        %v776 = vld [vmem:[#allocation3 + $0x2c8] sm:$0xff]
        %v777 = vld [vmem:[#allocation3 + $0x2d0] sm:$0xff]
        %v778 = vld [vmem:[#allocation3 + $0x2d8] sm:$0xff]
        %v779 = vld [vmem:[#allocation3 + $0x2e0] sm:$0xff]
        %v780 = vld [vmem:[#allocation3 + $0x2e8] sm:$0xff]
        %v781 = vld [vmem:[#allocation3 + $0x2f0] sm:$0xff]
        %v782 = vld [vmem:[#allocation3 + $0x2f8] sm:$0xff]
        %v783 = vld [vmem:[#allocation3 + $0x300] sm:$0xff]
        %v784 = vld [vmem:[#allocation3 + $0x308] sm:$0xff]
        %v785 = vld [vmem:[#allocation3 + $0x310] sm:$0xff]
        %v786 = vld [vmem:[#allocation3 + $0x318] sm:$0xff]
        %v787 = vld [vmem:[#allocation3 + $0x320] sm:$0xff]
        %v788 = vld [vmem:[#allocation3 + $0x328] sm:$0xff]
        %v789 = vld [vmem:[#allocation3 + $0x330] sm:$0xff]
        %v790 = vld [vmem:[#allocation3 + $0x338] sm:$0xff]
        %v791 = vld [vmem:[#allocation3 + $0x340] sm:$0xff]
        %v792 = vld [vmem:[#allocation3 + $0x348] sm:$0xff]
        %v793 = vld [vmem:[#allocation3 + $0x350] sm:$0xff]
        %v794 = vld [vmem:[#allocation3 + $0x358] sm:$0xff]
        %v795 = vld [vmem:[#allocation3 + $0x360] sm:$0xff]
        %v796 = vld [vmem:[#allocation3 + $0x368] sm:$0xff]
        %v797 = vld [vmem:[#allocation3 + $0x370] sm:$0xff]
        %v798 = vld [vmem:[#allocation3 + $0x378] sm:$0xff]
        %v799 = vld [vmem:[#allocation3 + $0x380] sm:$0xff]
        %v800 = vld [vmem:[#allocation3 + $0x388] sm:$0xff]
        %v801 = vld [vmem:[#allocation3 + $0x390] sm:$0xff]
        %v802 = vld [vmem:[#allocation3 + $0x398] sm:$0xff]
        %v803 = vld [vmem:[#allocation3 + $0x3a0] sm:$0xff]
        %v804 = vld [vmem:[#allocation3 + $0x3a8] sm:$0xff]
        %v805 = vld [vmem:[#allocation3 + $0x3b0] sm:$0xff]
        %v806 = vld [vmem:[#allocation3 + $0x3b8] sm:$0xff]
        %v807 = vld [vmem:[#allocation3 + $0x3c0] sm:$0xff]
        %v808 = vld [vmem:[#allocation3 + $0x3c8] sm:$0xff]
        %v809 = vld [vmem:[#allocation3 + $0x3d0] sm:$0xff]
        %v810 = vld [vmem:[#allocation3 + $0x3d8] sm:$0xff]
        %v811 = vld [vmem:[#allocation3 + $0x3e0] sm:$0xff]
        %v812 = vld [vmem:[#allocation3 + $0x3e8] sm:$0xff]
        %v813 = vld [vmem:[#allocation3 + $0x3f0] sm:$0xff]
        %v814 = vld [vmem:[#allocation3 + $0x3f8] sm:$0xff]
        %v815 = vld [vmem:[#allocation3 + $0x400] sm:$0xff]
        %v816 = vld [vmem:[#allocation3 + $0x408] sm:$0xff]
        %v817 = vld [vmem:[#allocation3 + $0x410] sm:$0xff]
        %v818 = vld [vmem:[#allocation3 + $0x418] sm:$0xff]
        %v819 = vld [vmem:[#allocation3 + $0x420] sm:$0xff]
        %v820 = vld [vmem:[#allocation3 + $0x428] sm:$0xff]
        %v821 = vld [vmem:[#allocation3 + $0x430] sm:$0xff]
        %v822 = vld [vmem:[#allocation3 + $0x438] sm:$0xff]
        %v823 = vld [vmem:[#allocation3 + $0x440] sm:$0xff]
        %v824 = vld [vmem:[#allocation3 + $0x448] sm:$0xff]
        %v825 = vld [vmem:[#allocation3 + $0x450] sm:$0xff]
        %v826 = vld [vmem:[#allocation3 + $0x458] sm:$0xff]
        %v827 = vld [vmem:[#allocation3 + $0x460] sm:$0xff]
        %v828 = vld [vmem:[#allocation3 + $0x468] sm:$0xff]
        %v829 = vld [vmem:[#allocation3 + $0x470] sm:$0xff]
        %v830 = vld [vmem:[#allocation3 + $0x478] sm:$0xff]
        %v831 = vld [vmem:[#allocation5] sm:$0xff]
        %v832 = vld [vmem:[#allocation5 + $0x8] sm:$0xff]
        %v833 = vld [vmem:[#allocation5 + $0x10] sm:$0xff]
        %v834 = vld [vmem:[#allocation5 + $0x18] sm:$0xff]
        %v835 = vld [vmem:[#allocation5 + $0x20] sm:$0xff]
        %v836 = vld [vmem:[#allocation5 + $0x28] sm:$0xff]
        %v837 = vld [vmem:[#allocation5 + $0x30] sm:$0xff]
        %v838 = vld [vmem:[#allocation5 + $0x38] sm:$0xff]
        %v839 = vld [vmem:[#allocation5 + $0x40] sm:$0xff]
        %v840 = vld [vmem:[#allocation5 + $0x48] sm:$0xff]
        %v841 = vld [vmem:[#allocation5 + $0x50] sm:$0xff]
        %v842 = vld [vmem:[#allocation5 + $0x58] sm:$0xff]
        %v843 = vld [vmem:[#allocation5 + $0x60] sm:$0xff]
        %v844 = vld [vmem:[#allocation5 + $0x68] sm:$0xff]
        %v845 = vld [vmem:[#allocation5 + $0x70] sm:$0xff]
        %v846 = vld [vmem:[#allocation5 + $0x78] sm:$0xff]
        %v847 = vld [vmem:[#allocation5 + $0x80] sm:$0xff]
        %v848 = vld [vmem:[#allocation5 + $0x88] sm:$0xff]
        %v849 = vld [vmem:[#allocation5 + $0x90] sm:$0xff]
        %v850 = vld [vmem:[#allocation5 + $0x98] sm:$0xff]
        %v851 = vld [vmem:[#allocation5 + $0xa0] sm:$0xff]
        %v852 = vld [vmem:[#allocation5 + $0xa8] sm:$0xff]
        %v853 = vld [vmem:[#allocation5 + $0xb0] sm:$0xff]
        %v854 = vld [vmem:[#allocation5 + $0xb8] sm:$0xff]
        %v855 = vld [vmem:[#allocation5 + $0xc0] sm:$0xff]
        %v856 = vld [vmem:[#allocation5 + $0xc8] sm:$0xff]
        %v857 = vld [vmem:[#allocation5 + $0xd0] sm:$0xff]
        %v858 = vld [vmem:[#allocation5 + $0xd8] sm:$0xff]
        %v859 = vld [vmem:[#allocation5 + $0xe0] sm:$0xff]
        %v860 = vld [vmem:[#allocation5 + $0xe8] sm:$0xff]
        %v861 = vld [vmem:[#allocation5 + $0xf0] sm:$0xff]
        %v862 = vld [vmem:[#allocation5 + $0xf8] sm:$0xff]
        %v863 = vld [vmem:[#allocation5 + $0x100] sm:$0xff]
        %v864 = vld [vmem:[#allocation5 + $0x108] sm:$0xff]
        %v865 = vld [vmem:[#allocation5 + $0x110] sm:$0xff]
        %v866 = vld [vmem:[#allocation5 + $0x118] sm:$0xff]
        %v867 = vld [vmem:[#allocation5 + $0x120] sm:$0xff]
        %v868 = vld [vmem:[#allocation5 + $0x128] sm:$0xff]
        %v869 = vld [vmem:[#allocation5 + $0x130] sm:$0xff]
        %v870 = vld [vmem:[#allocation5 + $0x138] sm:$0xff]
        %v871 = vld [vmem:[#allocation5 + $0x140] sm:$0xff]
        %v872 = vld [vmem:[#allocation5 + $0x148] sm:$0xff]
        %v873 = vld [vmem:[#allocation5 + $0x150] sm:$0xff]
        %v874 = vld [vmem:[#allocation5 + $0x158] sm:$0xff]
        %v875 = vld [vmem:[#allocation5 + $0x160] sm:$0xff]
        %v876 = vld [vmem:[#allocation5 + $0x168] sm:$0xff]
        %v877 = vld [vmem:[#allocation5 + $0x170] sm:$0xff]
        %v878 = vld [vmem:[#allocation5 + $0x178] sm:$0xff]
        %v879 = vld [vmem:[#allocation5 + $0x180] sm:$0xff]
        %v880 = vld [vmem:[#allocation5 + $0x188] sm:$0xff]
        %v881 = vld [vmem:[#allocation5 + $0x190] sm:$0xff]
        %v882 = vld [vmem:[#allocation5 + $0x198] sm:$0xff]
        %v883 = vld [vmem:[#allocation5 + $0x1a0] sm:$0xff]
        %v884 = vld [vmem:[#allocation5 + $0x1a8] sm:$0xff]
        %v885 = vld [vmem:[#allocation5 + $0x1b0] sm:$0xff]
        %v886 = vld [vmem:[#allocation5 + $0x1b8] sm:$0xff]
        %v887 = vld [vmem:[#allocation5 + $0x1c0] sm:$0xff]
        %v888 = vld [vmem:[#allocation5 + $0x1c8] sm:$0xff]
        %v889 = vld [vmem:[#allocation5 + $0x1d0] sm:$0xff]
        %v890 = vld [vmem:[#allocation5 + $0x1d8] sm:$0xff]
        %v891 = vld [vmem:[#allocation5 + $0x1e0] sm:$0xff]
        %v892 = vld [vmem:[#allocation5 + $0x1e8] sm:$0xff]
        %v893 = vld [vmem:[#allocation5 + $0x1f0] sm:$0xff]
        %v894 = vld [vmem:[#allocation5 + $0x1f8] sm:$0xff]
        %v895 = vld [vmem:[#allocation5 + $0x200] sm:$0xff]
        %v896 = vld [vmem:[#allocation5 + $0x208] sm:$0xff]
        %v897 = vld [vmem:[#allocation5 + $0x210] sm:$0xff]
        %v898 = vld [vmem:[#allocation5 + $0x218] sm:$0xff]
        %v899 = vld [vmem:[#allocation5 + $0x220] sm:$0xff]
        %v900 = vld [vmem:[#allocation5 + $0x228] sm:$0xff]
        %v901 = vld [vmem:[#allocation5 + $0x230] sm:$0xff]
        %v902 = vld [vmem:[#allocation5 + $0x238] sm:$0xff]
        %v903 = vld [vmem:[#allocation5 + $0x240] sm:$0xff]
        %v904 = vld [vmem:[#allocation5 + $0x248] sm:$0xff]
        %v905 = vld [vmem:[#allocation5 + $0x250] sm:$0xff]
        %v906 = vld [vmem:[#allocation5 + $0x258] sm:$0xff]
        %v907 = vld [vmem:[#allocation5 + $0x260] sm:$0xff]
        %v908 = vld [vmem:[#allocation5 + $0x268] sm:$0xff]
        %v909 = vld [vmem:[#allocation5 + $0x270] sm:$0xff]
        %v910 = vld [vmem:[#allocation5 + $0x278] sm:$0xff]
        %v911 = vld [vmem:[#allocation5 + $0x280] sm:$0xff]
        %v912 = vld [vmem:[#allocation5 + $0x288] sm:$0xff]
        %v913 = vld [vmem:[#allocation5 + $0x290] sm:$0xff]
        %v914 = vld [vmem:[#allocation5 + $0x298] sm:$0xff]
        %v915 = vld [vmem:[#allocation5 + $0x2a0] sm:$0xff]
        %v916 = vld [vmem:[#allocation5 + $0x2a8] sm:$0xff]
        %v917 = vld [vmem:[#allocation5 + $0x2b0] sm:$0xff]
        %v918 = vld [vmem:[#allocation5 + $0x2b8] sm:$0xff]
        %v919 = vld [vmem:[#allocation5 + $0x2c0] sm:$0xff]
        %v920 = vld [vmem:[#allocation5 + $0x2c8] sm:$0xff]
        %v921 = vld [vmem:[#allocation5 + $0x2d0] sm:$0xff]
        %v922 = vld [vmem:[#allocation5 + $0x2d8] sm:$0xff]
        %v923 = vld [vmem:[#allocation5 + $0x2e0] sm:$0xff]
        %v924 = vld [vmem:[#allocation5 + $0x2e8] sm:$0xff]
        %v925 = vld [vmem:[#allocation5 + $0x2f0] sm:$0xff]
        %v926 = vld [vmem:[#allocation5 + $0x2f8] sm:$0xff]
        %v927 = vld [vmem:[#allocation5 + $0x300] sm:$0xff]
        %v928 = vld [vmem:[#allocation5 + $0x308] sm:$0xff]
        %v929 = vld [vmem:[#allocation5 + $0x310] sm:$0xff]
        %v930 = vld [vmem:[#allocation5 + $0x318] sm:$0xff]
        %v931 = vld [vmem:[#allocation5 + $0x320] sm:$0xff]
        %v932 = vld [vmem:[#allocation5 + $0x328] sm:$0xff]
        %v933 = vld [vmem:[#allocation5 + $0x330] sm:$0xff]
        %v934 = vld [vmem:[#allocation5 + $0x338] sm:$0xff]
        %v935 = vld [vmem:[#allocation5 + $0x340] sm:$0xff]
        %v936 = vld [vmem:[#allocation5 + $0x348] sm:$0xff]
        %v937 = vld [vmem:[#allocation5 + $0x350] sm:$0xff]
        %v938 = vld [vmem:[#allocation5 + $0x358] sm:$0xff]
        %v939 = vld [vmem:[#allocation5 + $0x360] sm:$0xff]
        %v940 = vld [vmem:[#allocation5 + $0x368] sm:$0xff]
        %v941 = vld [vmem:[#allocation5 + $0x370] sm:$0xff]
        %v942 = vld [vmem:[#allocation5 + $0x378] sm:$0xff]
        %v943 = vld [vmem:[#allocation5 + $0x380] sm:$0xff]
        %v944 = vld [vmem:[#allocation5 + $0x388] sm:$0xff]
        %v945 = vld [vmem:[#allocation5 + $0x390] sm:$0xff]
        %v946 = vld [vmem:[#allocation5 + $0x398] sm:$0xff]
        %v947 = vld [vmem:[#allocation5 + $0x3a0] sm:$0xff]
        %v948 = vld [vmem:[#allocation5 + $0x3a8] sm:$0xff]
        %v949 = vld [vmem:[#allocation5 + $0x3b0] sm:$0xff]
        %v950 = vld [vmem:[#allocation5 + $0x3b8] sm:$0xff]
        %v951 = vld [vmem:[#allocation5 + $0x3c0] sm:$0xff]
        %v952 = vld [vmem:[#allocation5 + $0x3c8] sm:$0xff]
        %v953 = vld [vmem:[#allocation5 + $0x3d0] sm:$0xff]
        %v954 = vld [vmem:[#allocation5 + $0x3d8] sm:$0xff]
        %v955 = vld [vmem:[#allocation5 + $0x3e0] sm:$0xff]
        %v956 = vld [vmem:[#allocation5 + $0x3e8] sm:$0xff]
        %v957 = vld [vmem:[#allocation5 + $0x3f0] sm:$0xff]
        %v958 = vld [vmem:[#allocation5 + $0x3f8] sm:$0xff]
        %v959 = vld [vmem:[#allocation5 + $0x400] sm:$0xff]
        %v960 = vld [vmem:[#allocation5 + $0x408] sm:$0xff]
        %v961 = vld [vmem:[#allocation5 + $0x410] sm:$0xff]
        %v962 = vld [vmem:[#allocation5 + $0x418] sm:$0xff]
        %v963 = vld [vmem:[#allocation5 + $0x420] sm:$0xff]
        %v964 = vld [vmem:[#allocation5 + $0x428] sm:$0xff]
        %v965 = vld [vmem:[#allocation5 + $0x430] sm:$0xff]
        %v966 = vld [vmem:[#allocation5 + $0x438] sm:$0xff]
        %v967 = vld [vmem:[#allocation5 + $0x440] sm:$0xff]
        %v968 = vld [vmem:[#allocation5 + $0x448] sm:$0xff]
        %v969 = vld [vmem:[#allocation5 + $0x450] sm:$0xff]
        %v970 = vld [vmem:[#allocation5 + $0x458] sm:$0xff]
        %v971 = vld [vmem:[#allocation5 + $0x460] sm:$0xff]
        %v972 = vld [vmem:[#allocation5 + $0x468] sm:$0xff]
        %v973 = vld [vmem:[#allocation5 + $0x470] sm:$0xff]
        %v974 = vld [vmem:[#allocation5 + $0x478] sm:$0xff]
        %v975 = vld [vmem:[#allocation5 + $0x480] sm:$0xff]
        %v976 = vld [vmem:[#allocation5 + $0x488] sm:$0xff]
        %v977 = vld [vmem:[#allocation5 + $0x490] sm:$0xff]
        %v978 = vld [vmem:[#allocation5 + $0x498] sm:$0xff]
        %v979 = vld [vmem:[#allocation5 + $0x4a0] sm:$0xff]
        %v980 = vld [vmem:[#allocation5 + $0x4a8] sm:$0xff]
        %v981 = vld [vmem:[#allocation5 + $0x4b0] sm:$0xff]
        %v982 = vld [vmem:[#allocation5 + $0x4b8] sm:$0xff]
        %v983 = vld [vmem:[#allocation5 + $0x4c0] sm:$0xff]
        %v984 = vld [vmem:[#allocation5 + $0x4c8] sm:$0xff]
        %v985 = vld [vmem:[#allocation5 + $0x4d0] sm:$0xff]
        %v986 = vld [vmem:[#allocation5 + $0x4d8] sm:$0xff]
        %v987 = vld [vmem:[#allocation5 + $0x4e0] sm:$0xff]
        %v988 = vld [vmem:[#allocation5 + $0x4e8] sm:$0xff]
        %v989 = vld [vmem:[#allocation5 + $0x4f0] sm:$0xff]
        %v990 = vld [vmem:[#allocation5 + $0x4f8] sm:$0xff]
        %v991 = vld [vmem:[#allocation5 + $0x500] sm:$0xff]
        %v992 = vld [vmem:[#allocation5 + $0x508] sm:$0xff]
        %v993 = vld [vmem:[#allocation5 + $0x510] sm:$0xff]
        %v994 = vld [vmem:[#allocation5 + $0x518] sm:$0xff]
        %v995 = vld [vmem:[#allocation5 + $0x520] sm:$0xff]
        %v996 = vld [vmem:[#allocation5 + $0x528] sm:$0xff]
        %v997 = vld [vmem:[#allocation5 + $0x530] sm:$0xff]
        %v998 = vld [vmem:[#allocation5 + $0x538] sm:$0xff]
        %v999 = vld [vmem:[#allocation5 + $0x540] sm:$0xff]
        %v1000 = vld [vmem:[#allocation5 + $0x548] sm:$0xff]
        %v1001 = vld [vmem:[#allocation5 + $0x550] sm:$0xff]
        %v1002 = vld [vmem:[#allocation5 + $0x558] sm:$0xff]
        %v1003 = vld [vmem:[#allocation5 + $0x560] sm:$0xff]
        %v1004 = vld [vmem:[#allocation5 + $0x568] sm:$0xff]
        %v1005 = vld [vmem:[#allocation5 + $0x570] sm:$0xff]
        %v1006 = vld [vmem:[#allocation5 + $0x578] sm:$0xff]
        %v1007 = vld [vmem:[#allocation5 + $0x580] sm:$0xff]
        %v1008 = vld [vmem:[#allocation5 + $0x588] sm:$0xff]
        %v1009 = vld [vmem:[#allocation5 + $0x590] sm:$0xff]
        %v1010 = vld [vmem:[#allocation5 + $0x598] sm:$0xff]
        %v1011 = vld [vmem:[#allocation5 + $0x5a0] sm:$0xff]
        %v1012 = vld [vmem:[#allocation5 + $0x5a8] sm:$0xff]
        %v1013 = vld [vmem:[#allocation5 + $0x5b0] sm:$0xff]
        %v1014 = vld [vmem:[#allocation5 + $0x5b8] sm:$0xff]
        %v1015 = vld [vmem:[#allocation5 + $0x5c0] sm:$0xff]
        %v1016 = vld [vmem:[#allocation5 + $0x5c8] sm:$0xff]
        %v1017 = vld [vmem:[#allocation5 + $0x5d0] sm:$0xff]
        %v1018 = vld [vmem:[#allocation5 + $0x5d8] sm:$0xff]
        %v1019 = vld [vmem:[#allocation5 + $0x5e0] sm:$0xff]
        %v1020 = vld [vmem:[#allocation5 + $0x5e8] sm:$0xff]
        %v1021 = vld [vmem:[#allocation5 + $0x5f0] sm:$0xff]
        %v1022 = vld [vmem:[#allocation5 + $0x5f8] sm:$0xff]
        %v1023 = vld [vmem:[#allocation5 + $0x600] sm:$0xff]
        %v1024 = vld [vmem:[#allocation5 + $0x608] sm:$0xff]
        %v1025 = vld [vmem:[#allocation5 + $0x610] sm:$0xff]
        %v1026 = vld [vmem:[#allocation5 + $0x618] sm:$0xff]
        %v1027 = vld [vmem:[#allocation5 + $0x620] sm:$0xff]
        %v1028 = vld [vmem:[#allocation5 + $0x628] sm:$0xff]
        %v1029 = vld [vmem:[#allocation5 + $0x630] sm:$0xff]
        %v1030 = vld [vmem:[#allocation5 + $0x638] sm:$0xff]
        %v1031 = vld [vmem:[#allocation5 + $0x640] sm:$0xff]
        %v1032 = vld [vmem:[#allocation5 + $0x648] sm:$0xff]
        %v1033 = vld [vmem:[#allocation5 + $0x650] sm:$0xff]
        %v1034 = vld [vmem:[#allocation5 + $0x658] sm:$0xff]
        %v1035 = vld [vmem:[#allocation5 + $0x660] sm:$0xff]
        %v1036 = vld [vmem:[#allocation5 + $0x668] sm:$0xff]
        %v1037 = vld [vmem:[#allocation5 + $0x670] sm:$0xff]
        %v1038 = vld [vmem:[#allocation5 + $0x678] sm:$0xff]
        %v1039 = vld [vmem:[#allocation5 + $0x680] sm:$0xff]
        %v1040 = vld [vmem:[#allocation5 + $0x688] sm:$0xff]
        %v1041 = vld [vmem:[#allocation5 + $0x690] sm:$0xff]
        %v1042 = vld [vmem:[#allocation5 + $0x698] sm:$0xff]
        %v1043 = vld [vmem:[#allocation5 + $0x6a0] sm:$0xff]
        %v1044 = vld [vmem:[#allocation5 + $0x6a8] sm:$0xff]
        %v1045 = vld [vmem:[#allocation5 + $0x6b0] sm:$0xff]
        %v1046 = vld [vmem:[#allocation5 + $0x6b8] sm:$0xff]
        %v1047 = vld [vmem:[#allocation5 + $0x6c0] sm:$0xff]
        %v1048 = vld [vmem:[#allocation5 + $0x6c8] sm:$0xff]
        %v1049 = vld [vmem:[#allocation5 + $0x6d0] sm:$0xff]
        %v1050 = vld [vmem:[#allocation5 + $0x6d8] sm:$0xff]
        %v1051 = vld [vmem:[#allocation5 + $0x6e0] sm:$0xff]
        %v1052 = vld [vmem:[#allocation5 + $0x6e8] sm:$0xff]
        %v1053 = vld [vmem:[#allocation5 + $0x6f0] sm:$0xff]
        %v1054 = vld [vmem:[#allocation5 + $0x6f8] sm:$0xff]
        %v1055 = vld [vmem:[#allocation5 + $0x700] sm:$0xff]
        %v1056 = vld [vmem:[#allocation5 + $0x708] sm:$0xff]
        %v1057 = vld [vmem:[#allocation5 + $0x710] sm:$0xff]
        %v1058 = vld [vmem:[#allocation5 + $0x718] sm:$0xff]
        %v1059 = vld [vmem:[#allocation5 + $0x720] sm:$0xff]
        %v1060 = vld [vmem:[#allocation5 + $0x728] sm:$0xff]
        %v1061 = vld [vmem:[#allocation5 + $0x730] sm:$0xff]
        %v1062 = vld [vmem:[#allocation5 + $0x738] sm:$0xff]
        %v1063 = vld [vmem:[#allocation5 + $0x740] sm:$0xff]
        %v1064 = vld [vmem:[#allocation5 + $0x748] sm:$0xff]
        %v1065 = vld [vmem:[#allocation5 + $0x750] sm:$0xff]
        %v1066 = vld [vmem:[#allocation5 + $0x758] sm:$0xff]
        %v1067 = vld [vmem:[#allocation5 + $0x760] sm:$0xff]
        %v1068 = vld [vmem:[#allocation5 + $0x768] sm:$0xff]
        %v1069 = vld [vmem:[#allocation5 + $0x770] sm:$0xff]
        %v1070 = vld [vmem:[#allocation5 + $0x778] sm:$0xff]
        %v1071 = vld [vmem:[#allocation5 + $0x780] sm:$0xff]
        %v1072 = vld [vmem:[#allocation5 + $0x788] sm:$0xff]
        %v1073 = vld [vmem:[#allocation5 + $0x790] sm:$0xff]
        %v1074 = vld [vmem:[#allocation5 + $0x798] sm:$0xff]
        %v1075 = vld [vmem:[#allocation5 + $0x7a0] sm:$0xff]
        %v1076 = vld [vmem:[#allocation5 + $0x7a8] sm:$0xff]
        %v1077 = vld [vmem:[#allocation5 + $0x7b0] sm:$0xff]
        %v1078 = vld [vmem:[#allocation5 + $0x7b8] sm:$0xff]
        %v1079 = vld [vmem:[#allocation5 + $0x7c0] sm:$0xff]
        %v1080 = vld [vmem:[#allocation5 + $0x7c8] sm:$0xff]
        %v1081 = vld [vmem:[#allocation5 + $0x7d0] sm:$0xff]
        %v1082 = vld [vmem:[#allocation5 + $0x7d8] sm:$0xff]
        %v1083 = vld [vmem:[#allocation5 + $0x7e0] sm:$0xff]
        %v1084 = vld [vmem:[#allocation5 + $0x7e8] sm:$0xff]
        %v1085 = vld [vmem:[#allocation5 + $0x7f0] sm:$0xff]
        %v1086 = vld [vmem:[#allocation5 + $0x7f8] sm:$0xff]
        %v1087 = vld [vmem:[#allocation5 + $0x800] sm:$0xff]
        %v1088 = vld [vmem:[#allocation5 + $0x808] sm:$0xff]
        %v1089 = vld [vmem:[#allocation5 + $0x810] sm:$0xff]
        %v1090 = vld [vmem:[#allocation5 + $0x818] sm:$0xff]
        %v1091 = vld [vmem:[#allocation5 + $0x820] sm:$0xff]
        %v1092 = vld [vmem:[#allocation5 + $0x828] sm:$0xff]
        %v1093 = vld [vmem:[#allocation5 + $0x830] sm:$0xff]
        %v1094 = vld [vmem:[#allocation5 + $0x838] sm:$0xff]
        %v1095 = vld [vmem:[#allocation5 + $0x840] sm:$0xff]
        %v1096 = vld [vmem:[#allocation5 + $0x848] sm:$0xff]
        %v1097 = vld [vmem:[#allocation5 + $0x850] sm:$0xff]
        %v1098 = vld [vmem:[#allocation5 + $0x858] sm:$0xff]
        %v1099 = vld [vmem:[#allocation5 + $0x860] sm:$0xff]
        %v1100 = vld [vmem:[#allocation5 + $0x868] sm:$0xff]
        %v1101 = vld [vmem:[#allocation5 + $0x870] sm:$0xff]
        %v1102 = vld [vmem:[#allocation5 + $0x878] sm:$0xff]
        %v1103 = vld [vmem:[#allocation5 + $0x880] sm:$0xff]
        %v1104 = vld [vmem:[#allocation5 + $0x888] sm:$0xff]
        %v1105 = vld [vmem:[#allocation5 + $0x890] sm:$0xff]
        %v1106 = vld [vmem:[#allocation5 + $0x898] sm:$0xff]
        %v1107 = vld [vmem:[#allocation5 + $0x8a0] sm:$0xff]
        %v1108 = vld [vmem:[#allocation5 + $0x8a8] sm:$0xff]
        %v1109 = vld [vmem:[#allocation5 + $0x8b0] sm:$0xff]
        %v1110 = vld [vmem:[#allocation5 + $0x8b8] sm:$0xff]
        %v1111 = vld [vmem:[#allocation5 + $0x8c0] sm:$0xff]
        %v1112 = vld [vmem:[#allocation5 + $0x8c8] sm:$0xff]
        %v1113 = vld [vmem:[#allocation5 + $0x8d0] sm:$0xff]
        %v1114 = vld [vmem:[#allocation5 + $0x8d8] sm:$0xff]
        %v1115 = vld [vmem:[#allocation5 + $0x8e0] sm:$0xff]
        %v1116 = vld [vmem:[#allocation5 + $0x8e8] sm:$0xff]
        %v1117 = vld [vmem:[#allocation5 + $0x8f0] sm:$0xff]
        %v1118 = vld [vmem:[#allocation5 + $0x8f8] sm:$0xff]
        %v1119 = vld [vmem:[#allocation8] sm:$0x3]
        %v1121 = vlaneseq
        %v1122 = vshrl.u32 %v1121, 7
        %v1123 = vsub.s32 0, %v1122
        %v1124 = vrot.slane %v1119, %v1123
        %v1125 = vlaneseq
        %v1126 = vshrl.u32 %v1125, 7
        %v1127 = vsub.s32 1, %v1126
        %v1128 = vrot.slane %v1119, %v1127
        %1131 = vmatprep.subr.mxu0 %v832
        %1132 = vmatpush1.msra.mxu0 %v831
        %1133 = vmatprep.subr.mxu0 %v834
        %1134 = vmatpush1.msra.mxu0 %v833
        %1135 = vmatprep.subr.mxu0 %v836
        %1136 = vmatpush1.msra.mxu0 %v835
        %1137 = vmatprep.subr.mxu0 %v838
        %1138 = vmatpush1.msra.mxu0 %v837
        %1139 = vmatprep.subr.mxu0 %v840
        %1140 = vmatpush1.msra.mxu0 %v839
        %1141 = vmatprep.subr.mxu0 %v842
        %1142 = vmatpush1.msra.mxu0 %v841
        %1143 = vmatprep.subr.mxu0 %v844
        %1144 = vmatpush1.msra.mxu0 %v843
        %1145 = vmatprep.subr.mxu0 %v846
        %1146 = vmatpush1.msra.mxu0 %v845
        %1147 = vmatprep.subr.mxu0 %v848
        %1148 = vmatpush1.msra.mxu0 %v847
        %1149 = vmatprep.subr.mxu0 %v850
        %1150 = vmatpush1.msra.mxu0 %v849
        %1151 = vmatprep.subr.mxu0 %v852
        %1152 = vmatpush1.msra.mxu0 %v851
        %1153 = vmatprep.subr.mxu0 %v854
        %1154 = vmatpush1.msra.mxu0 %v853
        %1155 = vmatprep.subr.mxu0 %v856
        %1156 = vmatpush1.msra.mxu0 %v855
        %1157 = vmatprep.subr.mxu0 %v858
        %1158 = vmatpush1.msra.mxu0 %v857
        %1159 = vmatprep.subr.mxu0 %v860
        %1160 = vmatpush1.msra.mxu0 %v859
        %1161 = vmatprep.subr.mxu0 %v862
        %1162 = vmatpush1.msra.mxu0 %v861
        %1163 = vmatprep.subr.mxu0 %v864
        %1164 = vmatpush1.msra.mxu0 %v863
        %1165 = vmatprep.subr.mxu0 %v866
        %1166 = vmatpush1.msra.mxu0 %v865
        %1167 = vmatprep.subr.mxu0 %v868
        %1168 = vmatpush1.msra.mxu0 %v867
        %1169 = vmatprep.subr.mxu0 %v870
        %1170 = vmatpush1.msra.mxu0 %v869
        %1171 = vmatprep.subr.mxu0 %v872
        %1172 = vmatpush1.msra.mxu0 %v871
        %1173 = vmatprep.subr.mxu0 %v874
        %1174 = vmatpush1.msra.mxu0 %v873
        %1175 = vmatprep.subr.mxu0 %v876
        %1176 = vmatpush1.msra.mxu0 %v875
        %1177 = vmatprep.subr.mxu0 %v878
        %1178 = vmatpush1.msra.mxu0 %v877
        %1179 = vmatprep.subr.mxu0 %v880
        %1180 = vmatpush1.msra.mxu0 %v879
        %1181 = vmatprep.subr.mxu0 %v882
        %1182 = vmatpush1.msra.mxu0 %v881
        %1183 = vmatprep.subr.mxu0 %v884
        %1184 = vmatpush1.msra.mxu0 %v883
        %1185 = vmatprep.subr.mxu0 %v886
        %1186 = vmatpush1.msra.mxu0 %v885
        %1187 = vmatprep.subr.mxu0 %v888
        %1188 = vmatpush1.msra.mxu0 %v887
        %1189 = vmatprep.subr.mxu0 %v890
        %1190 = vmatpush1.msra.mxu0 %v889
        %1191 = vmatprep.subr.mxu0 %v892
        %1192 = vmatpush1.msra.mxu0 %v891
        %1193 = vmatprep.subr.mxu0 %v894
        %1194 = vmatpush1.msra.mxu0 %v893
        %1195 = vmatprep.mubr.f32.mxu0 %v688
        %1196 = vmatmul.mubr.f32.gmra.mrb[0].mxu0 %v687
        %v1197 = vpop.f32.mrb[0].mxu0
        %v1198 = vadd.f32 %v1124, %v1197
        %v1199 = vpop.f32.mrb[0].mxu0
        %v1200 = vadd.f32 %v1128, %v1199
        %1201 = vmatprep.mubr.f32.mxu0 %v697
        %1202 = vmatmul.mubr.f32.gmra.mrb[0].mxu0 %v696
        %v1203 = vpop.f32.mrb[0].mxu0
        %v1204 = vadd.f32 %v1124, %v1203
        %v1205 = vpop.f32.mrb[0].mxu0
        %v1206 = vadd.f32 %v1128, %v1205
        %1207 = vmatprep.mubr.f32.mxu0 %v706
        %1208 = vmatmul.mubr.f32.gmra.mrb[0].mxu0 %v705
        %v1209 = vpop.f32.mrb[0].mxu0
        %v1210 = vadd.f32 %v1124, %v1209
        %v1211 = vpop.f32.mrb[0].mxu0
        %v1212 = vadd.f32 %v1128, %v1211
        %1213 = vmatprep.mubr.f32.mxu0 %v715
        %1214 = vmatmul.mubr.f32.gmra.mrb[0].mxu0 %v714
        %v1215 = vpop.f32.mrb[0].mxu0
        %v1216 = vadd.f32 %v1124, %v1215
        %v1217 = vpop.f32.mrb[0].mxu0
        %v1218 = vadd.f32 %v1128, %v1217
        %1219 = vmatprep.mubr.f32.mxu0 %v724
        %1220 = vmatmul.mubr.f32.gmra.mrb[0].mxu0 %v723
        %v1221 = vpop.f32.mrb[0].mxu0
        %v1222 = vadd.f32 %v1124, %v1221
        %v1223 = vpop.f32.mrb[0].mxu0
        %v1224 = vadd.f32 %v1128, %v1223
        %1225 = vmatprep.mubr.f32.mxu0 %v733
        %1226 = vmatmul.mubr.f32.gmra.mrb[0].mxu0 %v732
        %v1227 = vpop.f32.mrb[0].mxu0
        %v1228 = vadd.f32 %v1124, %v1227
        %v1229 = vpop.f32.mrb[0].mxu0
        %v1230 = vadd.f32 %v1128, %v1229
        %1231 = vmatprep.mubr.f32.mxu0 %v742
        %1232 = vmatmul.mubr.f32.gmra.mrb[0].mxu0 %v741
        %v1233 = vpop.f32.mrb[0].mxu0
        %v1234 = vadd.f32 %v1124, %v1233
        %v1235 = vpop.f32.mrb[0].mxu0
        %v1236 = vadd.f32 %v1128, %v1235
        %1237 = vmatprep.mubr.f32.mxu0 %v751
        %1238 = vmatmul.mubr.f32.gmra.mrb[0].mxu0 %v750
        %v1239 = vpop.f32.mrb[0].mxu0
        %v1240 = vadd.f32 %v1124, %v1239
        %v1241 = vpop.f32.mrb[0].mxu0
        %v1242 = vadd.f32 %v1128, %v1241
        %1243 = vmatprep.mubr.f32.mxu0 %v760
        %1244 = vmatmul.mubr.f32.gmra.mrb[0].mxu0 %v759
        %v1245 = vpop.f32.mrb[0].mxu0
        %v1246 = vadd.f32 %v1124, %v1245
        %v1247 = vpop.f32.mrb[0].mxu0
        %v1248 = vadd.f32 %v1128, %v1247
        %1249 = vmatprep.mubr.f32.mxu0 %v769
        %1250 = vmatmul.mubr.f32.gmra.mrb[0].mxu0 %v768
        %v1251 = vpop.f32.mrb[0].mxu0
        %v1252 = vadd.f32 %v1124, %v1251
        %v1253 = vpop.f32.mrb[0].mxu0
        %v1254 = vadd.f32 %v1128, %v1253
        %1255 = vmatprep.mubr.f32.mxu0 %v778
        %1256 = vmatmul.mubr.f32.gmra.mrb[0].mxu0 %v777
        %v1257 = vpop.f32.mrb[0].mxu0
        %v1258 = vadd.f32 %v1124, %v1257
        %v1259 = vpop.f32.mrb[0].mxu0
        %v1260 = vadd.f32 %v1128, %v1259
        %1261 = vmatprep.mubr.f32.mxu0 %v787
        %1262 = vmatmul.mubr.f32.gmra.mrb[0].mxu0 %v786
        %v1263 = vpop.f32.mrb[0].mxu0
        %v1264 = vadd.f32 %v1124, %v1263
        %v1265 = vpop.f32.mrb[0].mxu0
        %v1266 = vadd.f32 %v1128, %v1265
        %1267 = vmatprep.mubr.f32.mxu0 %v796
        %1268 = vmatmul.mubr.f32.gmra.mrb[0].mxu0 %v795
        %v1269 = vpop.f32.mrb[0].mxu0
        %v1270 = vadd.f32 %v1124, %v1269
        %v1271 = vpop.f32.mrb[0].mxu0
        %v1272 = vadd.f32 %v1128, %v1271
        %1273 = vmatprep.mubr.f32.mxu0 %v805
        %1274 = vmatmul.mubr.f32.gmra.mrb[0].mxu0 %v804
        %v1275 = vpop.f32.mrb[0].mxu0
        %v1276 = vadd.f32 %v1124, %v1275
        %v1277 = vpop.f32.mrb[0].mxu0
        %v1278 = vadd.f32 %v1128, %v1277
        %1279 = vmatprep.mubr.f32.mxu0 %v814
        %1280 = vmatmul.mubr.f32.gmra.mrb[0].mxu0 %v813
        %v1281 = vpop.f32.mrb[0].mxu0
        %v1282 = vadd.f32 %v1124, %v1281
        %v1283 = vpop.f32.mrb[0].mxu0
        %v1284 = vadd.f32 %v1128, %v1283
        %1285 = vmatprep.mubr.f32.mxu0 %v823
        %1286 = vmatmul.mubr.f32.gmra.mrb[0].mxu0 %v822
        %v1287 = vpop.f32.mrb[0].mxu0
        %v1288 = vadd.f32 %v1124, %v1287
        %v1289 = vpop.f32.mrb[0].mxu0
        %v1290 = vadd.f32 %v1128, %v1289
        %1291 = vdwg.mxu0
        %1292 = vmatprep.subr.mxu0 %v896
        %1293 = vmatpush1.msra.mxu0 %v895
        %1294 = vmatprep.subr.mxu0 %v898
        %1295 = vmatpush1.msra.mxu0 %v897
        %1296 = vmatprep.subr.mxu0 %v900
        %1297 = vmatpush1.msra.mxu0 %v899
        %1298 = vmatprep.subr.mxu0 %v902
        %1299 = vmatpush1.msra.mxu0 %v901
        %1300 = vmatprep.subr.mxu0 %v904
        %1301 = vmatpush1.msra.mxu0 %v903
        %1302 = vmatprep.subr.mxu0 %v906
        %1303 = vmatpush1.msra.mxu0 %v905
        %1304 = vmatprep.subr.mxu0 %v908
        %1305 = vmatpush1.msra.mxu0 %v907
        %1306 = vmatprep.subr.mxu0 %v910
        %1307 = vmatpush1.msra.mxu0 %v909
        %1308 = vmatprep.subr.mxu0 %v912
        %1309 = vmatpush1.msra.mxu0 %v911
        %1310 = vmatprep.subr.mxu0 %v914
        %1311 = vmatpush1.msra.mxu0 %v913
        %1312 = vmatprep.subr.mxu0 %v916
        %1313 = vmatpush1.msra.mxu0 %v915
        %1314 = vmatprep.subr.mxu0 %v918
        %1315 = vmatpush1.msra.mxu0 %v917
        %1316 = vmatprep.subr.mxu0 %v920
        %1317 = vmatpush1.msra.mxu0 %v919
        %1318 = vmatprep.subr.mxu0 %v922
        %1319 = vmatpush1.msra.mxu0 %v921
        %1320 = vmatprep.subr.mxu0 %v924
        %1321 = vmatpush1.msra.mxu0 %v923
        %1322 = vmatprep.subr.mxu0 %v926
        %1323 = vmatpush1.msra.mxu0 %v925
        %1324 = vmatprep.subr.mxu0 %v928
        %1325 = vmatpush1.msra.mxu0 %v927
        %1326 = vmatprep.subr.mxu0 %v930
        %1327 = vmatpush1.msra.mxu0 %v929
        %1328 = vmatprep.subr.mxu0 %v932
        %1329 = vmatpush1.msra.mxu0 %v931
        %1330 = vmatprep.subr.mxu0 %v934
        %1331 = vmatpush1.msra.mxu0 %v933
        %1332 = vmatprep.subr.mxu0 %v936
        %1333 = vmatpush1.msra.mxu0 %v935
        %1334 = vmatprep.subr.mxu0 %v938
        %1335 = vmatpush1.msra.mxu0 %v937
        %1336 = vmatprep.subr.mxu0 %v940
        %1337 = vmatpush1.msra.mxu0 %v939
        %1338 = vmatprep.subr.mxu0 %v942
        %1339 = vmatpush1.msra.mxu0 %v941
        %1340 = vmatprep.subr.mxu0 %v944
        %1341 = vmatpush1.msra.mxu0 %v943
        %1342 = vmatprep.subr.mxu0 %v946
        %1343 = vmatpush1.msra.mxu0 %v945
        %1344 = vmatprep.subr.mxu0 %v948
        %1345 = vmatpush1.msra.mxu0 %v947
        %1346 = vmatprep.subr.mxu0 %v950
        %1347 = vmatpush1.msra.mxu0 %v949
        %1348 = vmatprep.subr.mxu0 %v952
        %1349 = vmatpush1.msra.mxu0 %v951
        %1350 = vmatprep.subr.mxu0 %v954
        %1351 = vmatpush1.msra.mxu0 %v953
        %1352 = vmatprep.subr.mxu0 %v956
        %1353 = vmatpush1.msra.mxu0 %v955
        %1354 = vmatprep.subr.mxu0 %v958
        %1355 = vmatpush1.msra.mxu0 %v957
        %1356 = vmatprep.mubr.f32.mxu0 %v690
        %1357 = vmatmul.mubr.f32.gmra.mrb[0].mxu0 %v689
        %v1358 = vpop.f32.mrb[0].mxu0
        %v1359 = vadd.f32 %v1198, %v1358
        %v1360 = vpop.f32.mrb[0].mxu0
        %v1361 = vadd.f32 %v1200, %v1360
        %1362 = vmatprep.mubr.f32.mxu0 %v699
        %1363 = vmatmul.mubr.f32.gmra.mrb[0].mxu0 %v698
        %v1364 = vpop.f32.mrb[0].mxu0
        %v1365 = vadd.f32 %v1204, %v1364
        %v1366 = vpop.f32.mrb[0].mxu0
        %v1367 = vadd.f32 %v1206, %v1366
        %1368 = vmatprep.mubr.f32.mxu0 %v708
        %1369 = vmatmul.mubr.f32.gmra.mrb[0].mxu0 %v707
        %v1370 = vpop.f32.mrb[0].mxu0
        %v1371 = vadd.f32 %v1210, %v1370
        %v1372 = vpop.f32.mrb[0].mxu0
        %v1373 = vadd.f32 %v1212, %v1372
        %1374 = vmatprep.mubr.f32.mxu0 %v717
        %1375 = vmatmul.mubr.f32.gmra.mrb[0].mxu0 %v716
        %v1376 = vpop.f32.mrb[0].mxu0
        %v1377 = vadd.f32 %v1216, %v1376
        %v1378 = vpop.f32.mrb[0].mxu0
        %v1379 = vadd.f32 %v1218, %v1378
        %1380 = vmatprep.mubr.f32.mxu0 %v726
        %1381 = vmatmul.mubr.f32.gmra.mrb[0].mxu0 %v725
        %v1382 = vpop.f32.mrb[0].mxu0
        %v1383 = vadd.f32 %v1222, %v1382
        %v1384 = vpop.f32.mrb[0].mxu0
        %v1385 = vadd.f32 %v1224, %v1384
        %1386 = vmatprep.mubr.f32.mxu0 %v735
        %1387 = vmatmul.mubr.f32.gmra.mrb[0].mxu0 %v734
        %v1388 = vpop.f32.mrb[0].mxu0
        %v1389 = vadd.f32 %v1228, %v1388
        %v1390 = vpop.f32.mrb[0].mxu0
        %v1391 = vadd.f32 %v1230, %v1390
        %1392 = vmatprep.mubr.f32.mxu0 %v744
        %1393 = vmatmul.mubr.f32.gmra.mrb[0].mxu0 %v743
        %v1394 = vpop.f32.mrb[0].mxu0
        %v1395 = vadd.f32 %v1234, %v1394
        %v1396 = vpop.f32.mrb[0].mxu0
        %v1397 = vadd.f32 %v1236, %v1396
        %1398 = vmatprep.mubr.f32.mxu0 %v753
        %1399 = vmatmul.mubr.f32.gmra.mrb[0].mxu0 %v752
        %v1400 = vpop.f32.mrb[0].mxu0
        %v1401 = vadd.f32 %v1240, %v1400
        %v1402 = vpop.f32.mrb[0].mxu0
        %v1403 = vadd.f32 %v1242, %v1402
        %1404 = vmatprep.mubr.f32.mxu0 %v762
        %1405 = vmatmul.mubr.f32.gmra.mrb[0].mxu0 %v761
        %v1406 = vpop.f32.mrb[0].mxu0
        %v1407 = vadd.f32 %v1246, %v1406
        %v1408 = vpop.f32.mrb[0].mxu0
        %v1409 = vadd.f32 %v1248, %v1408
        %1410 = vmatprep.mubr.f32.mxu0 %v771
        %1411 = vmatmul.mubr.f32.gmra.mrb[0].mxu0 %v770
        %v1412 = vpop.f32.mrb[0].mxu0
        %v1413 = vadd.f32 %v1252, %v1412
        %v1414 = vpop.f32.mrb[0].mxu0
        %v1415 = vadd.f32 %v1254, %v1414
        %1416 = vmatprep.mubr.f32.mxu0 %v780
        %1417 = vmatmul.mubr.f32.gmra.mrb[0].mxu0 %v779
        %v1418 = vpop.f32.mrb[0].mxu0
        %v1419 = vadd.f32 %v1258, %v1418
        %v1420 = vpop.f32.mrb[0].mxu0
        %v1421 = vadd.f32 %v1260, %v1420
        %1422 = vmatprep.mubr.f32.mxu0 %v789
        %1423 = vmatmul.mubr.f32.gmra.mrb[0].mxu0 %v788
        %v1424 = vpop.f32.mrb[0].mxu0
        %v1425 = vadd.f32 %v1264, %v1424
        %v1426 = vpop.f32.mrb[0].mxu0
        %v1427 = vadd.f32 %v1266, %v1426
        %1428 = vmatprep.mubr.f32.mxu0 %v798
        %1429 = vmatmul.mubr.f32.gmra.mrb[0].mxu0 %v797
        %v1430 = vpop.f32.mrb[0].mxu0
        %v1431 = vadd.f32 %v1270, %v1430
        %v1432 = vpop.f32.mrb[0].mxu0
        %v1433 = vadd.f32 %v1272, %v1432
        %1434 = vmatprep.mubr.f32.mxu0 %v807
        %1435 = vmatmul.mubr.f32.gmra.mrb[0].mxu0 %v806
        %v1436 = vpop.f32.mrb[0].mxu0
        %v1437 = vadd.f32 %v1276, %v1436
        %v1438 = vpop.f32.mrb[0].mxu0
        %v1439 = vadd.f32 %v1278, %v1438
        %1440 = vmatprep.mubr.f32.mxu0 %v816
        %1441 = vmatmul.mubr.f32.gmra.mrb[0].mxu0 %v815
        %v1442 = vpop.f32.mrb[0].mxu0
        %v1443 = vadd.f32 %v1282, %v1442
        %v1444 = vpop.f32.mrb[0].mxu0
        %v1445 = vadd.f32 %v1284, %v1444
        %1446 = vmatprep.mubr.f32.mxu0 %v825
        %1447 = vmatmul.mubr.f32.gmra.mrb[0].mxu0 %v824
        %v1448 = vpop.f32.mrb[0].mxu0
        %v1449 = vadd.f32 %v1288, %v1448
        %v1450 = vpop.f32.mrb[0].mxu0
        %v1451 = vadd.f32 %v1290, %v1450
        %1452 = vdwg.mxu0
        %1453 = vmatprep.subr.mxu0 %v960
        %1454 = vmatpush1.msra.mxu0 %v959
        %1455 = vmatprep.subr.mxu0 %v962
        %1456 = vmatpush1.msra.mxu0 %v961
        %1457 = vmatprep.subr.mxu0 %v964
        %1458 = vmatpush1.msra.mxu0 %v963
        %1459 = vmatprep.subr.mxu0 %v966
        %1460 = vmatpush1.msra.mxu0 %v965
        %1461 = vmatprep.subr.mxu0 %v968
        %1462 = vmatpush1.msra.mxu0 %v967
        %1463 = vmatprep.subr.mxu0 %v970
        %1464 = vmatpush1.msra.mxu0 %v969
        %1465 = vmatprep.subr.mxu0 %v972
        %1466 = vmatpush1.msra.mxu0 %v971
        %1467 = vmatprep.subr.mxu0 %v974
        %1468 = vmatpush1.msra.mxu0 %v973
        %1469 = vmatprep.subr.mxu0 %v976
        %1470 = vmatpush1.msra.mxu0 %v975
        %1471 = vmatprep.subr.mxu0 %v978
        %1472 = vmatpush1.msra.mxu0 %v977
        %1473 = vmatprep.subr.mxu0 %v980
        %1474 = vmatpush1.msra.mxu0 %v979
        %1475 = vmatprep.subr.mxu0 %v982
        %1476 = vmatpush1.msra.mxu0 %v981
        %1477 = vmatprep.subr.mxu0 %v984
        %1478 = vmatpush1.msra.mxu0 %v983
        %1479 = vmatprep.subr.mxu0 %v986
        %1480 = vmatpush1.msra.mxu0 %v985
        %1481 = vmatprep.subr.mxu0 %v988
        %1482 = vmatpush1.msra.mxu0 %v987
        %1483 = vmatprep.subr.mxu0 %v990
        %1484 = vmatpush1.msra.mxu0 %v989
        %1485 = vmatprep.subr.mxu0 %v992
        %1486 = vmatpush1.msra.mxu0 %v991
        %1487 = vmatprep.subr.mxu0 %v994
        %1488 = vmatpush1.msra.mxu0 %v993
        %1489 = vmatprep.subr.mxu0 %v996
        %1490 = vmatpush1.msra.mxu0 %v995
        %1491 = vmatprep.subr.mxu0 %v998
        %1492 = vmatpush1.msra.mxu0 %v997
        %1493 = vmatprep.subr.mxu0 %v1000
        %1494 = vmatpush1.msra.mxu0 %v999
        %1495 = vmatprep.subr.mxu0 %v1002
        %1496 = vmatpush1.msra.mxu0 %v1001
        %1497 = vmatprep.subr.mxu0 %v1004
        %1498 = vmatpush1.msra.mxu0 %v1003
        %1499 = vmatprep.subr.mxu0 %v1006
        %1500 = vmatpush1.msra.mxu0 %v1005
        %1501 = vmatprep.subr.mxu0 %v1008
        %1502 = vmatpush1.msra.mxu0 %v1007
        %1503 = vmatprep.subr.mxu0 %v1010
        %1504 = vmatpush1.msra.mxu0 %v1009
        %1505 = vmatprep.subr.mxu0 %v1012
        %1506 = vmatpush1.msra.mxu0 %v1011
        %1507 = vmatprep.subr.mxu0 %v1014
        %1508 = vmatpush1.msra.mxu0 %v1013
        %1509 = vmatprep.subr.mxu0 %v1016
        %1510 = vmatpush1.msra.mxu0 %v1015
        %1511 = vmatprep.subr.mxu0 %v1018
        %1512 = vmatpush1.msra.mxu0 %v1017
        %1513 = vmatprep.subr.mxu0 %v1020
        %1514 = vmatpush1.msra.mxu0 %v1019
        %1515 = vmatprep.subr.mxu0 %v1022
        %1516 = vmatpush1.msra.mxu0 %v1021
        %1517 = vmatprep.mubr.f32.mxu0 %v692
        %1518 = vmatmul.mubr.f32.gmra.mrb[0].mxu0 %v691
        %v1519 = vpop.f32.mrb[0].mxu0
        %v1520 = vadd.f32 %v1359, %v1519
        %v1521 = vpop.f32.mrb[0].mxu0
        %v1522 = vadd.f32 %v1361, %v1521
        %1523 = vmatprep.mubr.f32.mxu0 %v701
        %1524 = vmatmul.mubr.f32.gmra.mrb[0].mxu0 %v700
        %v1525 = vpop.f32.mrb[0].mxu0
        %v1526 = vadd.f32 %v1365, %v1525
        %v1527 = vpop.f32.mrb[0].mxu0
        %v1528 = vadd.f32 %v1367, %v1527
        %1529 = vmatprep.mubr.f32.mxu0 %v710
        %1530 = vmatmul.mubr.f32.gmra.mrb[0].mxu0 %v709
        %v1531 = vpop.f32.mrb[0].mxu0
        %v1532 = vadd.f32 %v1371, %v1531
        %v1533 = vpop.f32.mrb[0].mxu0
        %v1534 = vadd.f32 %v1373, %v1533
        %1535 = vmatprep.mubr.f32.mxu0 %v719
        %1536 = vmatmul.mubr.f32.gmra.mrb[0].mxu0 %v718
        %v1537 = vpop.f32.mrb[0].mxu0
        %v1538 = vadd.f32 %v1377, %v1537
        %v1539 = vpop.f32.mrb[0].mxu0
        %v1540 = vadd.f32 %v1379, %v1539
        %1541 = vmatprep.mubr.f32.mxu0 %v728
        %1542 = vmatmul.mubr.f32.gmra.mrb[0].mxu0 %v727
        %v1543 = vpop.f32.mrb[0].mxu0
        %v1544 = vadd.f32 %v1383, %v1543
        %v1545 = vpop.f32.mrb[0].mxu0
        %v1546 = vadd.f32 %v1385, %v1545
        %1547 = vmatprep.mubr.f32.mxu0 %v737
        %1548 = vmatmul.mubr.f32.gmra.mrb[0].mxu0 %v736
        %v1549 = vpop.f32.mrb[0].mxu0
        %v1550 = vadd.f32 %v1389, %v1549
        %v1551 = vpop.f32.mrb[0].mxu0
        %v1552 = vadd.f32 %v1391, %v1551
        %1553 = vmatprep.mubr.f32.mxu0 %v746
        %1554 = vmatmul.mubr.f32.gmra.mrb[0].mxu0 %v745
        %v1555 = vpop.f32.mrb[0].mxu0
        %v1556 = vadd.f32 %v1395, %v1555
        %v1557 = vpop.f32.mrb[0].mxu0
        %v1558 = vadd.f32 %v1397, %v1557
        %1559 = vmatprep.mubr.f32.mxu0 %v755
        %1560 = vmatmul.mubr.f32.gmra.mrb[0].mxu0 %v754
        %v1561 = vpop.f32.mrb[0].mxu0
        %v1562 = vadd.f32 %v1401, %v1561
        %v1563 = vpop.f32.mrb[0].mxu0
        %v1564 = vadd.f32 %v1403, %v1563
        %1565 = vmatprep.mubr.f32.mxu0 %v764
        %1566 = vmatmul.mubr.f32.gmra.mrb[0].mxu0 %v763
        %v1567 = vpop.f32.mrb[0].mxu0
        %v1568 = vadd.f32 %v1407, %v1567
        %v1569 = vpop.f32.mrb[0].mxu0
        %v1570 = vadd.f32 %v1409, %v1569
        %1571 = vmatprep.mubr.f32.mxu0 %v773
        %1572 = vmatmul.mubr.f32.gmra.mrb[0].mxu0 %v772
        %v1573 = vpop.f32.mrb[0].mxu0
        %v1574 = vadd.f32 %v1413, %v1573
        %v1575 = vpop.f32.mrb[0].mxu0
        %v1576 = vadd.f32 %v1415, %v1575
        %1577 = vmatprep.mubr.f32.mxu0 %v782
        %1578 = vmatmul.mubr.f32.gmra.mrb[0].mxu0 %v781
        %v1579 = vpop.f32.mrb[0].mxu0
        %v1580 = vadd.f32 %v1419, %v1579
        %v1581 = vpop.f32.mrb[0].mxu0
        %v1582 = vadd.f32 %v1421, %v1581
        %1583 = vmatprep.mubr.f32.mxu0 %v791
        %1584 = vmatmul.mubr.f32.gmra.mrb[0].mxu0 %v790
        %v1585 = vpop.f32.mrb[0].mxu0
        %v1586 = vadd.f32 %v1425, %v1585
        %v1587 = vpop.f32.mrb[0].mxu0
        %v1588 = vadd.f32 %v1427, %v1587
        %1589 = vmatprep.mubr.f32.mxu0 %v800
        %1590 = vmatmul.mubr.f32.gmra.mrb[0].mxu0 %v799
        %v1591 = vpop.f32.mrb[0].mxu0
        %v1592 = vadd.f32 %v1431, %v1591
        %v1593 = vpop.f32.mrb[0].mxu0
        %v1594 = vadd.f32 %v1433, %v1593
        %1595 = vmatprep.mubr.f32.mxu0 %v809
        %1596 = vmatmul.mubr.f32.gmra.mrb[0].mxu0 %v808
        %v1597 = vpop.f32.mrb[0].mxu0
        %v1598 = vadd.f32 %v1437, %v1597
        %v1599 = vpop.f32.mrb[0].mxu0
        %v1600 = vadd.f32 %v1439, %v1599
        %1601 = vmatprep.mubr.f32.mxu0 %v818
        %1602 = vmatmul.mubr.f32.gmra.mrb[0].mxu0 %v817
        %v1603 = vpop.f32.mrb[0].mxu0
        %v1604 = vadd.f32 %v1443, %v1603
        %v1605 = vpop.f32.mrb[0].mxu0
        %v1606 = vadd.f32 %v1445, %v1605
        %1607 = vmatprep.mubr.f32.mxu0 %v827
        %1608 = vmatmul.mubr.f32.gmra.mrb[0].mxu0 %v826
        %v1609 = vpop.f32.mrb[0].mxu0
        %v1610 = vadd.f32 %v1449, %v1609
        %v1611 = vpop.f32.mrb[0].mxu0
        %v1612 = vadd.f32 %v1451, %v1611
        %1613 = vdwg.mxu0
        %1614 = vmatprep.subr.mxu0 %v1024
        %1615 = vmatpush1.msra.mxu0 %v1023
        %1616 = vmatprep.subr.mxu0 %v1026
        %1617 = vmatpush1.msra.mxu0 %v1025
        %1618 = vmatprep.subr.mxu0 %v1028
        %1619 = vmatpush1.msra.mxu0 %v1027
        %1620 = vmatprep.subr.mxu0 %v1030
        %1621 = vmatpush1.msra.mxu0 %v1029
        %1622 = vmatprep.subr.mxu0 %v1032
        %1623 = vmatpush1.msra.mxu0 %v1031
        %1624 = vmatprep.subr.mxu0 %v1034
        %1625 = vmatpush1.msra.mxu0 %v1033
        %1626 = vmatprep.subr.mxu0 %v1036
        %1627 = vmatpush1.msra.mxu0 %v1035
        %1628 = vmatprep.subr.mxu0 %v1038
        %1629 = vmatpush1.msra.mxu0 %v1037
        %1630 = vmatprep.subr.mxu0 %v1040
        %1631 = vmatpush1.msra.mxu0 %v1039
        %1632 = vmatprep.subr.mxu0 %v1042
        %1633 = vmatpush1.msra.mxu0 %v1041
        %1634 = vmatprep.subr.mxu0 %v1044
        %1635 = vmatpush1.msra.mxu0 %v1043
        %1636 = vmatprep.subr.mxu0 %v1046
        %1637 = vmatpush1.msra.mxu0 %v1045
        %1638 = vmatprep.subr.mxu0 %v1048
        %1639 = vmatpush1.msra.mxu0 %v1047
        %1640 = vmatprep.subr.mxu0 %v1050
        %1641 = vmatpush1.msra.mxu0 %v1049
        %1642 = vmatprep.subr.mxu0 %v1052
        %1643 = vmatpush1.msra.mxu0 %v1051
        %1644 = vmatprep.subr.mxu0 %v1054
        %1645 = vmatpush1.msra.mxu0 %v1053
        %1646 = vmatprep.subr.mxu0 %v1056
        %1647 = vmatpush1.msra.mxu0 %v1055
        %1648 = vmatprep.subr.mxu0 %v1058
        %1649 = vmatpush1.msra.mxu0 %v1057
        %1650 = vmatprep.subr.mxu0 %v1060
        %1651 = vmatpush1.msra.mxu0 %v1059
        %1652 = vmatprep.subr.mxu0 %v1062
        %1653 = vmatpush1.msra.mxu0 %v1061
        %1654 = vmatprep.subr.mxu0 %v1064
        %1655 = vmatpush1.msra.mxu0 %v1063
        %1656 = vmatprep.subr.mxu0 %v1066
        %1657 = vmatpush1.msra.mxu0 %v1065
        %1658 = vmatprep.subr.mxu0 %v1068
        %1659 = vmatpush1.msra.mxu0 %v1067
        %1660 = vmatprep.subr.mxu0 %v1070
        %1661 = vmatpush1.msra.mxu0 %v1069
        %1662 = vmatprep.subr.mxu0 %v1072
        %1663 = vmatpush1.msra.mxu0 %v1071
        %1664 = vmatprep.subr.mxu0 %v1074
        %1665 = vmatpush1.msra.mxu0 %v1073
        %1666 = vmatprep.subr.mxu0 %v1076
        %1667 = vmatpush1.msra.mxu0 %v1075
        %1668 = vmatprep.subr.mxu0 %v1078
        %1669 = vmatpush1.msra.mxu0 %v1077
        %1670 = vmatprep.subr.mxu0 %v1080
        %1671 = vmatpush1.msra.mxu0 %v1079
        %1672 = vmatprep.subr.mxu0 %v1082
        %1673 = vmatpush1.msra.mxu0 %v1081
        %1674 = vmatprep.subr.mxu0 %v1084
        %1675 = vmatpush1.msra.mxu0 %v1083
        %1676 = vmatprep.subr.mxu0 %v1086
        %1677 = vmatpush1.msra.mxu0 %v1085
        %1678 = vmatprep.mubr.f32.mxu0 %v694
        %1679 = vmatmul.mubr.f32.gmra.mrb[0].mxu0 %v693
        %v1680 = vpop.f32.mrb[0].mxu0
        %v1681 = vadd.f32 %v1520, %v1680
        %v1682 = vpop.f32.mrb[0].mxu0
        %v1683 = vadd.f32 %v1522, %v1682
        %1684 = vmatprep.mubr.f32.mxu0 %v703
        %1685 = vmatmul.mubr.f32.gmra.mrb[0].mxu0 %v702
        %v1686 = vpop.f32.mrb[0].mxu0
        %v1687 = vadd.f32 %v1526, %v1686
        %v1688 = vpop.f32.mrb[0].mxu0
        %v1689 = vadd.f32 %v1528, %v1688
        %1690 = vmatprep.mubr.f32.mxu0 %v712
        %1691 = vmatmul.mubr.f32.gmra.mrb[0].mxu0 %v711
        %v1692 = vpop.f32.mrb[0].mxu0
        %v1693 = vadd.f32 %v1532, %v1692
        %v1694 = vpop.f32.mrb[0].mxu0
        %v1695 = vadd.f32 %v1534, %v1694
        %1696 = vmatprep.mubr.f32.mxu0 %v721
        %1697 = vmatmul.mubr.f32.gmra.mrb[0].mxu0 %v720
        %v1698 = vpop.f32.mrb[0].mxu0
        %v1699 = vadd.f32 %v1538, %v1698
        %v1700 = vpop.f32.mrb[0].mxu0
        %v1701 = vadd.f32 %v1540, %v1700
        %1702 = vmatprep.mubr.f32.mxu0 %v730
        %1703 = vmatmul.mubr.f32.gmra.mrb[0].mxu0 %v729
        %v1704 = vpop.f32.mrb[0].mxu0
        %v1705 = vadd.f32 %v1544, %v1704
        %v1706 = vpop.f32.mrb[0].mxu0
        %v1707 = vadd.f32 %v1546, %v1706
        %1708 = vmatprep.mubr.f32.mxu0 %v739
        %1709 = vmatmul.mubr.f32.gmra.mrb[0].mxu0 %v738
        %v1710 = vpop.f32.mrb[0].mxu0
        %v1711 = vadd.f32 %v1550, %v1710
        %v1712 = vpop.f32.mrb[0].mxu0
        %v1713 = vadd.f32 %v1552, %v1712
        %1714 = vmatprep.mubr.f32.mxu0 %v748
        %1715 = vmatmul.mubr.f32.gmra.mrb[0].mxu0 %v747
        %v1716 = vpop.f32.mrb[0].mxu0
        %v1717 = vadd.f32 %v1556, %v1716
        %v1718 = vpop.f32.mrb[0].mxu0
        %v1719 = vadd.f32 %v1558, %v1718
        %1720 = vmatprep.mubr.f32.mxu0 %v757
        %1721 = vmatmul.mubr.f32.gmra.mrb[0].mxu0 %v756
        %v1722 = vpop.f32.mrb[0].mxu0
        %v1723 = vadd.f32 %v1562, %v1722
        %v1724 = vpop.f32.mrb[0].mxu0
        %v1725 = vadd.f32 %v1564, %v1724
        %1726 = vmatprep.mubr.f32.mxu0 %v766
        %1727 = vmatmul.mubr.f32.gmra.mrb[0].mxu0 %v765
        %v1728 = vpop.f32.mrb[0].mxu0
        %v1729 = vadd.f32 %v1568, %v1728
        %v1730 = vpop.f32.mrb[0].mxu0
        %v1731 = vadd.f32 %v1570, %v1730
        %1732 = vmatprep.mubr.f32.mxu0 %v775
        %1733 = vmatmul.mubr.f32.gmra.mrb[0].mxu0 %v774
        %v1734 = vpop.f32.mrb[0].mxu0
        %v1735 = vadd.f32 %v1574, %v1734
        %v1736 = vpop.f32.mrb[0].mxu0
        %v1737 = vadd.f32 %v1576, %v1736
        %1738 = vmatprep.mubr.f32.mxu0 %v784
        %1739 = vmatmul.mubr.f32.gmra.mrb[0].mxu0 %v783
        %v1740 = vpop.f32.mrb[0].mxu0
        %v1741 = vadd.f32 %v1580, %v1740
        %v1742 = vpop.f32.mrb[0].mxu0
        %v1743 = vadd.f32 %v1582, %v1742
        %1744 = vmatprep.mubr.f32.mxu0 %v793
        %1745 = vmatmul.mubr.f32.gmra.mrb[0].mxu0 %v792
        %v1746 = vpop.f32.mrb[0].mxu0
        %v1747 = vadd.f32 %v1586, %v1746
        %v1748 = vpop.f32.mrb[0].mxu0
        %v1749 = vadd.f32 %v1588, %v1748
        %1750 = vmatprep.mubr.f32.mxu0 %v802
        %1751 = vmatmul.mubr.f32.gmra.mrb[0].mxu0 %v801
        %v1752 = vpop.f32.mrb[0].mxu0
        %v1753 = vadd.f32 %v1592, %v1752
        %v1754 = vpop.f32.mrb[0].mxu0
        %v1755 = vadd.f32 %v1594, %v1754
        %1756 = vmatprep.mubr.f32.mxu0 %v811
        %1757 = vmatmul.mubr.f32.gmra.mrb[0].mxu0 %v810
        %v1758 = vpop.f32.mrb[0].mxu0
        %v1759 = vadd.f32 %v1598, %v1758
        %v1760 = vpop.f32.mrb[0].mxu0
        %v1761 = vadd.f32 %v1600, %v1760
        %1762 = vmatprep.mubr.f32.mxu0 %v820
        %1763 = vmatmul.mubr.f32.gmra.mrb[0].mxu0 %v819
        %v1764 = vpop.f32.mrb[0].mxu0
        %v1765 = vadd.f32 %v1604, %v1764
        %v1766 = vpop.f32.mrb[0].mxu0
        %v1767 = vadd.f32 %v1606, %v1766
        %1768 = vmatprep.mubr.f32.mxu0 %v829
        %1769 = vmatmul.mubr.f32.gmra.mrb[0].mxu0 %v828
        %v1770 = vpop.f32.mrb[0].mxu0
        %v1771 = vadd.f32 %v1610, %v1770
        %v1772 = vpop.f32.mrb[0].mxu0
        %v1773 = vadd.f32 %v1612, %v1772
        %1774 = vdwg.mxu0
        %1775 = vmatprep.subr.mxu0 %v1088
        %1776 = vmatpush1.msra.mxu0 %v1087
        %1777 = vmatprep.subr.mxu0 %v1090
        %1778 = vmatpush1.msra.mxu0 %v1089
        %1779 = vmatprep.subr.mxu0 %v1092
        %1780 = vmatpush1.msra.mxu0 %v1091
        %1781 = vmatprep.subr.mxu0 %v1094
        %1782 = vmatpush1.msra.mxu0 %v1093
        %1783 = vmatprep.subr.mxu0 %v1096
        %1784 = vmatpush1.msra.mxu0 %v1095
        %1785 = vmatprep.subr.mxu0 %v1098
        %1786 = vmatpush1.msra.mxu0 %v1097
        %1787 = vmatprep.subr.mxu0 %v1100
        %1788 = vmatpush1.msra.mxu0 %v1099
        %1789 = vmatprep.subr.mxu0 %v1102
        %1790 = vmatpush1.msra.mxu0 %v1101
        %1791 = vmatprep.subr.mxu0 %v1104
        %1792 = vmatpush1.msra.mxu0 %v1103
        %1793 = vmatprep.subr.mxu0 %v1106
        %1794 = vmatpush1.msra.mxu0 %v1105
        %1795 = vmatprep.subr.mxu0 %v1108
        %1796 = vmatpush1.msra.mxu0 %v1107
        %1797 = vmatprep.subr.mxu0 %v1110
        %1798 = vmatpush1.msra.mxu0 %v1109
        %1799 = vmatprep.subr.mxu0 %v1112
        %1800 = vmatpush1.msra.mxu0 %v1111
        %1801 = vmatprep.subr.mxu0 %v1114
        %1802 = vmatpush1.msra.mxu0 %v1113
        %1803 = vmatprep.subr.mxu0 %v1116
        %1804 = vmatpush1.msra.mxu0 %v1115
        %1805 = vmatprep.subr.mxu0 %v1118
        %1806 = vmatpush1.msra.mxu0 %v1117
        %1807 = vmatprep.subr.mxu0 0.0
        %1808 = vmatpush1.msra.mxu0 0.0
        %1809 = vmatprep.subr.mxu0 0.0
        %1810 = vmatpush1.msra.mxu0 0.0
        %1811 = vmatprep.subr.mxu0 0.0
        %1812 = vmatpush1.msra.mxu0 0.0
        %1813 = vmatprep.subr.mxu0 0.0
        %1814 = vmatpush1.msra.mxu0 0.0
        %1815 = vmatprep.subr.mxu0 0.0
        %1816 = vmatpush1.msra.mxu0 0.0
        %1817 = vmatprep.subr.mxu0 0.0
        %1818 = vmatpush1.msra.mxu0 0.0
        %1819 = vmatprep.subr.mxu0 0.0
        %1820 = vmatpush1.msra.mxu0 0.0
        %1821 = vmatprep.subr.mxu0 0.0
        %1822 = vmatpush1.msra.mxu0 0.0
        %1823 = vmatprep.subr.mxu0 0.0
        %1824 = vmatpush1.msra.mxu0 0.0
        %1825 = vmatprep.subr.mxu0 0.0
        %1826 = vmatpush1.msra.mxu0 0.0
        %1827 = vmatprep.subr.mxu0 0.0
        %1828 = vmatpush1.msra.mxu0 0.0
        %1829 = vmatprep.subr.mxu0 0.0
        %1830 = vmatpush1.msra.mxu0 0.0
        %1831 = vmatprep.subr.mxu0 0.0
        %1832 = vmatpush1.msra.mxu0 0.0
        %1833 = vmatprep.subr.mxu0 0.0
        %1834 = vmatpush1.msra.mxu0 0.0
        %1835 = vmatprep.subr.mxu0 0.0
        %1836 = vmatpush1.msra.mxu0 0.0
        %1837 = vmatprep.subr.mxu0 0.0
        %1838 = vmatpush1.msra.mxu0 0.0
        %1839 = vmatprep.mubr.f32.mxu0 0.0
        %1840 = vmatmul.mubr.f32.gmra.mrb[0].mxu0 %v695
        %v1841 = vpop.f32.mrb[0].mxu0
        %v1842 = vadd.f32 %v1681, %v1841
        %v1843 = vpop.f32.mrb[0].mxu0
        %v1844 = vadd.f32 %v1683, %v1843
        %1845 = vmatprep.mubr.f32.mxu0 0.0
        %1846 = vmatmul.mubr.f32.gmra.mrb[0].mxu0 %v704
        %v1847 = vpop.f32.mrb[0].mxu0
        %v1848 = vadd.f32 %v1687, %v1847
        %v1849 = vpop.f32.mrb[0].mxu0
        %v1850 = vadd.f32 %v1689, %v1849
        %1851 = vmatprep.mubr.f32.mxu0 0.0
        %1852 = vmatmul.mubr.f32.gmra.mrb[0].mxu0 %v713
        %v1853 = vpop.f32.mrb[0].mxu0
        %v1854 = vadd.f32 %v1693, %v1853
        %v1855 = vpop.f32.mrb[0].mxu0
        %v1856 = vadd.f32 %v1695, %v1855
        %1857 = vmatprep.mubr.f32.mxu0 0.0
        %1858 = vmatmul.mubr.f32.gmra.mrb[0].mxu0 %v722
        %v1859 = vpop.f32.mrb[0].mxu0
        %v1860 = vadd.f32 %v1699, %v1859
        %v1861 = vpop.f32.mrb[0].mxu0
        %v1862 = vadd.f32 %v1701, %v1861
        %1863 = vmatprep.mubr.f32.mxu0 0.0
        %1864 = vmatmul.mubr.f32.gmra.mrb[0].mxu0 %v731
        %v1865 = vpop.f32.mrb[0].mxu0
        %v1866 = vadd.f32 %v1705, %v1865
        %v1867 = vpop.f32.mrb[0].mxu0
        %v1868 = vadd.f32 %v1707, %v1867
        %1869 = vmatprep.mubr.f32.mxu0 0.0
        %1870 = vmatmul.mubr.f32.gmra.mrb[0].mxu0 %v740
        %v1871 = vpop.f32.mrb[0].mxu0
        %v1872 = vadd.f32 %v1711, %v1871
        %v1873 = vpop.f32.mrb[0].mxu0
        %v1874 = vadd.f32 %v1713, %v1873
        %1875 = vmatprep.mubr.f32.mxu0 0.0
        %1876 = vmatmul.mubr.f32.gmra.mrb[0].mxu0 %v749
        %v1877 = vpop.f32.mrb[0].mxu0
        %v1878 = vadd.f32 %v1717, %v1877
        %v1879 = vpop.f32.mrb[0].mxu0
        %v1880 = vadd.f32 %v1719, %v1879
        %1881 = vmatprep.mubr.f32.mxu0 0.0
        %1882 = vmatmul.mubr.f32.gmra.mrb[0].mxu0 %v758
        %v1883 = vpop.f32.mrb[0].mxu0
        %v1884 = vadd.f32 %v1723, %v1883
        %v1885 = vpop.f32.mrb[0].mxu0
        %v1886 = vadd.f32 %v1725, %v1885
        %1887 = vmatprep.mubr.f32.mxu0 0.0
        %1888 = vmatmul.mubr.f32.gmra.mrb[0].mxu0 %v767
        %v1889 = vpop.f32.mrb[0].mxu0
        %v1890 = vadd.f32 %v1729, %v1889
        %v1891 = vpop.f32.mrb[0].mxu0
        %v1892 = vadd.f32 %v1731, %v1891
        %1893 = vmatprep.mubr.f32.mxu0 0.0
        %1894 = vmatmul.mubr.f32.gmra.mrb[0].mxu0 %v776
        %v1895 = vpop.f32.mrb[0].mxu0
        %v1896 = vadd.f32 %v1735, %v1895
        %v1897 = vpop.f32.mrb[0].mxu0
        %v1898 = vadd.f32 %v1737, %v1897
        %1899 = vmatprep.mubr.f32.mxu0 0.0
        %1900 = vmatmul.mubr.f32.gmra.mrb[0].mxu0 %v785
        %v1901 = vpop.f32.mrb[0].mxu0
        %v1902 = vadd.f32 %v1741, %v1901
        %v1903 = vpop.f32.mrb[0].mxu0
        %v1904 = vadd.f32 %v1743, %v1903
        %1905 = vmatprep.mubr.f32.mxu0 0.0
        %1906 = vmatmul.mubr.f32.gmra.mrb[0].mxu0 %v794
        %v1907 = vpop.f32.mrb[0].mxu0
        %v1908 = vadd.f32 %v1747, %v1907
        %v1909 = vpop.f32.mrb[0].mxu0
        %v1910 = vadd.f32 %v1749, %v1909
        %1911 = vmatprep.mubr.f32.mxu0 0.0
        %1912 = vmatmul.mubr.f32.gmra.mrb[0].mxu0 %v803
        %v1913 = vpop.f32.mrb[0].mxu0
        %v1914 = vadd.f32 %v1753, %v1913
        %v1915 = vpop.f32.mrb[0].mxu0
        %v1916 = vadd.f32 %v1755, %v1915
        %1917 = vmatprep.mubr.f32.mxu0 0.0
        %1918 = vmatmul.mubr.f32.gmra.mrb[0].mxu0 %v812
        %v1919 = vpop.f32.mrb[0].mxu0
        %v1920 = vadd.f32 %v1759, %v1919
        %v1921 = vpop.f32.mrb[0].mxu0
        %v1922 = vadd.f32 %v1761, %v1921
        %1923 = vmatprep.mubr.f32.mxu0 0.0
        %1924 = vmatmul.mubr.f32.gmra.mrb[0].mxu0 %v821
        %v1925 = vpop.f32.mrb[0].mxu0
        %v1926 = vadd.f32 %v1765, %v1925
        %v1927 = vpop.f32.mrb[0].mxu0
        %v1928 = vadd.f32 %v1767, %v1927
        %1929 = vmatprep.mubr.f32.mxu0 0.0
        %1930 = vmatmul.mubr.f32.gmra.mrb[0].mxu0 %v830
        %v1931 = vpop.f32.mrb[0].mxu0
        %v1932 = vadd.f32 %v1771, %v1931
        %v1933 = vpop.f32.mrb[0].mxu0
        %v1934 = vadd.f32 %v1773, %v1933
        %1935 = vdwg.mxu0
        %v1936 = vmax.f32 %v1842, 0.0
        %v1937 = vmax.f32 %v1844, 0.0
        %v1938 = vmax.f32 %v1848, 0.0
        %v1939 = vmax.f32 %v1850, 0.0
        %v1940 = vmax.f32 %v1854, 0.0
        %v1941 = vmax.f32 %v1856, 0.0
        %v1942 = vmax.f32 %v1860, 0.0
        %v1943 = vmax.f32 %v1862, 0.0
        %v1944 = vmax.f32 %v1866, 0.0
        %v1945 = vmax.f32 %v1868, 0.0
        %v1946 = vmax.f32 %v1872, 0.0
        %v1947 = vmax.f32 %v1874, 0.0
        %v1948 = vmax.f32 %v1878, 0.0
        %v1949 = vmax.f32 %v1880, 0.0
        %v1950 = vmax.f32 %v1884, 0.0
        %v1951 = vmax.f32 %v1886, 0.0
        %v1952 = vmax.f32 %v1890, 0.0
        %v1953 = vmax.f32 %v1892, 0.0
        %v1954 = vmax.f32 %v1896, 0.0
        %v1955 = vmax.f32 %v1898, 0.0
        %v1956 = vmax.f32 %v1902, 0.0
        %v1957 = vmax.f32 %v1904, 0.0
        %v1958 = vmax.f32 %v1908, 0.0
        %v1959 = vmax.f32 %v1910, 0.0
        %v1960 = vmax.f32 %v1914, 0.0
        %v1961 = vmax.f32 %v1916, 0.0
        %v1962 = vmax.f32 %v1920, 0.0
        %v1963 = vmax.f32 %v1922, 0.0
        %v1964 = vmax.f32 %v1926, 0.0
        %v1965 = vmax.f32 %v1928, 0.0
        %v1966 = vmax.f32 %v1932, 0.0
        %v1967 = vmax.f32 %v1934, 0.0
        %v1968 = vld [vmem:[#allocation10] sm:$0xff]
        %v1969 = vld [vmem:[#allocation10 + $0x8] sm:$0xff]
        %v1970 = vld [vmem:[#allocation10 + $0x10] sm:$0xff]
        %v1971 = vld [vmem:[#allocation10 + $0x18] sm:$0xff]
        %v1972 = vld [vmem:[#allocation10 + $0x20] sm:$0xff]
        %v1973 = vld [vmem:[#allocation10 + $0x28] sm:$0xff]
        %v1974 = vld [vmem:[#allocation10 + $0x30] sm:$0xff]
        %v1975 = vld [vmem:[#allocation10 + $0x38] sm:$0xff]
        %v1976 = vld [vmem:[#allocation10 + $0x40] sm:$0xff]
        %v1977 = vld [vmem:[#allocation10 + $0x48] sm:$0xff]
        %v1978 = vld [vmem:[#allocation10 + $0x50] sm:$0xff]
        %v1979 = vld [vmem:[#allocation10 + $0x58] sm:$0xff]
        %v1980 = vld [vmem:[#allocation10 + $0x60] sm:$0xff]
        %v1981 = vld [vmem:[#allocation10 + $0x68] sm:$0xff]
        %v1982 = vld [vmem:[#allocation10 + $0x70] sm:$0xff]
        %v1983 = vld [vmem:[#allocation10 + $0x78] sm:$0xff]
        %v1984 = vld [vmem:[#allocation10 + $0x80] sm:$0xff]
        %v1985 = vld [vmem:[#allocation10 + $0x88] sm:$0xff]
        %v1986 = vld [vmem:[#allocation10 + $0x90] sm:$0xff]
        %v1987 = vld [vmem:[#allocation10 + $0x98] sm:$0xff]
        %v1988 = vld [vmem:[#allocation10 + $0xa0] sm:$0xff]
        %v1989 = vld [vmem:[#allocation10 + $0xa8] sm:$0xff]
        %v1990 = vld [vmem:[#allocation10 + $0xb0] sm:$0xff]
        %v1991 = vld [vmem:[#allocation10 + $0xb8] sm:$0xff]
        %v1992 = vld [vmem:[#allocation10 + $0xc0] sm:$0xff]
        %v1993 = vld [vmem:[#allocation10 + $0xc8] sm:$0xff]
        %v1994 = vld [vmem:[#allocation10 + $0xd0] sm:$0xff]
        %v1995 = vld [vmem:[#allocation10 + $0xd8] sm:$0xff]
        %v1996 = vld [vmem:[#allocation10 + $0xe0] sm:$0xff]
        %v1997 = vld [vmem:[#allocation10 + $0xe8] sm:$0xff]
        %v1998 = vld [vmem:[#allocation10 + $0xf0] sm:$0xff]
        %v1999 = vld [vmem:[#allocation10 + $0xf8] sm:$0xff]
        %v2000 = vld [vmem:[#allocation3 + $0x20] sm:$0xff]
        %v2001 = vld [vmem:[#allocation3 + $0x68] sm:$0xff]
        %v2002 = vld [vmem:[#allocation3 + $0xb0] sm:$0xff]
        %v2003 = vld [vmem:[#allocation3 + $0xf8] sm:$0xff]
        %v2004 = vld [vmem:[#allocation3 + $0x140] sm:$0xff]
        %v2005 = vld [vmem:[#allocation3 + $0x188] sm:$0xff]
        %v2006 = vld [vmem:[#allocation3 + $0x1d0] sm:$0xff]
        %v2007 = vld [vmem:[#allocation3 + $0x218] sm:$0xff]
        %v2008 = vld [vmem:[#allocation3 + $0x260] sm:$0xff]
        %v2009 = vld [vmem:[#allocation3 + $0x2a8] sm:$0xff]
        %v2010 = vld [vmem:[#allocation3 + $0x2f0] sm:$0xff]
        %v2011 = vld [vmem:[#allocation3 + $0x338] sm:$0xff]
        %v2012 = vld [vmem:[#allocation3 + $0x380] sm:$0xff]
        %v2013 = vld [vmem:[#allocation3 + $0x3c8] sm:$0xff]
        %v2014 = vld [vmem:[#allocation3 + $0x410] sm:$0xff]
        %v2015 = vld [vmem:[#allocation3 + $0x458] sm:$0xff]
        %v2016 = vld [vmem:[#allocation11] sm:$0x1]
        %v2018 = vlaneseq
        %v2019 = vshrl.u32 %v2018, 7
        %v2020 = vsub.s32 0, %v2019
        %v2021 = vrot.slane %v2016, %v2020
        %2023 = vmatprep.subr.mxu0 0.0
        %2024 = vmatpush1.msra.mxu0 %v1968
        %2025 = vmatprep.subr.mxu0 0.0
        %2026 = vmatpush1.msra.mxu0 %v1969
        %2027 = vmatprep.subr.mxu0 0.0
        %2028 = vmatpush1.msra.mxu0 %v1970
        %2029 = vmatprep.subr.mxu0 0.0
        %2030 = vmatpush1.msra.mxu0 %v1971
        %2031 = vmatprep.subr.mxu0 0.0
        %2032 = vmatpush1.msra.mxu0 %v1972
        %2033 = vmatprep.subr.mxu0 0.0
        %2034 = vmatpush1.msra.mxu0 %v1973
        %2035 = vmatprep.subr.mxu0 0.0
        %2036 = vmatpush1.msra.mxu0 %v1974
        %2037 = vmatprep.subr.mxu0 0.0
        %2038 = vmatpush1.msra.mxu0 %v1975
        %2039 = vmatprep.subr.mxu0 0.0
        %2040 = vmatpush1.msra.mxu0 %v1976
        %2041 = vmatprep.subr.mxu0 0.0
        %2042 = vmatpush1.msra.mxu0 %v1977
        %2043 = vmatprep.subr.mxu0 0.0
        %2044 = vmatpush1.msra.mxu0 %v1978
        %2045 = vmatprep.subr.mxu0 0.0
        %2046 = vmatpush1.msra.mxu0 %v1979
        %2047 = vmatprep.subr.mxu0 0.0
        %2048 = vmatpush1.msra.mxu0 %v1980
        %2049 = vmatprep.subr.mxu0 0.0
        %2050 = vmatpush1.msra.mxu0 %v1981
        %2051 = vmatprep.subr.mxu0 0.0
        %2052 = vmatpush1.msra.mxu0 %v1982
        %2053 = vmatprep.subr.mxu0 0.0
        %2054 = vmatpush1.msra.mxu0 %v1983
        %2055 = vmatprep.subr.mxu0 0.0
        %2056 = vmatpush1.msra.mxu0 %v1984
        %2057 = vmatprep.subr.mxu0 0.0
        %2058 = vmatpush1.msra.mxu0 %v1985
        %2059 = vmatprep.subr.mxu0 0.0
        %2060 = vmatpush1.msra.mxu0 %v1986
        %2061 = vmatprep.subr.mxu0 0.0
        %2062 = vmatpush1.msra.mxu0 %v1987
        %2063 = vmatprep.subr.mxu0 0.0
        %2064 = vmatpush1.msra.mxu0 %v1988
        %2065 = vmatprep.subr.mxu0 0.0
        %2066 = vmatpush1.msra.mxu0 %v1989
        %2067 = vmatprep.subr.mxu0 0.0
        %2068 = vmatpush1.msra.mxu0 %v1990
        %2069 = vmatprep.subr.mxu0 0.0
        %2070 = vmatpush1.msra.mxu0 %v1991
        %2071 = vmatprep.subr.mxu0 0.0
        %2072 = vmatpush1.msra.mxu0 %v1992
        %2073 = vmatprep.subr.mxu0 0.0
        %2074 = vmatpush1.msra.mxu0 %v1993
        %2075 = vmatprep.subr.mxu0 0.0
        %2076 = vmatpush1.msra.mxu0 %v1994
        %2077 = vmatprep.subr.mxu0 0.0
        %2078 = vmatpush1.msra.mxu0 %v1995
        %2079 = vmatprep.subr.mxu0 0.0
        %2080 = vmatpush1.msra.mxu0 %v1996
        %2081 = vmatprep.subr.mxu0 0.0
        %2082 = vmatpush1.msra.mxu0 %v1997
        %2083 = vmatprep.subr.mxu0 0.0
        %2084 = vmatpush1.msra.mxu0 %v1998
        %2085 = vmatprep.subr.mxu0 0.0
        %2086 = vmatpush1.msra.mxu0 %v1999
        %2087 = vmatprep.mubr.f32.mxu0 %v1937
        %2088 = vmatmul.mubr.f32.gmra.mrb[0].mxu0 %v1936
        %v2089 = vpop.f32.mrb[0].mxu0
        %v2090 = vadd.f32 %v2021, %v2089
        %v2091 = vpop.f32.mrb[0].mxu0
        %2092 = vmatprep.mubr.f32.mxu0 %v1939
        %2093 = vmatmul.mubr.f32.gmra.mrb[0].mxu0 %v1938
        %v2094 = vpop.f32.mrb[0].mxu0
        %v2095 = vadd.f32 %v2021, %v2094
        %v2096 = vpop.f32.mrb[0].mxu0
        %2097 = vmatprep.mubr.f32.mxu0 %v1941
        %2098 = vmatmul.mubr.f32.gmra.mrb[0].mxu0 %v1940
        %v2099 = vpop.f32.mrb[0].mxu0
        %v2100 = vadd.f32 %v2021, %v2099
        %v2101 = vpop.f32.mrb[0].mxu0
        %2102 = vmatprep.mubr.f32.mxu0 %v1943
        %2103 = vmatmul.mubr.f32.gmra.mrb[0].mxu0 %v1942
        %v2104 = vpop.f32.mrb[0].mxu0
        %v2105 = vadd.f32 %v2021, %v2104
        %v2106 = vpop.f32.mrb[0].mxu0
        %2107 = vmatprep.mubr.f32.mxu0 %v1945
        %2108 = vmatmul.mubr.f32.gmra.mrb[0].mxu0 %v1944
        %v2109 = vpop.f32.mrb[0].mxu0
        %v2110 = vadd.f32 %v2021, %v2109
        %v2111 = vpop.f32.mrb[0].mxu0
        %2112 = vmatprep.mubr.f32.mxu0 %v1947
        %2113 = vmatmul.mubr.f32.gmra.mrb[0].mxu0 %v1946
        %v2114 = vpop.f32.mrb[0].mxu0
        %v2115 = vadd.f32 %v2021, %v2114
        %v2116 = vpop.f32.mrb[0].mxu0
        %2117 = vmatprep.mubr.f32.mxu0 %v1949
        %2118 = vmatmul.mubr.f32.gmra.mrb[0].mxu0 %v1948
        %v2119 = vpop.f32.mrb[0].mxu0
        %v2120 = vadd.f32 %v2021, %v2119
        %v2121 = vpop.f32.mrb[0].mxu0
        %2122 = vmatprep.mubr.f32.mxu0 %v1951
        %2123 = vmatmul.mubr.f32.gmra.mrb[0].mxu0 %v1950
        %v2124 = vpop.f32.mrb[0].mxu0
        %v2125 = vadd.f32 %v2021, %v2124
        %v2126 = vpop.f32.mrb[0].mxu0
        %2127 = vmatprep.mubr.f32.mxu0 %v1953
        %2128 = vmatmul.mubr.f32.gmra.mrb[0].mxu0 %v1952
        %v2129 = vpop.f32.mrb[0].mxu0
        %v2130 = vadd.f32 %v2021, %v2129
        %v2131 = vpop.f32.mrb[0].mxu0
        %2132 = vmatprep.mubr.f32.mxu0 %v1955
        %2133 = vmatmul.mubr.f32.gmra.mrb[0].mxu0 %v1954
        %v2134 = vpop.f32.mrb[0].mxu0
        %v2135 = vadd.f32 %v2021, %v2134
        %v2136 = vpop.f32.mrb[0].mxu0
        %2137 = vmatprep.mubr.f32.mxu0 %v1957
        %2138 = vmatmul.mubr.f32.gmra.mrb[0].mxu0 %v1956
        %v2139 = vpop.f32.mrb[0].mxu0
        %v2140 = vadd.f32 %v2021, %v2139
        %v2141 = vpop.f32.mrb[0].mxu0
        %2142 = vmatprep.mubr.f32.mxu0 %v1959
        %2143 = vmatmul.mubr.f32.gmra.mrb[0].mxu0 %v1958
        %v2144 = vpop.f32.mrb[0].mxu0
        %v2145 = vadd.f32 %v2021, %v2144
        %v2146 = vpop.f32.mrb[0].mxu0
        %2147 = vmatprep.mubr.f32.mxu0 %v1961
        %2148 = vmatmul.mubr.f32.gmra.mrb[0].mxu0 %v1960
        %v2149 = vpop.f32.mrb[0].mxu0
        %v2150 = vadd.f32 %v2021, %v2149
        %v2151 = vpop.f32.mrb[0].mxu0
        %2152 = vmatprep.mubr.f32.mxu0 %v1963
        %2153 = vmatmul.mubr.f32.gmra.mrb[0].mxu0 %v1962
        %v2154 = vpop.f32.mrb[0].mxu0
        %v2155 = vadd.f32 %v2021, %v2154
        %v2156 = vpop.f32.mrb[0].mxu0
        %2157 = vmatprep.mubr.f32.mxu0 %v1965
        %2158 = vmatmul.mubr.f32.gmra.mrb[0].mxu0 %v1964
        %v2159 = vpop.f32.mrb[0].mxu0
        %v2160 = vadd.f32 %v2021, %v2159
        %v2161 = vpop.f32.mrb[0].mxu0
        %2162 = vmatprep.mubr.f32.mxu0 %v1967
        %2163 = vmatmul.mubr.f32.gmra.mrb[0].mxu0 %v1966
        %v2164 = vpop.f32.mrb[0].mxu0
        %v2165 = vadd.f32 %v2021, %v2164
        %v2166 = vpop.f32.mrb[0].mxu0
        %2167 = vdwg.mxu0
        %v2168 = vadd.f32 %v2090, %v2000
        %v2169 = vadd.f32 %v2095, %v2001
        %v2170 = vadd.f32 %v2100, %v2002
        %v2171 = vadd.f32 %v2105, %v2003
        %v2172 = vadd.f32 %v2110, %v2004
        %v2173 = vadd.f32 %v2115, %v2005
        %v2174 = vadd.f32 %v2120, %v2006
        %v2175 = vadd.f32 %v2125, %v2007
        %v2176 = vadd.f32 %v2130, %v2008
        %v2177 = vadd.f32 %v2135, %v2009
        %v2178 = vadd.f32 %v2140, %v2010
        %v2179 = vadd.f32 %v2145, %v2011
        %v2180 = vadd.f32 %v2150, %v2012
        %v2181 = vadd.f32 %v2155, %v2013
        %v2182 = vadd.f32 %v2160, %v2014
        %v2183 = vadd.f32 %v2165, %v2015
        %2184 = vadd.xlane.f32.xlu0 %v2168
        %v2185 = vpop.xlane.xlu0 %2184
        %2186 = vadd.xlane.f32.xlu0 %v2169
        %v2187 = vpop.xlane.xlu0 %2186
        %2188 = vadd.xlane.f32.xlu0 %v2170
        %v2189 = vpop.xlane.xlu0 %2188
        %2190 = vadd.xlane.f32.xlu0 %v2171
        %v2191 = vpop.xlane.xlu0 %2190
        %2192 = vadd.xlane.f32.xlu0 %v2172
        %v2193 = vpop.xlane.xlu0 %2192
        %2194 = vadd.xlane.f32.xlu0 %v2173
        %v2195 = vpop.xlane.xlu0 %2194
        %2196 = vadd.xlane.f32.xlu0 %v2174
        %v2197 = vpop.xlane.xlu0 %2196
        %2198 = vadd.xlane.f32.xlu0 %v2175
        %v2199 = vpop.xlane.xlu0 %2198
        %2200 = vadd.xlane.f32.xlu0 %v2176
        %v2201 = vpop.xlane.xlu0 %2200
        %2202 = vadd.xlane.f32.xlu0 %v2177
        %v2203 = vpop.xlane.xlu0 %2202
        %2204 = vadd.xlane.f32.xlu0 %v2178
        %v2205 = vpop.xlane.xlu0 %2204
        %2206 = vadd.xlane.f32.xlu0 %v2179
        %v2207 = vpop.xlane.xlu0 %2206
        %2208 = vadd.xlane.f32.xlu0 %v2180
        %v2209 = vpop.xlane.xlu0 %2208
        %2210 = vadd.xlane.f32.xlu0 %v2181
        %v2211 = vpop.xlane.xlu0 %2210
        %2212 = vadd.xlane.f32.xlu0 %v2182
        %v2213 = vpop.xlane.xlu0 %2212
        %2214 = vadd.xlane.f32.xlu0 %v2183
        %v2215 = vpop.xlane.xlu0 %2214
        %v2216 = vmul.f32 %v2185, 0.0078125
        %v2217 = vmul.f32 %v2187, 0.0078125
        %v2218 = vmul.f32 %v2189, 0.0078125
        %v2219 = vmul.f32 %v2191, 0.0078125
        %v2220 = vmul.f32 %v2193, 0.0078125
        %v2221 = vmul.f32 %v2195, 0.0078125
        %v2222 = vmul.f32 %v2197, 0.0078125
        %v2223 = vmul.f32 %v2199, 0.0078125
        %v2224 = vmul.f32 %v2201, 0.0078125
        %v2225 = vmul.f32 %v2203, 0.0078125
        %v2226 = vmul.f32 %v2205, 0.0078125
        %v2227 = vmul.f32 %v2207, 0.0078125
        %v2228 = vmul.f32 %v2209, 0.0078125
        %v2229 = vmul.f32 %v2211, 0.0078125
        %v2230 = vmul.f32 %v2213, 0.0078125
        %v2231 = vmul.f32 %v2215, 0.0078125
        %v2232 = vmul.f32 %v2168, %v2168
        %v2233 = vmul.f32 %v2169, %v2169
        %v2234 = vmul.f32 %v2170, %v2170
        %v2235 = vmul.f32 %v2171, %v2171
        %v2236 = vmul.f32 %v2172, %v2172
        %v2237 = vmul.f32 %v2173, %v2173
        %v2238 = vmul.f32 %v2174, %v2174
        %v2239 = vmul.f32 %v2175, %v2175
        %v2240 = vmul.f32 %v2176, %v2176
        %v2241 = vmul.f32 %v2177, %v2177
        %v2242 = vmul.f32 %v2178, %v2178
        %v2243 = vmul.f32 %v2179, %v2179
        %v2244 = vmul.f32 %v2180, %v2180
        %v2245 = vmul.f32 %v2181, %v2181
        %v2246 = vmul.f32 %v2182, %v2182
        %v2247 = vmul.f32 %v2183, %v2183
        %2248 = vadd.xlane.f32.xlu0 %v2232
        %v2249 = vpop.xlane.xlu0 %2248
        %2250 = vadd.xlane.f32.xlu0 %v2233
        %v2251 = vpop.xlane.xlu0 %2250
        %2252 = vadd.xlane.f32.xlu0 %v2234
        %v2253 = vpop.xlane.xlu0 %2252
        %2254 = vadd.xlane.f32.xlu0 %v2235
        %v2255 = vpop.xlane.xlu0 %2254
        %2256 = vadd.xlane.f32.xlu0 %v2236
        %v2257 = vpop.xlane.xlu0 %2256
        %2258 = vadd.xlane.f32.xlu0 %v2237
        %v2259 = vpop.xlane.xlu0 %2258
        %2260 = vadd.xlane.f32.xlu0 %v2238
        %v2261 = vpop.xlane.xlu0 %2260
        %2262 = vadd.xlane.f32.xlu0 %v2239
        %v2263 = vpop.xlane.xlu0 %2262
        %2264 = vadd.xlane.f32.xlu0 %v2240
        %v2265 = vpop.xlane.xlu0 %2264
        %2266 = vadd.xlane.f32.xlu0 %v2241
        %v2267 = vpop.xlane.xlu0 %2266
        %2268 = vadd.xlane.f32.xlu0 %v2242
        %v2269 = vpop.xlane.xlu0 %2268
        %2270 = vadd.xlane.f32.xlu0 %v2243
        %v2271 = vpop.xlane.xlu0 %2270
        %2272 = vadd.xlane.f32.xlu0 %v2244
        %v2273 = vpop.xlane.xlu0 %2272
        %2274 = vadd.xlane.f32.xlu0 %v2245
        %v2275 = vpop.xlane.xlu0 %2274
        %2276 = vadd.xlane.f32.xlu0 %v2246
        %v2277 = vpop.xlane.xlu0 %2276
        %2278 = vadd.xlane.f32.xlu0 %v2247
        %v2279 = vpop.xlane.xlu0 %2278
        %v2280 = vmul.f32 %v2249, 0.0078125
        %v2281 = vmul.f32 %v2251, 0.0078125
        %v2282 = vmul.f32 %v2253, 0.0078125
        %v2283 = vmul.f32 %v2255, 0.0078125
        %v2284 = vmul.f32 %v2257, 0.0078125
        %v2285 = vmul.f32 %v2259, 0.0078125
        %v2286 = vmul.f32 %v2261, 0.0078125
        %v2287 = vmul.f32 %v2263, 0.0078125
        %v2288 = vmul.f32 %v2265, 0.0078125
        %v2289 = vmul.f32 %v2267, 0.0078125
        %v2290 = vmul.f32 %v2269, 0.0078125
        %v2291 = vmul.f32 %v2271, 0.0078125
        %v2292 = vmul.f32 %v2273, 0.0078125
        %v2293 = vmul.f32 %v2275, 0.0078125
        %v2294 = vmul.f32 %v2277, 0.0078125
        %v2295 = vmul.f32 %v2279, 0.0078125
        %v2296 = vmul.f32 %v2216, %v2216
        %v2297 = vmul.f32 %v2217, %v2217
        %v2298 = vmul.f32 %v2218, %v2218
        %v2299 = vmul.f32 %v2219, %v2219
        %v2300 = vmul.f32 %v2220, %v2220
        %v2301 = vmul.f32 %v2221, %v2221
        %v2302 = vmul.f32 %v2222, %v2222
        %v2303 = vmul.f32 %v2223, %v2223
        %v2304 = vmul.f32 %v2224, %v2224
        %v2305 = vmul.f32 %v2225, %v2225
        %v2306 = vmul.f32 %v2226, %v2226
        %v2307 = vmul.f32 %v2227, %v2227
        %v2308 = vmul.f32 %v2228, %v2228
        %v2309 = vmul.f32 %v2229, %v2229
        %v2310 = vmul.f32 %v2230, %v2230
        %v2311 = vmul.f32 %v2231, %v2231
        %v2312 = vsub.f32 %v2280, %v2296
        %v2313 = vsub.f32 %v2281, %v2297
        %v2314 = vsub.f32 %v2282, %v2298
        %v2315 = vsub.f32 %v2283, %v2299
        %v2316 = vsub.f32 %v2284, %v2300
        %v2317 = vsub.f32 %v2285, %v2301
        %v2318 = vsub.f32 %v2286, %v2302
        %v2319 = vsub.f32 %v2287, %v2303
        %v2320 = vsub.f32 %v2288, %v2304
        %v2321 = vsub.f32 %v2289, %v2305
        %v2322 = vsub.f32 %v2290, %v2306
        %v2323 = vsub.f32 %v2291, %v2307
        %v2324 = vsub.f32 %v2292, %v2308
        %v2325 = vsub.f32 %v2293, %v2309
        %v2326 = vsub.f32 %v2294, %v2310
        %v2327 = vsub.f32 %v2295, %v2311
        %v2328 = vadd.f32 %v2312, 1e-05
        %v2329 = vadd.f32 %v2313, 1e-05
        %v2330 = vadd.f32 %v2314, 1e-05
        %v2331 = vadd.f32 %v2315, 1e-05
        %v2332 = vadd.f32 %v2316, 1e-05
        %v2333 = vadd.f32 %v2317, 1e-05
        %v2334 = vadd.f32 %v2318, 1e-05
        %v2335 = vadd.f32 %v2319, 1e-05
        %v2336 = vadd.f32 %v2320, 1e-05
        %v2337 = vadd.f32 %v2321, 1e-05
        %v2338 = vadd.f32 %v2322, 1e-05
        %v2339 = vadd.f32 %v2323, 1e-05
        %v2340 = vadd.f32 %v2324, 1e-05
        %v2341 = vadd.f32 %v2325, 1e-05
        %v2342 = vadd.f32 %v2326, 1e-05
        %v2343 = vadd.f32 %v2327, 1e-05
        %v2344 = vrsqrt.pop %v2328
        %v2345 = vrsqrt.pop %v2329
        %v2346 = vrsqrt.pop %v2330
        %v2347 = vrsqrt.pop %v2331
        %v2348 = vrsqrt.pop %v2332
        %v2349 = vrsqrt.pop %v2333
        %v2350 = vrsqrt.pop %v2334
        %v2351 = vrsqrt.pop %v2335
        %v2352 = vrsqrt.pop %v2336
        %v2353 = vrsqrt.pop %v2337
        %v2354 = vrsqrt.pop %v2338
        %v2355 = vrsqrt.pop %v2339
        %v2356 = vrsqrt.pop %v2340
        %v2357 = vrsqrt.pop %v2341
        %v2358 = vrsqrt.pop %v2342
        %v2359 = vrsqrt.pop %v2343
        %v2360 = vsub.f32 %v2168, %v2216
        %v2361 = vsub.f32 %v2169, %v2217
        %v2362 = vsub.f32 %v2170, %v2218
        %v2363 = vsub.f32 %v2171, %v2219
        %v2364 = vsub.f32 %v2172, %v2220
        %v2365 = vsub.f32 %v2173, %v2221
        %v2366 = vsub.f32 %v2174, %v2222
        %v2367 = vsub.f32 %v2175, %v2223
        %v2368 = vsub.f32 %v2176, %v2224
        %v2369 = vsub.f32 %v2177, %v2225
        %v2370 = vsub.f32 %v2178, %v2226
        %v2371 = vsub.f32 %v2179, %v2227
        %v2372 = vsub.f32 %v2180, %v2228
        %v2373 = vsub.f32 %v2181, %v2229
        %v2374 = vsub.f32 %v2182, %v2230
        %v2375 = vsub.f32 %v2183, %v2231
        %v2376 = vmul.f32 %v2360, %v2344
        %v2377 = vmul.f32 %v2361, %v2345
        %v2378 = vmul.f32 %v2362, %v2346
        %v2379 = vmul.f32 %v2363, %v2347
        %v2380 = vmul.f32 %v2364, %v2348
        %v2381 = vmul.f32 %v2365, %v2349
        %v2382 = vmul.f32 %v2366, %v2350
        %v2383 = vmul.f32 %v2367, %v2351
        %v2384 = vmul.f32 %v2368, %v2352
        %v2385 = vmul.f32 %v2369, %v2353
        %v2386 = vmul.f32 %v2370, %v2354
        %v2387 = vmul.f32 %v2371, %v2355
        %v2388 = vmul.f32 %v2372, %v2356
        %v2389 = vmul.f32 %v2373, %v2357
        %v2390 = vmul.f32 %v2374, %v2358
        %v2391 = vmul.f32 %v2375, %v2359
        %v2392 = vld [vmem:[#allocation13] sm:$0x1]
        %v2394 = vlaneseq
        %v2395 = vshrl.u32 %v2394, 7
        %v2396 = vsub.s32 0, %v2395
        %v2397 = vrot.slane %v2392, %v2396
        %v2399 = vmul.f32 %v2376, %v2397
        %v2400 = vmul.f32 %v2377, %v2397
        %v2401 = vmul.f32 %v2378, %v2397
        %v2402 = vmul.f32 %v2379, %v2397
        %v2403 = vmul.f32 %v2380, %v2397
        %v2404 = vmul.f32 %v2381, %v2397
        %v2405 = vmul.f32 %v2382, %v2397
        %v2406 = vmul.f32 %v2383, %v2397
        %v2407 = vmul.f32 %v2384, %v2397
        %v2408 = vmul.f32 %v2385, %v2397
        %v2409 = vmul.f32 %v2386, %v2397
        %v2410 = vmul.f32 %v2387, %v2397
        %v2411 = vmul.f32 %v2388, %v2397
        %v2412 = vmul.f32 %v2389, %v2397
        %v2413 = vmul.f32 %v2390, %v2397
        %v2414 = vmul.f32 %v2391, %v2397
        %v2415 = vld [vmem:[#allocation14] sm:$0x1]
        %v2417 = vlaneseq
        %v2418 = vshrl.u32 %v2417, 7
        %v2419 = vsub.s32 0, %v2418
        %v2420 = vrot.slane %v2415, %v2419
        %v2422 = vadd.f32 %v2399, %v2420
        %v2423 = vadd.f32 %v2400, %v2420
        %v2424 = vadd.f32 %v2401, %v2420
        %v2425 = vadd.f32 %v2402, %v2420
        %v2426 = vadd.f32 %v2403, %v2420
        %v2427 = vadd.f32 %v2404, %v2420
        %v2428 = vadd.f32 %v2405, %v2420
        %v2429 = vadd.f32 %v2406, %v2420
        %v2430 = vadd.f32 %v2407, %v2420
        %v2431 = vadd.f32 %v2408, %v2420
        %v2432 = vadd.f32 %v2409, %v2420
        %v2433 = vadd.f32 %v2410, %v2420
        %v2434 = vadd.f32 %v2411, %v2420
        %v2435 = vadd.f32 %v2412, %v2420
        %v2436 = vadd.f32 %v2413, %v2420
        %v2437 = vadd.f32 %v2414, %v2420
        %2438 = vst [vmem:[%s324] sm:$0xff] %v2422
        %2439 = vst [vmem:[%s324 + $0x8] sm:$0xff] %v2423
        %2440 = vst [vmem:[%s324 + $0x10] sm:$0xff] %v2424
        %2441 = vst [vmem:[%s324 + $0x18] sm:$0xff] %v2425
        %2442 = vst [vmem:[%s324 + $0x20] sm:$0xff] %v2426
        %2443 = vst [vmem:[%s324 + $0x28] sm:$0xff] %v2427
        %2444 = vst [vmem:[%s324 + $0x30] sm:$0xff] %v2428
        %2445 = vst [vmem:[%s324 + $0x38] sm:$0xff] %v2429
        %2446 = vst [vmem:[%s324 + $0x40] sm:$0xff] %v2430
        %2447 = vst [vmem:[%s324 + $0x48] sm:$0xff] %v2431
        %2448 = vst [vmem:[%s324 + $0x50] sm:$0xff] %v2432
        %2449 = vst [vmem:[%s324 + $0x58] sm:$0xff] %v2433
        %2450 = vst [vmem:[%s324 + $0x60] sm:$0xff] %v2434
        %2451 = vst [vmem:[%s324 + $0x68] sm:$0xff] %v2435
        %2452 = vst [vmem:[%s324 + $0x70] sm:$0xff] %v2436
        %2453 = vst [vmem:[%s324 + $0x78] sm:$0xff] %v2437
        %s2454 = sand.u32 %s173, 1
        %s2455 = scalar_lea.sflag [#allocation7], %s2454
        %s2456 = sand.u32 %s173, 1
        %s2457 = smul.addr %s2456, 128
        %s2458 = scalar_lea.vmem [#allocation16], %s2457
        // Predicated region
        $region93: #{positionwise_feed_forward.1} parent=43 // pred_check
          %p2459 = pneg %p183
        $region94: #{positionwise_feed_forward.1} parent=43 // pred_check_branch
          %2461 = sbr.rel (%p2459) target = $region96
        $region95: #{positionwise_feed_forward.1} parent=43 // pred_region
          %s2462 = smul.u32 16, %s30
          %s2464 = ssub.s32 2048, 2048
          %2465 = vsyncadd %s2455, %s2464
          %s2466 = smul.addr %s29, 48
          %s2467 = sadd.s32 %s2462, %s2466
          %s2468 = smul.addr %s2467, 128
          %s2469 = scalar_lea.hbm %s7, %s2468
          %s2470 = sshll.u32 %s2458, 4
          %s2471 = int_to_ptr.vmem [resolvable:$true] %s2470
          %2476 = dma.vmem_to_hbm [thread:$0]  %s2471, 2048, %s2469, %s2455, 128, 128, 8
        $region96: #{positionwise_feed_forward.1} parent=43 // pred_fallthru
          _
      $region44: #{positionwise_feed_forward.1} parent=5 // pred_fallthru
        _
      %p2477 = scmp.le.s32.totalorder 2, %s20
      // Predicated region
      $region97: #{positionwise_feed_forward.1} parent=5 // pred_check
        %p2478 = pneg %p2477
      $region98: #{positionwise_feed_forward.1} parent=5 // pred_check_branch
        %2480 = sbr.rel (%p2478) target = $region100
      $region99: #{positionwise_feed_forward.1} parent=5 // pred_region
        %s2481 = ssub.s32 %s20, 2
        // Predicated region
        $region101: #{positionwise_feed_forward.1} parent=99 // pred_check
          %p2482 = pneg %p189
        $region102: #{positionwise_feed_forward.1} parent=99 // pred_check_branch
          %2484 = sbr.rel (%p2482) target = $region104
        $region103: #{positionwise_feed_forward.1} parent=99 // pred_region
          %s2485 = sand.u32 %s174, 1
          %s2486 = scalar_lea.sflag [#allocation7], %s2485
          %s2487 = sand.u32 %s174, 1
          %s2488 = smul.addr %s2487, 128
          %s2489 = scalar_lea.vmem [#allocation16], %s2488
          %2490 = dma.done %s2486, 2048
        $region104: #{positionwise_feed_forward.1} parent=99 // pred_fallthru
          _
      $region100: #{positionwise_feed_forward.1} parent=5 // pred_fallthru
        _
    $region6: #{positionwise_feed_forward.1} parent=1 // loop_footer
      %s24 = sadd.s32 1, %s20
    $region7: #{positionwise_feed_forward.1} parent=1 // loop_footer_branch
      %19 = sbr.rel target = $region3
    $region8: #{positionwise_feed_forward.1} parent=1 // loop_exit
      _
    %2491 = vsyncpa [#allocation6], 1
    %s2492 = scalar_lea.sflag [#allocation6], 1
    %2493 = vsyncpa %s2492, 1
    %2494 = vsyncpa [#allocation9], 1
    %2495 = vsyncpa [#allocation12], 1
    %2496 = vsyncpa [#allocation15], 1
    %2497 = vsyncpa [#allocation7], 1
    %s2498 = scalar_lea.sflag [#allocation7], 1
    %2499 = vsyncpa %s2498, 1
  %2500 = vsyncmov [#allocation4]
  %s2501 = vpop.sfrf %2500
  %p2502 = scmp.eq.s32.totalorder %s2501, 0
  %p2503 = pneg %p2502
  %2505 = shalt.err (%p2503)

</llo_original>
